<compile_context>
chip_gen: v7x
topology: tpu7x:2x2x1
jax: 0.10.0
libtpu: 0.0.40
codegen_flags: <defaults>
</compile_context>

<pallas_src>
import math

import jax
import jax.numpy as jnp
from jax.experimental import pallas as pl
from jax.experimental.pallas import tpu as pltpu

# ---------------------------------------------------------------------------
# Model hyper-parameters (small, consistent with the module's forward)
# ---------------------------------------------------------------------------
VOCAB = 50
D_M = 32
ATTN_HEADS = 4
N_LAYERS = 2
MAX_POS = 64
D_FF = 4 * D_M

B = 2        # batch
S_DEC = 8    # decoder sequence length
S_ENC = 8    # encoder sequence length

# Row layout of the packed per-layer bias / LayerNorm slab "vecs": (L, 16, D) f32.
R_BQ_S, R_BK_S, R_BV_S, R_BO_S = 0, 1, 2, 3
R_BQ_C, R_BK_C, R_BV_C, R_BO_C = 4, 5, 6, 7
R_LN1_G, R_LN1_B = 8, 9
R_LN2_G, R_LN2_B = 10, 11
R_LN3_G, R_LN3_B = 12, 13
R_B2 = 14
N_VEC_ROWS = 16                       # padded to a multiple of 8 sublanes

PACKED_ORDER = ["w_sa_qkv", "w_sa_o", "w_ca_q", "w_ca_kv", "w_ca_o",
                "w_ff1", "b_ff1", "w_ff2", "vecs"]


# ---------------------------------------------------------------------------
# Fused full-stack decoder kernel (single program, batch folded on sublanes)
# ---------------------------------------------------------------------------
def make_decoder_stack_kernel(n_layers: int, num_heads: int, d_model: int,
                              s_dec: int, n_dec_rows: int):
    dh = d_model // num_heads
    scale = 1.0 / math.sqrt(dh)
    emb_scale = math.sqrt(d_model)
    D = d_model

    def layer_norm(h, g, b):                      # f32 stats (v5e has no bf16 VPU)
        mu = jnp.mean(h, axis=-1, keepdims=True)
        var = jnp.mean((h - mu) ** 2, axis=-1, keepdims=True)
        return (h - mu) * jax.lax.rsqrt(var + 1e-5) * g + b

    def kernel(ids_ref,                                           # SMEM (scalar prefetch)
               pos_ref, enc_ref, smask_ref, cmask_ref, tok_emb_ref,
               w_sa_qkv_ref, w_sa_o_ref, w_ca_q_ref, w_ca_kv_ref, w_ca_o_ref,
               w_ff1_ref, b_ff1_ref, w_ff2_ref, vecs_ref,
               out_ref, x_scr):
        # ---- fused token-embedding gather + scale + positional add ----------
        for s in range(n_dec_rows):                # statically unrolled (16 rows)
            tid = ids_ref[s]                       # scalar read from SMEM
            p = s % s_dec                          # static positional index
            x_scr[pl.ds(s, 1), :] = (
                tok_emb_ref[pl.ds(tid, 1), :] * jnp.float32(emb_scale)
                + pos_ref[p:p + 1, :])
        x = x_scr[...]                             # (B*S, D) f32

        smask = smask_ref[...]                     # (B*S, B*S)  additive, block-diag
        cmask = cmask_ref[...]                     # (B*S, B*Se) additive, block-diag

        # Layer-invariant cross-attention K/V for ALL layers: one lane-dense matmul.
        enc_b = enc_ref[...].astype(jnp.bfloat16)                  # (B*Se, D)
        kv_all = jnp.dot(enc_b, w_ca_kv_ref[...],
                         preferred_element_type=jnp.float32)       # (B*Se, L*2D)

        def row(l, r):                             # (1, D) direct VMEM row load
            return vecs_ref[l, r:r + 1, :]

        def mha(q, k, v, mask, w_o_ref, l, b_o):
            # q: (Nq, D), k/v: (Nk, D) f32; heads partition the lane (last) dim.
            qb = q.astype(jnp.bfloat16)
            kb = k.astype(jnp.bfloat16)
            vb = v.astype(jnp.bfloat16)
            out = b_o                              # (1, D); broadcasts on first add
            for h in range(num_heads):             # statically unrolled, tiny shapes
                sl = slice(h * dh, (h + 1) * dh)
                sc = jax.lax.dot_general(          # q_h @ k_h^T without transpose op
                    qb[:, sl], kb[:, sl], (((1,), (1,)), ((), ())),
                    preferred_element_type=jnp.float32) * scale + mask
                sc = sc - jnp.max(sc, axis=-1, keepdims=True)
                e = jnp.exp(sc)
                p = e * pl.reciprocal(jnp.sum(e, axis=-1, keepdims=True), approx=True)
                ctx = jnp.dot(p.astype(jnp.bfloat16), vb[:, sl],
                              preferred_element_type=jnp.float32)  # (Nq, dh)
                # Accumulate output projection per head (no lane concat / shuffle).
                out = out + jnp.dot(ctx.astype(jnp.bfloat16),
                                    w_o_ref[l, h * dh:(h + 1) * dh, :],
                                    preferred_element_type=jnp.float32)
            return out

        for l in range(n_layers):        # unrolled: all layer weights stay in VMEM
            # ---- masked self-attention (fused QKV matmul) + residual + LN ----
            qkv = jnp.dot(x.astype(jnp.bfloat16), w_sa_qkv_ref[l],
                          preferred_element_type=jnp.float32)      # (B*S, 3D)
            q = qkv[:, 0:D] + row(l, R_BQ_S)
            k = qkv[:, D:2 * D] + row(l, R_BK_S)
            v = qkv[:, 2 * D:3 * D] + row(l, R_BV_S)
            sa = mha(q, k, v, smask, w_sa_o_ref, l, row(l, R_BO_S))
            x = layer_norm(x + sa, row(l, R_LN1_G), row(l, R_LN1_B))

            # ---- cross-attention over encoder state (K/V hoisted) ------------
            qc = jnp.dot(x.astype(jnp.bfloat16), w_ca_q_ref[l],
                         preferred_element_type=jnp.float32) + row(l, R_BQ_C)
            kc = kv_all[:, 2 * D * l:2 * D * l + D] + row(l, R_BK_C)
            vc = kv_all[:, 2 * D * l + D:2 * D * (l + 1)] + row(l, R_BV_C)
            ca = mha(qc, kc, vc, cmask, w_ca_o_ref, l, row(l, R_BO_C))
            x = layer_norm(x + ca, row(l, R_LN2_G), row(l, R_LN2_B))

            # ---- position-wise FFN (D -> 4D -> D) with GELU + residual + LN --
            h1 = jnp.dot(x.astype(jnp.bfloat16), w_ff1_ref[l],
                         preferred_element_type=jnp.float32) + b_ff1_ref[l]
            h1 = jax.nn.gelu(h1, approximate=True)
            h2 = jnp.dot(h1.astype(jnp.bfloat16), w_ff2_ref[l],
                         preferred_element_type=jnp.float32) + row(l, R_B2)
            x = layer_norm(x + h2, row(l, R_LN3_G), row(l, R_LN3_B))

        out_ref[...] = x

    return kernel


def _full_spec(shape):
    nd = len(shape)
    # grid=(1,) + one scalar-prefetch arg -> index_map(i, ids)
    return pl.BlockSpec(tuple(shape), lambda i, ids, _n=nd: (0,) * _n)


# ---------------------------------------------------------------------------
# Wrapper: mask folding in JAX, everything else in one pallas_call
# ---------------------------------------------------------------------------
@jax.jit
def bart_decoder(dec_inp_batch, enc_hid_state, inp_mask, trg_mask, params):
    Bb, S = dec_inp_batch.shape
    _, Se, D = enc_hid_state.shape
    BS, BSe = Bb * S, Bb * Se

    packed = params["packed"]
    pos = params["pos_emb"][:S]                                   # (S, D)
    tok_emb = params["tok_emb"]                                   # (VOCAB, D)

    ids = dec_inp_batch.reshape(BS).astype(jnp.int32)             # scalar prefetch
    enc_flat = enc_hid_state.reshape(BSe, D)

    # Batch folded onto the sublane axis -> block-diagonal additive masks.
    neg = jnp.float32(-1e9)
    smask = jnp.full((BS, BS), neg, jnp.float32)
    cmask = jnp.full((BS, BSe), neg, jnp.float32)
    for b in range(Bb):
        smask = smask.at[b * S:(b + 1) * S, b * S:(b + 1) * S].set(trg_mask[b])
        cmask = cmask.at[b * S:(b + 1) * S, b * Se:(b + 1) * Se].set(inp_mask[b])

    kernel = make_decoder_stack_kernel(N_LAYERS, ATTN_HEADS, D, S, BS)

    data_args = (pos, enc_flat, smask, cmask, tok_emb)
    param_args = tuple(packed[k] for k in PACKED_ORDER)
    all_args = data_args + param_args
    in_specs = [_full_spec(a.shape) for a in all_args]

    out = pl.pallas_call(
        kernel,
        out_shape=jax.ShapeDtypeStruct((BS, D), jnp.float32),
        grid_spec=pltpu.PrefetchScalarGridSpec(
            num_scalar_prefetch=1,
            grid=(1,),
            in_specs=in_specs,
            out_specs=_full_spec((BS, D)),
            scratch_shapes=[pltpu.VMEM((BS, D), jnp.float32)]),
    )(ids, *all_args)
    return out.reshape(Bb, S, D)


# ---------------------------------------------------------------------------
# Parameter init (per-layer dicts, like a state-dict) + packing into slabs
# ---------------------------------------------------------------------------
def pack_layer_params(layers, d_m):
    d_ff = 4 * d_m
    wdt = jnp.bfloat16      # weight storage dtype for the MXU (f32 accumulate in-kernel)

    def stack_w(name):
        return jnp.stack([lp[name] for lp in layers], axis=0).astype(wdt)

    w_sa_qkv = jnp.stack(
        [jnp.concatenate([lp["wq_s"], lp["wk_s"], lp["wv_s"]], axis=1) for lp in layers],
        axis=0).astype(wdt)                                        # (L, D, 3D)
    # Layer-invariant cross-attn K/V, lane-dense layout for a single hoisted matmul.
    w_ca_kv = jnp.concatenate(
        [jnp.concatenate([lp["wk_c"], lp["wv_c"]], axis=1) for lp in layers],
        axis=1).astype(wdt)                                        # (D, L*2D)

    vec_rows = []
    for lp in layers:
        rows = jnp.concatenate(
            [lp["bq_s"], lp["bk_s"], lp["bv_s"], lp["bo_s"],
             lp["bq_c"], lp["bk_c"], lp["bv_c"], lp["bo_c"],
             lp["ln1_g"], lp["ln1_b"], lp["ln2_g"], lp["ln2_b"],
             lp["ln3_g"], lp["ln3_b"], lp["b2"],
             jnp.zeros((1, d_m), jnp.float32)], axis=0)            # (16, D)
        vec_rows.append(rows)

    return {
        "w_sa_qkv": w_sa_qkv,
        "w_sa_o": stack_w("wo_s"),
        "w_ca_q": stack_w("wq_c"),
        "w_ca_kv": w_ca_kv,
        "w_ca_o": stack_w("wo_c"),
        "w_ff1": stack_w("w1"),
        "b_ff1": jnp.stack([lp["b1"].reshape(1, d_ff) for lp in layers], axis=0),  # f32
        "w_ff2": stack_w("w2"),
        "vecs": jnp.stack(vec_rows, axis=0),                        # (L, 16, D) f32
    }


def init_params(key, vocab, d_m, n_layers):
    d_ff = 4 * d_m
    k_tok, k_pos, k_layers = jax.random.split(key, 3)
    params = {
        "tok_emb": 0.02 * jax.random.normal(k_tok, (vocab, d_m), jnp.float32),
        "pos_emb": 0.02 * jax.random.normal(k_pos, (MAX_POS, d_m), jnp.float32),
        "layers": [],
    }
    lkeys = jax.random.split(k_layers, n_layers)
    for i in range(n_layers):
        wk = jax.random.split(lkeys[i], 10)
        lp = {
            "wq_s": 0.02 * jax.random.normal(wk[0], (d_m, d_m), jnp.float32),
            "wk_s": 0.02 * jax.random.normal(wk[1], (d_m, d_m), jnp.float32),
            "wv_s": 0.02 * jax.random.normal(wk[2], (d_m, d_m), jnp.float32),
            "wo_s": 0.02 * jax.random.normal(wk[3], (d_m, d_m), jnp.float32),
            "wq_c": 0.02 * jax.random.normal(wk[4], (d_m, d_m), jnp.float32),
            "wk_c": 0.02 * jax.random.normal(wk[5], (d_m, d_m), jnp.float32),
            "wv_c": 0.02 * jax.random.normal(wk[6], (d_m, d_m), jnp.float32),
            "wo_c": 0.02 * jax.random.normal(wk[7], (d_m, d_m), jnp.float32),
            "w1":   0.02 * jax.random.normal(wk[8], (d_m, d_ff), jnp.float32),
            "w2":   0.02 * jax.random.normal(wk[9], (d_ff, d_m), jnp.float32),
            "bq_s": jnp.zeros((1, d_m), jnp.float32),
            "bk_s": jnp.zeros((1, d_m), jnp.float32),
            "bv_s": jnp.zeros((1, d_m), jnp.float32),
            "bo_s": jnp.zeros((1, d_m), jnp.float32),
            "bq_c": jnp.zeros((1, d_m), jnp.float32),
            "bk_c": jnp.zeros((1, d_m), jnp.float32),
            "bv_c": jnp.zeros((1, d_m), jnp.float32),
            "bo_c": jnp.zeros((1, d_m), jnp.float32),
            "b1":   jnp.zeros((1, d_ff), jnp.float32),
            "b2":   jnp.zeros((1, d_m), jnp.float32),
            "ln1_g": jnp.ones((1, d_m), jnp.float32),
            "ln1_b": jnp.zeros((1, d_m), jnp.float32),
            "ln2_g": jnp.ones((1, d_m), jnp.float32),
            "ln2_b": jnp.zeros((1, d_m), jnp.float32),
            "ln3_g": jnp.ones((1, d_m), jnp.float32),
            "ln3_b": jnp.zeros((1, d_m), jnp.float32),
        }
        params["layers"].append(lp)
    params["packed"] = pack_layer_params(params["layers"], d_m)
    return params


# ---------------------------------------------------------------------------
# Pure-JAX reference (f32 everywhere) built from the UNPACKED per-layer params
# ---------------------------------------------------------------------------
def bart_decoder_ref(dec_inp_batch, enc_hid_state, inp_mask, trg_mask, params):
    d_m = params["tok_emb"].shape[1]
    H, dh = ATTN_HEADS, d_m // ATTN_HEADS
    x = (jnp.take(params["tok_emb"], dec_inp_batch, axis=0) * math.sqrt(d_m)
         + params["pos_emb"][:dec_inp_batch.shape[1]][None])

    def ln(h, g, b):
        mu = h.mean(-1, keepdims=True)
        var = ((h - mu) ** 2).mean(-1, keepdims=True)
        return (h - mu) * jax.lax.rsqrt(var + 1e-5) * g + b

    def mha(q_in, kv_in, mask, wq, bq, wk, bk, wv, bv, wo, bo):
        q = q_in @ wq + bq
        k = kv_in @ wk + bk
        v = kv_in @ wv + bv
        Bb, Sq, _ = q.shape
        Sk = k.shape[1]
        qh = q.reshape(Bb, Sq, H, dh).transpose(0, 2, 1, 3)
        kh = k.reshape(Bb, Sk, H, dh).transpose(0, 2, 1, 3)
        vh = v.reshape(Bb, Sk, H, dh).transpose(0, 2, 1, 3)
        s = jnp.einsum("bhqd,bhkd->bhqk", qh, kh) / math.sqrt(dh) + mask[:, None]
        p = jax.nn.softmax(s, axis=-1)
        ctx = jnp.einsum("bhqk,bhkd->bhqd", p, vh).transpose(0, 2, 1, 3)
        return ctx.reshape(Bb, Sq, d_m) @ wo + bo

    for lp in params["layers"]:
        sa = mha(x, x, trg_mask, lp["wq_s"], lp["bq_s"], lp["wk_s"], lp["bk_s"],
                 lp["wv_s"], lp["bv_s"], lp["wo_s"], lp["bo_s"])
        x = ln(x + sa, lp["ln1_g"], lp["ln1_b"])
        ca = mha(x, enc_hid_state, inp_mask, lp["wq_c"], lp["bq_c"], lp["wk_c"],
                 lp["bk_c"], lp["wv_c"], lp["bv_c"], lp["wo_c"], lp["bo_c"])
        x = ln(x + ca, lp["ln2_g"], lp["ln2_b"])
        h1 = jax.nn.gelu(x @ lp["w1"] + lp["b1"], approximate=True)
        h2 = h1 @ lp["w2"] + lp["b2"]
        x = ln(x + h2, lp["ln3_g"], lp["ln3_b"])
    return x


# ---------------------------------------------------------------------------
if __name__ == "__main__":
    key = jax.random.PRNGKey(0)
    k_par, k_ids, k_enc = jax.random.split(key, 3)

    params = init_params(k_par, VOCAB, D_M, N_LAYERS)

    dec_inp_batch = jax.random.randint(k_ids, (B, S_DEC), 0, VOCAB, dtype=jnp.int32)
    enc_hid_state = jax.random.normal(k_enc, (B, S_ENC, D_M), jnp.float32)

    # Additive masks: 0 = attend, -1e9 = masked (causal / encoder padding masks).
    causal = jnp.triu(jnp.full((S_DEC, S_DEC), -1e9, jnp.float32), k=1)
    trg_mask = jnp.broadcast_to(causal, (B, S_DEC, S_DEC))
    pad = jnp.zeros((B, S_ENC), jnp.float32).at[1, S_ENC - 2:].set(-1e9)
    inp_mask = jnp.broadcast_to(pad[:, None, :], (B, S_DEC, S_ENC))

    out = bart_decoder(dec_inp_batch, enc_hid_state, inp_mask, trg_mask, params)
    out = jax.block_until_ready(out)
    assert out.shape == (B, S_DEC, D_M) and out.dtype == jnp.float32
    assert bool(jnp.all(jnp.isfinite(out)))

    # Cross-check against the pure-JAX f32 reference (kernel uses bf16 matmul operands
    # + approx reciprocal, so allow a loose tolerance).
    ref = bart_decoder_ref(dec_inp_batch, enc_hid_state, inp_mask, trg_mask, params)
    max_err = float(jnp.max(jnp.abs(out - ref)))
    assert max_err < 1e-1, f"mismatch vs pure-JAX reference: {max_err}"

    print("KERNEL_OK")
</pallas_src>

<mosaic_0001>
module attributes {stable_mosaic.version = 11 : i64} {
  func.func @kernel(%arg0: i32, %arg1: memref<16xi32, #tpu.memory_space<smem>>, %arg2: memref<8x32xf32, #tpu.memory_space<vmem>>, %arg3: memref<16x32xf32, #tpu.memory_space<vmem>>, %arg4: memref<16x16xf32, #tpu.memory_space<vmem>>, %arg5: memref<16x16xf32, #tpu.memory_space<vmem>>, %arg6: memref<50x32xf32, #tpu.memory_space<vmem>>, %arg7: memref<2x32x96xbf16, #tpu.memory_space<vmem>>, %arg8: memref<2x32x32xbf16, #tpu.memory_space<vmem>>, %arg9: memref<2x32x32xbf16, #tpu.memory_space<vmem>>, %arg10: memref<32x128xbf16, #tpu.memory_space<vmem>>, %arg11: memref<2x32x32xbf16, #tpu.memory_space<vmem>>, %arg12: memref<2x32x128xbf16, #tpu.memory_space<vmem>>, %arg13: memref<2x1x128xf32, #tpu.memory_space<vmem>>, %arg14: memref<2x128x32xbf16, #tpu.memory_space<vmem>>, %arg15: memref<2x16x32xf32, #tpu.memory_space<vmem>>, %arg16: memref<16x32xf32, #tpu.memory_space<vmem>>, %arg17: memref<16x32xf32, #tpu.memory_space<vmem>>) attributes {dimension_semantics = [#tpu.dimension_semantics<arbitrary>], iteration_bounds = array<i64: 1>, scalar_prefetch = 1 : i64, scratch_operands = 1 : i64, tpu.core_type = #tpu.core_type<tc>, window_params = [{pipeline_mode = #tpu.pipeline_mode<synchronous>, transform_indices = @transform_0, window_bounds = array<i64: 8, 32>}, {pipeline_mode = #tpu.pipeline_mode<synchronous>, transform_indices = @transform_1, window_bounds = array<i64: 16, 32>}, {pipeline_mode = #tpu.pipeline_mode<synchronous>, transform_indices = @transform_2, window_bounds = array<i64: 16, 16>}, {pipeline_mode = #tpu.pipeline_mode<synchronous>, transform_indices = @transform_3, window_bounds = array<i64: 16, 16>}, {pipeline_mode = #tpu.pipeline_mode<synchronous>, transform_indices = @transform_4, window_bounds = array<i64: 50, 32>}, {pipeline_mode = #tpu.pipeline_mode<synchronous>, transform_indices = @transform_5, window_bounds = array<i64: 2, 32, 96>}, {pipeline_mode = #tpu.pipeline_mode<synchronous>, transform_indices = @transform_6, window_bounds = array<i64: 2, 32, 32>}, {pipeline_mode = #tpu.pipeline_mode<synchronous>, transform_indices = @transform_7, window_bounds = array<i64: 2, 32, 32>}, {pipeline_mode = #tpu.pipeline_mode<synchronous>, transform_indices = @transform_8, window_bounds = array<i64: 32, 128>}, {pipeline_mode = #tpu.pipeline_mode<synchronous>, transform_indices = @transform_9, window_bounds = array<i64: 2, 32, 32>}, {pipeline_mode = #tpu.pipeline_mode<synchronous>, transform_indices = @transform_10, window_bounds = array<i64: 2, 32, 128>}, {pipeline_mode = #tpu.pipeline_mode<synchronous>, transform_indices = @transform_11, window_bounds = array<i64: 2, 1, 128>}, {pipeline_mode = #tpu.pipeline_mode<synchronous>, transform_indices = @transform_12, window_bounds = array<i64: 2, 128, 32>}, {pipeline_mode = #tpu.pipeline_mode<synchronous>, transform_indices = @transform_13, window_bounds = array<i64: 2, 16, 32>}, {pipeline_mode = #tpu.pipeline_mode<synchronous>, transform_indices = @transform_14, window_bounds = array<i64: 16, 32>}]} {
    %c0 = arith.constant 0 : index
    %0 = memref.load %arg1[%c0] : memref<16xi32, #tpu.memory_space<smem>>
    %1 = arith.index_cast %0 : i32 to index
    %c0_0 = arith.constant 0 : index
    %2 = vector.load %arg6[%1, %c0_0] : memref<50x32xf32, #tpu.memory_space<vmem>>, vector<1x32xf32>
    %cst = arith.constant 5.65685415 : f32
    %3 = vector.broadcast %cst : f32 to vector<1x32xf32>
    %4 = arith.mulf %2, %3 : vector<1x32xf32>
    %c0_1 = arith.constant 0 : index
    %c0_2 = arith.constant 0 : index
    %5 = vector.load %arg2[%c0_1, %c0_2] : memref<8x32xf32, #tpu.memory_space<vmem>>, vector<1x32xf32>
    %6 = arith.addf %4, %5 : vector<1x32xf32>
    %c0_3 = arith.constant 0 : index
    %c0_4 = arith.constant 0 : index
    %7 = vector.load %arg17[%c0_3, %c0_4] : memref<16x32xf32, #tpu.memory_space<vmem>>, vector<1x32xf32>
    tpu.vector_store %arg17[%c0_3, %c0_4], %6 {strides = array<i32>} : memref<16x32xf32, #tpu.memory_space<vmem>>, vector<1x32xf32>,
    %c1 = arith.constant 1 : index
    %8 = memref.load %arg1[%c1] : memref<16xi32, #tpu.memory_space<smem>>
    %9 = arith.index_cast %8 : i32 to index
    %c0_5 = arith.constant 0 : index
    %10 = vector.load %arg6[%9, %c0_5] : memref<50x32xf32, #tpu.memory_space<vmem>>, vector<1x32xf32>
    %cst_6 = arith.constant 5.65685415 : f32
    %11 = vector.broadcast %cst_6 : f32 to vector<1x32xf32>
    %12 = arith.mulf %10, %11 : vector<1x32xf32>
    %c1_7 = arith.constant 1 : index
    %c0_8 = arith.constant 0 : index
    %13 = vector.load %arg2[%c1_7, %c0_8] : memref<8x32xf32, #tpu.memory_space<vmem>>, vector<1x32xf32>
    %14 = arith.addf %12, %13 : vector<1x32xf32>
    %c1_9 = arith.constant 1 : index
    %c0_10 = arith.constant 0 : index
    %15 = vector.load %arg17[%c1_9, %c0_10] : memref<16x32xf32, #tpu.memory_space<vmem>>, vector<1x32xf32>
    tpu.vector_store %arg17[%c1_9, %c0_10], %14 {strides = array<i32>} : memref<16x32xf32, #tpu.memory_space<vmem>>, vector<1x32xf32>,
    %c2 = arith.constant 2 : index
    %16 = memref.load %arg1[%c2] : memref<16xi32, #tpu.memory_space<smem>>
    %17 = arith.index_cast %16 : i32 to index
    %c0_11 = arith.constant 0 : index
    %18 = vector.load %arg6[%17, %c0_11] : memref<50x32xf32, #tpu.memory_space<vmem>>, vector<1x32xf32>
    %cst_12 = arith.constant 5.65685415 : f32
    %19 = vector.broadcast %cst_12 : f32 to vector<1x32xf32>
    %20 = arith.mulf %18, %19 : vector<1x32xf32>
    %c2_13 = arith.constant 2 : index
    %c0_14 = arith.constant 0 : index
    %21 = vector.load %arg2[%c2_13, %c0_14] : memref<8x32xf32, #tpu.memory_space<vmem>>, vector<1x32xf32>
    %22 = arith.addf %20, %21 : vector<1x32xf32>
    %c2_15 = arith.constant 2 : index
    %c0_16 = arith.constant 0 : index
    %23 = vector.load %arg17[%c2_15, %c0_16] : memref<16x32xf32, #tpu.memory_space<vmem>>, vector<1x32xf32>
    tpu.vector_store %arg17[%c2_15, %c0_16], %22 {strides = array<i32>} : memref<16x32xf32, #tpu.memory_space<vmem>>, vector<1x32xf32>,
    %c3 = arith.constant 3 : index
    %24 = memref.load %arg1[%c3] : memref<16xi32, #tpu.memory_space<smem>>
    %25 = arith.index_cast %24 : i32 to index
    %c0_17 = arith.constant 0 : index
    %26 = vector.load %arg6[%25, %c0_17] : memref<50x32xf32, #tpu.memory_space<vmem>>, vector<1x32xf32>
    %cst_18 = arith.constant 5.65685415 : f32
    %27 = vector.broadcast %cst_18 : f32 to vector<1x32xf32>
    %28 = arith.mulf %26, %27 : vector<1x32xf32>
    %c3_19 = arith.constant 3 : index
    %c0_20 = arith.constant 0 : index
    %29 = vector.load %arg2[%c3_19, %c0_20] : memref<8x32xf32, #tpu.memory_space<vmem>>, vector<1x32xf32>
    %30 = arith.addf %28, %29 : vector<1x32xf32>
    %c3_21 = arith.constant 3 : index
    %c0_22 = arith.constant 0 : index
    %31 = vector.load %arg17[%c3_21, %c0_22] : memref<16x32xf32, #tpu.memory_space<vmem>>, vector<1x32xf32>
    tpu.vector_store %arg17[%c3_21, %c0_22], %30 {strides = array<i32>} : memref<16x32xf32, #tpu.memory_space<vmem>>, vector<1x32xf32>,
    %c4 = arith.constant 4 : index
    %32 = memref.load %arg1[%c4] : memref<16xi32, #tpu.memory_space<smem>>
    %33 = arith.index_cast %32 : i32 to index
    %c0_23 = arith.constant 0 : index
    %34 = vector.load %arg6[%33, %c0_23] : memref<50x32xf32, #tpu.memory_space<vmem>>, vector<1x32xf32>
    %cst_24 = arith.constant 5.65685415 : f32
    %35 = vector.broadcast %cst_24 : f32 to vector<1x32xf32>
    %36 = arith.mulf %34, %35 : vector<1x32xf32>
    %c4_25 = arith.constant 4 : index
    %c0_26 = arith.constant 0 : index
    %37 = vector.load %arg2[%c4_25, %c0_26] : memref<8x32xf32, #tpu.memory_space<vmem>>, vector<1x32xf32>
    %38 = arith.addf %36, %37 : vector<1x32xf32>
    %c4_27 = arith.constant 4 : index
    %c0_28 = arith.constant 0 : index
    %39 = vector.load %arg17[%c4_27, %c0_28] : memref<16x32xf32, #tpu.memory_space<vmem>>, vector<1x32xf32>
    tpu.vector_store %arg17[%c4_27, %c0_28], %38 {strides = array<i32>} : memref<16x32xf32, #tpu.memory_space<vmem>>, vector<1x32xf32>,
    %c5 = arith.constant 5 : index
    %40 = memref.load %arg1[%c5] : memref<16xi32, #tpu.memory_space<smem>>
    %41 = arith.index_cast %40 : i32 to index
    %c0_29 = arith.constant 0 : index
    %42 = vector.load %arg6[%41, %c0_29] : memref<50x32xf32, #tpu.memory_space<vmem>>, vector<1x32xf32>
    %cst_30 = arith.constant 5.65685415 : f32
    %43 = vector.broadcast %cst_30 : f32 to vector<1x32xf32>
    %44 = arith.mulf %42, %43 : vector<1x32xf32>
    %c5_31 = arith.constant 5 : index
    %c0_32 = arith.constant 0 : index
    %45 = vector.load %arg2[%c5_31, %c0_32] : memref<8x32xf32, #tpu.memory_space<vmem>>, vector<1x32xf32>
    %46 = arith.addf %44, %45 : vector<1x32xf32>
    %c5_33 = arith.constant 5 : index
    %c0_34 = arith.constant 0 : index
    %47 = vector.load %arg17[%c5_33, %c0_34] : memref<16x32xf32, #tpu.memory_space<vmem>>, vector<1x32xf32>
    tpu.vector_store %arg17[%c5_33, %c0_34], %46 {strides = array<i32>} : memref<16x32xf32, #tpu.memory_space<vmem>>, vector<1x32xf32>,
    %c6 = arith.constant 6 : index
    %48 = memref.load %arg1[%c6] : memref<16xi32, #tpu.memory_space<smem>>
    %49 = arith.index_cast %48 : i32 to index
    %c0_35 = arith.constant 0 : index
    %50 = vector.load %arg6[%49, %c0_35] : memref<50x32xf32, #tpu.memory_space<vmem>>, vector<1x32xf32>
    %cst_36 = arith.constant 5.65685415 : f32
    %51 = vector.broadcast %cst_36 : f32 to vector<1x32xf32>
    %52 = arith.mulf %50, %51 : vector<1x32xf32>
    %c6_37 = arith.constant 6 : index
    %c0_38 = arith.constant 0 : index
    %53 = vector.load %arg2[%c6_37, %c0_38] : memref<8x32xf32, #tpu.memory_space<vmem>>, vector<1x32xf32>
    %54 = arith.addf %52, %53 : vector<1x32xf32>
    %c6_39 = arith.constant 6 : index
    %c0_40 = arith.constant 0 : index
    %55 = vector.load %arg17[%c6_39, %c0_40] : memref<16x32xf32, #tpu.memory_space<vmem>>, vector<1x32xf32>
    tpu.vector_store %arg17[%c6_39, %c0_40], %54 {strides = array<i32>} : memref<16x32xf32, #tpu.memory_space<vmem>>, vector<1x32xf32>,
    %c7 = arith.constant 7 : index
    %56 = memref.load %arg1[%c7] : memref<16xi32, #tpu.memory_space<smem>>
    %57 = arith.index_cast %56 : i32 to index
    %c0_41 = arith.constant 0 : index
    %58 = vector.load %arg6[%57, %c0_41] : memref<50x32xf32, #tpu.memory_space<vmem>>, vector<1x32xf32>
    %cst_42 = arith.constant 5.65685415 : f32
    %59 = vector.broadcast %cst_42 : f32 to vector<1x32xf32>
    %60 = arith.mulf %58, %59 : vector<1x32xf32>
    %c7_43 = arith.constant 7 : index
    %c0_44 = arith.constant 0 : index
    %61 = vector.load %arg2[%c7_43, %c0_44] : memref<8x32xf32, #tpu.memory_space<vmem>>, vector<1x32xf32>
    %62 = arith.addf %60, %61 : vector<1x32xf32>
    %c7_45 = arith.constant 7 : index
    %c0_46 = arith.constant 0 : index
    %63 = vector.load %arg17[%c7_45, %c0_46] : memref<16x32xf32, #tpu.memory_space<vmem>>, vector<1x32xf32>
    tpu.vector_store %arg17[%c7_45, %c0_46], %62 {strides = array<i32>} : memref<16x32xf32, #tpu.memory_space<vmem>>, vector<1x32xf32>,
    %c8 = arith.constant 8 : index
    %64 = memref.load %arg1[%c8] : memref<16xi32, #tpu.memory_space<smem>>
    %65 = arith.index_cast %64 : i32 to index
    %c0_47 = arith.constant 0 : index
    %66 = vector.load %arg6[%65, %c0_47] : memref<50x32xf32, #tpu.memory_space<vmem>>, vector<1x32xf32>
    %cst_48 = arith.constant 5.65685415 : f32
    %67 = vector.broadcast %cst_48 : f32 to vector<1x32xf32>
    %68 = arith.mulf %66, %67 : vector<1x32xf32>
    %c0_49 = arith.constant 0 : index
    %c0_50 = arith.constant 0 : index
    %69 = vector.load %arg2[%c0_49, %c0_50] : memref<8x32xf32, #tpu.memory_space<vmem>>, vector<1x32xf32>
    %70 = arith.addf %68, %69 : vector<1x32xf32>
    %c8_51 = arith.constant 8 : index
    %c0_52 = arith.constant 0 : index
    %71 = vector.load %arg17[%c8_51, %c0_52] : memref<16x32xf32, #tpu.memory_space<vmem>>, vector<1x32xf32>
    tpu.vector_store %arg17[%c8_51, %c0_52], %70 {strides = array<i32>} : memref<16x32xf32, #tpu.memory_space<vmem>>, vector<1x32xf32>,
    %c9 = arith.constant 9 : index
    %72 = memref.load %arg1[%c9] : memref<16xi32, #tpu.memory_space<smem>>
    %73 = arith.index_cast %72 : i32 to index
    %c0_53 = arith.constant 0 : index
    %74 = vector.load %arg6[%73, %c0_53] : memref<50x32xf32, #tpu.memory_space<vmem>>, vector<1x32xf32>
    %cst_54 = arith.constant 5.65685415 : f32
    %75 = vector.broadcast %cst_54 : f32 to vector<1x32xf32>
    %76 = arith.mulf %74, %75 : vector<1x32xf32>
    %c1_55 = arith.constant 1 : index
    %c0_56 = arith.constant 0 : index
    %77 = vector.load %arg2[%c1_55, %c0_56] : memref<8x32xf32, #tpu.memory_space<vmem>>, vector<1x32xf32>
    %78 = arith.addf %76, %77 : vector<1x32xf32>
    %c9_57 = arith.constant 9 : index
    %c0_58 = arith.constant 0 : index
    %79 = vector.load %arg17[%c9_57, %c0_58] : memref<16x32xf32, #tpu.memory_space<vmem>>, vector<1x32xf32>
    tpu.vector_store %arg17[%c9_57, %c0_58], %78 {strides = array<i32>} : memref<16x32xf32, #tpu.memory_space<vmem>>, vector<1x32xf32>,
    %c10 = arith.constant 10 : index
    %80 = memref.load %arg1[%c10] : memref<16xi32, #tpu.memory_space<smem>>
    %81 = arith.index_cast %80 : i32 to index
    %c0_59 = arith.constant 0 : index
    %82 = vector.load %arg6[%81, %c0_59] : memref<50x32xf32, #tpu.memory_space<vmem>>, vector<1x32xf32>
    %cst_60 = arith.constant 5.65685415 : f32
    %83 = vector.broadcast %cst_60 : f32 to vector<1x32xf32>
    %84 = arith.mulf %82, %83 : vector<1x32xf32>
    %c2_61 = arith.constant 2 : index
    %c0_62 = arith.constant 0 : index
    %85 = vector.load %arg2[%c2_61, %c0_62] : memref<8x32xf32, #tpu.memory_space<vmem>>, vector<1x32xf32>
    %86 = arith.addf %84, %85 : vector<1x32xf32>
    %c10_63 = arith.constant 10 : index
    %c0_64 = arith.constant 0 : index
    %87 = vector.load %arg17[%c10_63, %c0_64] : memref<16x32xf32, #tpu.memory_space<vmem>>, vector<1x32xf32>
    tpu.vector_store %arg17[%c10_63, %c0_64], %86 {strides = array<i32>} : memref<16x32xf32, #tpu.memory_space<vmem>>, vector<1x32xf32>,
    %c11 = arith.constant 11 : index
    %88 = memref.load %arg1[%c11] : memref<16xi32, #tpu.memory_space<smem>>
    %89 = arith.index_cast %88 : i32 to index
    %c0_65 = arith.constant 0 : index
    %90 = vector.load %arg6[%89, %c0_65] : memref<50x32xf32, #tpu.memory_space<vmem>>, vector<1x32xf32>
    %cst_66 = arith.constant 5.65685415 : f32
    %91 = vector.broadcast %cst_66 : f32 to vector<1x32xf32>
    %92 = arith.mulf %90, %91 : vector<1x32xf32>
    %c3_67 = arith.constant 3 : index
    %c0_68 = arith.constant 0 : index
    %93 = vector.load %arg2[%c3_67, %c0_68] : memref<8x32xf32, #tpu.memory_space<vmem>>, vector<1x32xf32>
    %94 = arith.addf %92, %93 : vector<1x32xf32>
    %c11_69 = arith.constant 11 : index
    %c0_70 = arith.constant 0 : index
    %95 = vector.load %arg17[%c11_69, %c0_70] : memref<16x32xf32, #tpu.memory_space<vmem>>, vector<1x32xf32>
    tpu.vector_store %arg17[%c11_69, %c0_70], %94 {strides = array<i32>} : memref<16x32xf32, #tpu.memory_space<vmem>>, vector<1x32xf32>,
    %c12 = arith.constant 12 : index
    %96 = memref.load %arg1[%c12] : memref<16xi32, #tpu.memory_space<smem>>
    %97 = arith.index_cast %96 : i32 to index
    %c0_71 = arith.constant 0 : index
    %98 = vector.load %arg6[%97, %c0_71] : memref<50x32xf32, #tpu.memory_space<vmem>>, vector<1x32xf32>
    %cst_72 = arith.constant 5.65685415 : f32
    %99 = vector.broadcast %cst_72 : f32 to vector<1x32xf32>
    %100 = arith.mulf %98, %99 : vector<1x32xf32>
    %c4_73 = arith.constant 4 : index
    %c0_74 = arith.constant 0 : index
    %101 = vector.load %arg2[%c4_73, %c0_74] : memref<8x32xf32, #tpu.memory_space<vmem>>, vector<1x32xf32>
    %102 = arith.addf %100, %101 : vector<1x32xf32>
    %c12_75 = arith.constant 12 : index
    %c0_76 = arith.constant 0 : index
    %103 = vector.load %arg17[%c12_75, %c0_76] : memref<16x32xf32, #tpu.memory_space<vmem>>, vector<1x32xf32>
    tpu.vector_store %arg17[%c12_75, %c0_76], %102 {strides = array<i32>} : memref<16x32xf32, #tpu.memory_space<vmem>>, vector<1x32xf32>,
    %c13 = arith.constant 13 : index
    %104 = memref.load %arg1[%c13] : memref<16xi32, #tpu.memory_space<smem>>
    %105 = arith.index_cast %104 : i32 to index
    %c0_77 = arith.constant 0 : index
    %106 = vector.load %arg6[%105, %c0_77] : memref<50x32xf32, #tpu.memory_space<vmem>>, vector<1x32xf32>
    %cst_78 = arith.constant 5.65685415 : f32
    %107 = vector.broadcast %cst_78 : f32 to vector<1x32xf32>
    %108 = arith.mulf %106, %107 : vector<1x32xf32>
    %c5_79 = arith.constant 5 : index
    %c0_80 = arith.constant 0 : index
    %109 = vector.load %arg2[%c5_79, %c0_80] : memref<8x32xf32, #tpu.memory_space<vmem>>, vector<1x32xf32>
    %110 = arith.addf %108, %109 : vector<1x32xf32>
    %c13_81 = arith.constant 13 : index
    %c0_82 = arith.constant 0 : index
    %111 = vector.load %arg17[%c13_81, %c0_82] : memref<16x32xf32, #tpu.memory_space<vmem>>, vector<1x32xf32>
    tpu.vector_store %arg17[%c13_81, %c0_82], %110 {strides = array<i32>} : memref<16x32xf32, #tpu.memory_space<vmem>>, vector<1x32xf32>,
    %c14 = arith.constant 14 : index
    %112 = memref.load %arg1[%c14] : memref<16xi32, #tpu.memory_space<smem>>
    %113 = arith.index_cast %112 : i32 to index
    %c0_83 = arith.constant 0 : index
    %114 = vector.load %arg6[%113, %c0_83] : memref<50x32xf32, #tpu.memory_space<vmem>>, vector<1x32xf32>
    %cst_84 = arith.constant 5.65685415 : f32
    %115 = vector.broadcast %cst_84 : f32 to vector<1x32xf32>
    %116 = arith.mulf %114, %115 : vector<1x32xf32>
    %c6_85 = arith.constant 6 : index
    %c0_86 = arith.constant 0 : index
    %117 = vector.load %arg2[%c6_85, %c0_86] : memref<8x32xf32, #tpu.memory_space<vmem>>, vector<1x32xf32>
    %118 = arith.addf %116, %117 : vector<1x32xf32>
    %c14_87 = arith.constant 14 : index
    %c0_88 = arith.constant 0 : index
    %119 = vector.load %arg17[%c14_87, %c0_88] : memref<16x32xf32, #tpu.memory_space<vmem>>, vector<1x32xf32>
    tpu.vector_store %arg17[%c14_87, %c0_88], %118 {strides = array<i32>} : memref<16x32xf32, #tpu.memory_space<vmem>>, vector<1x32xf32>,
    %c15 = arith.constant 15 : index
    %120 = memref.load %arg1[%c15] : memref<16xi32, #tpu.memory_space<smem>>
    %121 = arith.index_cast %120 : i32 to index
    %c0_89 = arith.constant 0 : index
    %122 = vector.load %arg6[%121, %c0_89] : memref<50x32xf32, #tpu.memory_space<vmem>>, vector<1x32xf32>
    %cst_90 = arith.constant 5.65685415 : f32
    %123 = vector.broadcast %cst_90 : f32 to vector<1x32xf32>
    %124 = arith.mulf %122, %123 : vector<1x32xf32>
    %c7_91 = arith.constant 7 : index
    %c0_92 = arith.constant 0 : index
    %125 = vector.load %arg2[%c7_91, %c0_92] : memref<8x32xf32, #tpu.memory_space<vmem>>, vector<1x32xf32>
    %126 = arith.addf %124, %125 : vector<1x32xf32>
    %c15_93 = arith.constant 15 : index
    %c0_94 = arith.constant 0 : index
    %127 = vector.load %arg17[%c15_93, %c0_94] : memref<16x32xf32, #tpu.memory_space<vmem>>, vector<1x32xf32>
    tpu.vector_store %arg17[%c15_93, %c0_94], %126 {strides = array<i32>} : memref<16x32xf32, #tpu.memory_space<vmem>>, vector<1x32xf32>,
    %c0_95 = arith.constant 0 : index
    %c0_96 = arith.constant 0 : index
    %128 = vector.load %arg17[%c0_95, %c0_96] : memref<16x32xf32, #tpu.memory_space<vmem>>, vector<16x32xf32>
    %c0_97 = arith.constant 0 : index
    %c0_98 = arith.constant 0 : index
    %129 = vector.load %arg4[%c0_97, %c0_98] : memref<16x16xf32, #tpu.memory_space<vmem>>, vector<16x16xf32>
    %c0_99 = arith.constant 0 : index
    %c0_100 = arith.constant 0 : index
    %130 = vector.load %arg5[%c0_99, %c0_100] : memref<16x16xf32, #tpu.memory_space<vmem>>, vector<16x16xf32>
    %c0_101 = arith.constant 0 : index
    %c0_102 = arith.constant 0 : index
    %131 = vector.load %arg3[%c0_101, %c0_102] : memref<16x32xf32, #tpu.memory_space<vmem>>, vector<16x32xf32>
    %132 = arith.truncf %131 : vector<16x32xf32> to vector<16x32xbf16>
    %c0_103 = arith.constant 0 : index
    %c0_104 = arith.constant 0 : index
    %133 = vector.load %arg10[%c0_103, %c0_104] : memref<32x128xbf16, #tpu.memory_space<vmem>>, vector<32x128xbf16>
    %cst_105 = arith.constant dense<0.000000e+00> : vector<16x128xf32>
    %134 = tpu.matmul %132, %133, %cst_105 {dimension_numbers = #tpu.dot_dimension_numbers<[1], [0], [0], [1], [0, 0, 1, 1], [], []>} : vector<16x32xbf16>, vector<32x128xbf16>, vector<16x128xf32> -> vector<16x128xf32>
    %135 = arith.truncf %128 : vector<16x32xf32> to vector<16x32xbf16>
    %c0_106 = arith.constant 0 : index
    %c0_107 = arith.constant 0 : index
    %c0_108 = arith.constant 0 : index
    %136 = vector.load %arg7[%c0_106, %c0_107, %c0_108] : memref<2x32x96xbf16, #tpu.memory_space<vmem>>, vector<1x32x96xbf16>
    %137 = vector.shape_cast %136 : vector<1x32x96xbf16> to vector<32x96xbf16>
    %cst_109 = arith.constant dense<0.000000e+00> : vector<16x96xf32>
    %138 = tpu.matmul %135, %137, %cst_109 {dimension_numbers = #tpu.dot_dimension_numbers<[1], [0], [0], [1], [0, 0, 1, 1], [], []>} : vector<16x32xbf16>, vector<32x96xbf16>, vector<16x96xf32> -> vector<16x96xf32>
    %139 = vector.extract_strided_slice %138 {offsets = [0, 0], sizes = [16, 32], strides = [1, 1]} : vector<16x96xf32> to vector<16x32xf32>
    %c0_110 = arith.constant 0 : index
    %c0_111 = arith.constant 0 : index
    %c0_112 = arith.constant 0 : index
    %140 = vector.load %arg15[%c0_110, %c0_111, %c0_112] : memref<2x16x32xf32, #tpu.memory_space<vmem>>, vector<1x1x32xf32>
    %141 = vector.shape_cast %140 : vector<1x1x32xf32> to vector<1x32xf32>
    %142 = vector.broadcast %141 : vector<1x32xf32> to vector<16x32xf32>
    %143 = arith.addf %139, %142 : vector<16x32xf32>
    %144 = vector.extract_strided_slice %138 {offsets = [0, 32], sizes = [16, 32], strides = [1, 1]} : vector<16x96xf32> to vector<16x32xf32>
    %c0_113 = arith.constant 0 : index
    %c1_114 = arith.constant 1 : index
    %c0_115 = arith.constant 0 : index
    %145 = vector.load %arg15[%c0_113, %c1_114, %c0_115] : memref<2x16x32xf32, #tpu.memory_space<vmem>>, vector<1x1x32xf32>
    %146 = vector.shape_cast %145 : vector<1x1x32xf32> to vector<1x32xf32>
    %147 = vector.broadcast %146 : vector<1x32xf32> to vector<16x32xf32>
    %148 = arith.addf %144, %147 : vector<16x32xf32>
    %149 = vector.extract_strided_slice %138 {offsets = [0, 64], sizes = [16, 32], strides = [1, 1]} : vector<16x96xf32> to vector<16x32xf32>
    %c0_116 = arith.constant 0 : index
    %c2_117 = arith.constant 2 : index
    %c0_118 = arith.constant 0 : index
    %150 = vector.load %arg15[%c0_116, %c2_117, %c0_118] : memref<2x16x32xf32, #tpu.memory_space<vmem>>, vector<1x1x32xf32>
    %151 = vector.shape_cast %150 : vector<1x1x32xf32> to vector<1x32xf32>
    %152 = vector.broadcast %151 : vector<1x32xf32> to vector<16x32xf32>
    %153 = arith.addf %149, %152 : vector<16x32xf32>
    %c0_119 = arith.constant 0 : index
    %c3_120 = arith.constant 3 : index
    %c0_121 = arith.constant 0 : index
    %154 = vector.load %arg15[%c0_119, %c3_120, %c0_121] : memref<2x16x32xf32, #tpu.memory_space<vmem>>, vector<1x1x32xf32>
    %155 = vector.shape_cast %154 : vector<1x1x32xf32> to vector<1x32xf32>
    %156 = arith.truncf %143 : vector<16x32xf32> to vector<16x32xbf16>
    %157 = arith.truncf %148 : vector<16x32xf32> to vector<16x32xbf16>
    %158 = arith.truncf %153 : vector<16x32xf32> to vector<16x32xbf16>
    %159 = vector.extract_strided_slice %156 {offsets = [0, 0], sizes = [16, 8], strides = [1, 1]} : vector<16x32xbf16> to vector<16x8xbf16>
    %160 = vector.extract_strided_slice %157 {offsets = [0, 0], sizes = [16, 8], strides = [1, 1]} : vector<16x32xbf16> to vector<16x8xbf16>
    %cst_122 = arith.constant dense<0.000000e+00> : vector<16x16xf32>
    %161 = tpu.matmul %159, %160, %cst_122 {dimension_numbers = #tpu.dot_dimension_numbers<[1], [1], [0], [0], [0, 0, 1, 0], [], []>} : vector<16x8xbf16>, vector<16x8xbf16>, vector<16x16xf32> -> vector<16x16xf32>
    %cst_123 = arith.constant 0.353553385 : f32
    %162 = vector.broadcast %cst_123 : f32 to vector<16x16xf32>
    %163 = arith.mulf %161, %162 : vector<16x16xf32>
    %164 = arith.addf %163, %129 : vector<16x16xf32>
    %cst_124 = arith.constant dense<0xFF800000> : vector<16xf32>
    %165 = vector.multi_reduction <maximumf>, %164, %cst_124 [1] : vector<16x16xf32> to vector<16xf32>
    %166 = vector.shape_cast %165 : vector<16xf32> to vector<16x1xf32>
    %167 = vector.broadcast %166 : vector<16x1xf32> to vector<16x16xf32>
    %168 = arith.subf %164, %167 : vector<16x16xf32>
    %169 = math.exp %168 : vector<16x16xf32>
    %cst_125 = arith.constant dense<0.000000e+00> : vector<16xf32>
    %170 = vector.multi_reduction <add>, %169, %cst_125 [1] : vector<16x16xf32> to vector<16xf32>
    %171 = vector.shape_cast %170 : vector<16xf32> to vector<16x1xf32>
    %172 = tpu.reciprocal %171 {approx = true} : vector<16x1xf32> -> vector<16x1xf32>
    %173 = vector.broadcast %172 : vector<16x1xf32> to vector<16x16xf32>
    %174 = arith.mulf %169, %173 : vector<16x16xf32>
    %175 = arith.truncf %174 : vector<16x16xf32> to vector<16x16xbf16>
    %176 = vector.extract_strided_slice %158 {offsets = [0, 0], sizes = [16, 8], strides = [1, 1]} : vector<16x32xbf16> to vector<16x8xbf16>
    %cst_126 = arith.constant dense<0.000000e+00> : vector<16x8xf32>
    %177 = tpu.matmul %175, %176, %cst_126 {dimension_numbers = #tpu.dot_dimension_numbers<[1], [0], [0], [1], [0, 0, 1, 1], [], []>} : vector<16x16xbf16>, vector<16x8xbf16>, vector<16x8xf32> -> vector<16x8xf32>
    %178 = arith.truncf %177 : vector<16x8xf32> to vector<16x8xbf16>
    %c0_127 = arith.constant 0 : index
    %c0_128 = arith.constant 0 : index
    %c0_129 = arith.constant 0 : index
    %179 = vector.load %arg8[%c0_127, %c0_128, %c0_129] : memref<2x32x32xbf16, #tpu.memory_space<vmem>>, vector<1x8x32xbf16>
    %180 = vector.shape_cast %179 : vector<1x8x32xbf16> to vector<8x32xbf16>
    %cst_130 = arith.constant dense<0.000000e+00> : vector<16x32xf32>
    %181 = tpu.matmul %178, %180, %cst_130 {dimension_numbers = #tpu.dot_dimension_numbers<[1], [0], [0], [1], [0, 0, 1, 1], [], []>} : vector<16x8xbf16>, vector<8x32xbf16>, vector<16x32xf32> -> vector<16x32xf32>
    %182 = vector.broadcast %155 : vector<1x32xf32> to vector<16x32xf32>
    %183 = arith.addf %182, %181 : vector<16x32xf32>
    %184 = vector.extract_strided_slice %156 {offsets = [0, 8], sizes = [16, 8], strides = [1, 1]} : vector<16x32xbf16> to vector<16x8xbf16>
    %185 = vector.extract_strided_slice %157 {offsets = [0, 8], sizes = [16, 8], strides = [1, 1]} : vector<16x32xbf16> to vector<16x8xbf16>
    %cst_131 = arith.constant dense<0.000000e+00> : vector<16x16xf32>
    %186 = tpu.matmul %184, %185, %cst_131 {dimension_numbers = #tpu.dot_dimension_numbers<[1], [1], [0], [0], [0, 0, 1, 0], [], []>} : vector<16x8xbf16>, vector<16x8xbf16>, vector<16x16xf32> -> vector<16x16xf32>
    %cst_132 = arith.constant 0.353553385 : f32
    %187 = vector.broadcast %cst_132 : f32 to vector<16x16xf32>
    %188 = arith.mulf %186, %187 : vector<16x16xf32>
    %189 = arith.addf %188, %129 : vector<16x16xf32>
    %cst_133 = arith.constant dense<0xFF800000> : vector<16xf32>
    %190 = vector.multi_reduction <maximumf>, %189, %cst_133 [1] : vector<16x16xf32> to vector<16xf32>
    %191 = vector.shape_cast %190 : vector<16xf32> to vector<16x1xf32>
    %192 = vector.broadcast %191 : vector<16x1xf32> to vector<16x16xf32>
    %193 = arith.subf %189, %192 : vector<16x16xf32>
    %194 = math.exp %193 : vector<16x16xf32>
    %cst_134 = arith.constant dense<0.000000e+00> : vector<16xf32>
    %195 = vector.multi_reduction <add>, %194, %cst_134 [1] : vector<16x16xf32> to vector<16xf32>
    %196 = vector.shape_cast %195 : vector<16xf32> to vector<16x1xf32>
    %197 = tpu.reciprocal %196 {approx = true} : vector<16x1xf32> -> vector<16x1xf32>
    %198 = vector.broadcast %197 : vector<16x1xf32> to vector<16x16xf32>
    %199 = arith.mulf %194, %198 : vector<16x16xf32>
    %200 = arith.truncf %199 : vector<16x16xf32> to vector<16x16xbf16>
    %201 = vector.extract_strided_slice %158 {offsets = [0, 8], sizes = [16, 8], strides = [1, 1]} : vector<16x32xbf16> to vector<16x8xbf16>
    %cst_135 = arith.constant dense<0.000000e+00> : vector<16x8xf32>
    %202 = tpu.matmul %200, %201, %cst_135 {dimension_numbers = #tpu.dot_dimension_numbers<[1], [0], [0], [1], [0, 0, 1, 1], [], []>} : vector<16x16xbf16>, vector<16x8xbf16>, vector<16x8xf32> -> vector<16x8xf32>
    %203 = arith.truncf %202 : vector<16x8xf32> to vector<16x8xbf16>
    %c0_136 = arith.constant 0 : index
    %c8_137 = arith.constant 8 : index
    %c0_138 = arith.constant 0 : index
    %204 = vector.load %arg8[%c0_136, %c8_137, %c0_138] : memref<2x32x32xbf16, #tpu.memory_space<vmem>>, vector<1x8x32xbf16>
    %205 = vector.shape_cast %204 : vector<1x8x32xbf16> to vector<8x32xbf16>
    %cst_139 = arith.constant dense<0.000000e+00> : vector<16x32xf32>
    %206 = tpu.matmul %203, %205, %cst_139 {dimension_numbers = #tpu.dot_dimension_numbers<[1], [0], [0], [1], [0, 0, 1, 1], [], []>} : vector<16x8xbf16>, vector<8x32xbf16>, vector<16x32xf32> -> vector<16x32xf32>
    %207 = arith.addf %183, %206 : vector<16x32xf32>
    %208 = vector.extract_strided_slice %156 {offsets = [0, 16], sizes = [16, 8], strides = [1, 1]} : vector<16x32xbf16> to vector<16x8xbf16>
    %209 = vector.extract_strided_slice %157 {offsets = [0, 16], sizes = [16, 8], strides = [1, 1]} : vector<16x32xbf16> to vector<16x8xbf16>
    %cst_140 = arith.constant dense<0.000000e+00> : vector<16x16xf32>
    %210 = tpu.matmul %208, %209, %cst_140 {dimension_numbers = #tpu.dot_dimension_numbers<[1], [1], [0], [0], [0, 0, 1, 0], [], []>} : vector<16x8xbf16>, vector<16x8xbf16>, vector<16x16xf32> -> vector<16x16xf32>
    %cst_141 = arith.constant 0.353553385 : f32
    %211 = vector.broadcast %cst_141 : f32 to vector<16x16xf32>
    %212 = arith.mulf %210, %211 : vector<16x16xf32>
    %213 = arith.addf %212, %129 : vector<16x16xf32>
    %cst_142 = arith.constant dense<0xFF800000> : vector<16xf32>
    %214 = vector.multi_reduction <maximumf>, %213, %cst_142 [1] : vector<16x16xf32> to vector<16xf32>
    %215 = vector.shape_cast %214 : vector<16xf32> to vector<16x1xf32>
    %216 = vector.broadcast %215 : vector<16x1xf32> to vector<16x16xf32>
    %217 = arith.subf %213, %216 : vector<16x16xf32>
    %218 = math.exp %217 : vector<16x16xf32>
    %cst_143 = arith.constant dense<0.000000e+00> : vector<16xf32>
    %219 = vector.multi_reduction <add>, %218, %cst_143 [1] : vector<16x16xf32> to vector<16xf32>
    %220 = vector.shape_cast %219 : vector<16xf32> to vector<16x1xf32>
    %221 = tpu.reciprocal %220 {approx = true} : vector<16x1xf32> -> vector<16x1xf32>
    %222 = vector.broadcast %221 : vector<16x1xf32> to vector<16x16xf32>
    %223 = arith.mulf %218, %222 : vector<16x16xf32>
    %224 = arith.truncf %223 : vector<16x16xf32> to vector<16x16xbf16>
    %225 = vector.extract_strided_slice %158 {offsets = [0, 16], sizes = [16, 8], strides = [1, 1]} : vector<16x32xbf16> to vector<16x8xbf16>
    %cst_144 = arith.constant dense<0.000000e+00> : vector<16x8xf32>
    %226 = tpu.matmul %224, %225, %cst_144 {dimension_numbers = #tpu.dot_dimension_numbers<[1], [0], [0], [1], [0, 0, 1, 1], [], []>} : vector<16x16xbf16>, vector<16x8xbf16>, vector<16x8xf32> -> vector<16x8xf32>
    %227 = arith.truncf %226 : vector<16x8xf32> to vector<16x8xbf16>
    %c0_145 = arith.constant 0 : index
    %c16 = arith.constant 16 : index
    %c0_146 = arith.constant 0 : index
    %228 = vector.load %arg8[%c0_145, %c16, %c0_146] : memref<2x32x32xbf16, #tpu.memory_space<vmem>>, vector<1x8x32xbf16>
    %229 = vector.shape_cast %228 : vector<1x8x32xbf16> to vector<8x32xbf16>
    %cst_147 = arith.constant dense<0.000000e+00> : vector<16x32xf32>
    %230 = tpu.matmul %227, %229, %cst_147 {dimension_numbers = #tpu.dot_dimension_numbers<[1], [0], [0], [1], [0, 0, 1, 1], [], []>} : vector<16x8xbf16>, vector<8x32xbf16>, vector<16x32xf32> -> vector<16x32xf32>
    %231 = arith.addf %207, %230 : vector<16x32xf32>
    %232 = vector.extract_strided_slice %156 {offsets = [0, 24], sizes = [16, 8], strides = [1, 1]} : vector<16x32xbf16> to vector<16x8xbf16>
    %233 = vector.extract_strided_slice %157 {offsets = [0, 24], sizes = [16, 8], strides = [1, 1]} : vector<16x32xbf16> to vector<16x8xbf16>
    %cst_148 = arith.constant dense<0.000000e+00> : vector<16x16xf32>
    %234 = tpu.matmul %232, %233, %cst_148 {dimension_numbers = #tpu.dot_dimension_numbers<[1], [1], [0], [0], [0, 0, 1, 0], [], []>} : vector<16x8xbf16>, vector<16x8xbf16>, vector<16x16xf32> -> vector<16x16xf32>
    %cst_149 = arith.constant 0.353553385 : f32
    %235 = vector.broadcast %cst_149 : f32 to vector<16x16xf32>
    %236 = arith.mulf %234, %235 : vector<16x16xf32>
    %237 = arith.addf %236, %129 : vector<16x16xf32>
    %cst_150 = arith.constant dense<0xFF800000> : vector<16xf32>
    %238 = vector.multi_reduction <maximumf>, %237, %cst_150 [1] : vector<16x16xf32> to vector<16xf32>
    %239 = vector.shape_cast %238 : vector<16xf32> to vector<16x1xf32>
    %240 = vector.broadcast %239 : vector<16x1xf32> to vector<16x16xf32>
    %241 = arith.subf %237, %240 : vector<16x16xf32>
    %242 = math.exp %241 : vector<16x16xf32>
    %cst_151 = arith.constant dense<0.000000e+00> : vector<16xf32>
    %243 = vector.multi_reduction <add>, %242, %cst_151 [1] : vector<16x16xf32> to vector<16xf32>
    %244 = vector.shape_cast %243 : vector<16xf32> to vector<16x1xf32>
    %245 = tpu.reciprocal %244 {approx = true} : vector<16x1xf32> -> vector<16x1xf32>
    %246 = vector.broadcast %245 : vector<16x1xf32> to vector<16x16xf32>
    %247 = arith.mulf %242, %246 : vector<16x16xf32>
    %248 = arith.truncf %247 : vector<16x16xf32> to vector<16x16xbf16>
    %249 = vector.extract_strided_slice %158 {offsets = [0, 24], sizes = [16, 8], strides = [1, 1]} : vector<16x32xbf16> to vector<16x8xbf16>
    %cst_152 = arith.constant dense<0.000000e+00> : vector<16x8xf32>
    %250 = tpu.matmul %248, %249, %cst_152 {dimension_numbers = #tpu.dot_dimension_numbers<[1], [0], [0], [1], [0, 0, 1, 1], [], []>} : vector<16x16xbf16>, vector<16x8xbf16>, vector<16x8xf32> -> vector<16x8xf32>
    %251 = arith.truncf %250 : vector<16x8xf32> to vector<16x8xbf16>
    %c0_153 = arith.constant 0 : index
    %c24 = arith.constant 24 : index
    %c0_154 = arith.constant 0 : index
    %252 = vector.load %arg8[%c0_153, %c24, %c0_154] : memref<2x32x32xbf16, #tpu.memory_space<vmem>>, vector<1x8x32xbf16>
    %253 = vector.shape_cast %252 : vector<1x8x32xbf16> to vector<8x32xbf16>
    %cst_155 = arith.constant dense<0.000000e+00> : vector<16x32xf32>
    %254 = tpu.matmul %251, %253, %cst_155 {dimension_numbers = #tpu.dot_dimension_numbers<[1], [0], [0], [1], [0, 0, 1, 1], [], []>} : vector<16x8xbf16>, vector<8x32xbf16>, vector<16x32xf32> -> vector<16x32xf32>
    %255 = arith.addf %231, %254 : vector<16x32xf32>
    %256 = arith.addf %128, %255 : vector<16x32xf32>
    %c0_156 = arith.constant 0 : index
    %c8_157 = arith.constant 8 : index
    %c0_158 = arith.constant 0 : index
    %257 = vector.load %arg15[%c0_156, %c8_157, %c0_158] : memref<2x16x32xf32, #tpu.memory_space<vmem>>, vector<1x1x32xf32>
    %258 = vector.shape_cast %257 : vector<1x1x32xf32> to vector<1x32xf32>
    %c0_159 = arith.constant 0 : index
    %c9_160 = arith.constant 9 : index
    %c0_161 = arith.constant 0 : index
    %259 = vector.load %arg15[%c0_159, %c9_160, %c0_161] : memref<2x16x32xf32, #tpu.memory_space<vmem>>, vector<1x1x32xf32>
    %260 = vector.shape_cast %259 : vector<1x1x32xf32> to vector<1x32xf32>
    %cst_162 = arith.constant dense<0.000000e+00> : vector<16xf32>
    %261 = vector.multi_reduction <add>, %256, %cst_162 [1] : vector<16x32xf32> to vector<16xf32>
    %262 = vector.shape_cast %261 : vector<16xf32> to vector<16x1xf32>
    %cst_163 = arith.constant 3.200000e+01 : f32
    %263 = vector.broadcast %cst_163 : f32 to vector<16x1xf32>
    %264 = arith.divf %262, %263 : vector<16x1xf32>
    %265 = vector.broadcast %264 : vector<16x1xf32> to vector<16x32xf32>
    %266 = arith.subf %256, %265 : vector<16x32xf32>
    %267 = arith.mulf %266, %266 : vector<16x32xf32>
    %cst_164 = arith.constant dense<0.000000e+00> : vector<16xf32>
    %268 = vector.multi_reduction <add>, %267, %cst_164 [1] : vector<16x32xf32> to vector<16xf32>
    %269 = vector.shape_cast %268 : vector<16xf32> to vector<16x1xf32>
    %cst_165 = arith.constant 3.200000e+01 : f32
    %270 = vector.broadcast %cst_165 : f32 to vector<16x1xf32>
    %271 = arith.divf %269, %270 : vector<16x1xf32>
    %272 = vector.broadcast %264 : vector<16x1xf32> to vector<16x32xf32>
    %273 = arith.subf %256, %272 : vector<16x32xf32>
    %cst_166 = arith.constant 9.99999974E-6 : f32
    %274 = vector.broadcast %cst_166 : f32 to vector<16x1xf32>
    %275 = arith.addf %271, %274 : vector<16x1xf32>
    %276 = math.rsqrt %275 : vector<16x1xf32>
    %277 = vector.broadcast %276 : vector<16x1xf32> to vector<16x32xf32>
    %278 = arith.mulf %273, %277 : vector<16x32xf32>
    %279 = vector.broadcast %258 : vector<1x32xf32> to vector<16x32xf32>
    %280 = arith.mulf %278, %279 : vector<16x32xf32>
    %281 = vector.broadcast %260 : vector<1x32xf32> to vector<16x32xf32>
    %282 = arith.addf %280, %281 : vector<16x32xf32>
    %283 = arith.truncf %282 : vector<16x32xf32> to vector<16x32xbf16>
    %c0_167 = arith.constant 0 : index
    %c0_168 = arith.constant 0 : index
    %c0_169 = arith.constant 0 : index
    %284 = vector.load %arg9[%c0_167, %c0_168, %c0_169] : memref<2x32x32xbf16, #tpu.memory_space<vmem>>, vector<1x32x32xbf16>
    %285 = vector.shape_cast %284 : vector<1x32x32xbf16> to vector<32x32xbf16>
    %cst_170 = arith.constant dense<0.000000e+00> : vector<16x32xf32>
    %286 = tpu.matmul %283, %285, %cst_170 {dimension_numbers = #tpu.dot_dimension_numbers<[1], [0], [0], [1], [0, 0, 1, 1], [], []>} : vector<16x32xbf16>, vector<32x32xbf16>, vector<16x32xf32> -> vector<16x32xf32>
    %c0_171 = arith.constant 0 : index
    %c4_172 = arith.constant 4 : index
    %c0_173 = arith.constant 0 : index
    %287 = vector.load %arg15[%c0_171, %c4_172, %c0_173] : memref<2x16x32xf32, #tpu.memory_space<vmem>>, vector<1x1x32xf32>
    %288 = vector.shape_cast %287 : vector<1x1x32xf32> to vector<1x32xf32>
    %289 = vector.broadcast %288 : vector<1x32xf32> to vector<16x32xf32>
    %290 = arith.addf %286, %289 : vector<16x32xf32>
    %291 = vector.extract_strided_slice %134 {offsets = [0, 0], sizes = [16, 32], strides = [1, 1]} : vector<16x128xf32> to vector<16x32xf32>
    %c0_174 = arith.constant 0 : index
    %c5_175 = arith.constant 5 : index
    %c0_176 = arith.constant 0 : index
    %292 = vector.load %arg15[%c0_174, %c5_175, %c0_176] : memref<2x16x32xf32, #tpu.memory_space<vmem>>, vector<1x1x32xf32>
    %293 = vector.shape_cast %292 : vector<1x1x32xf32> to vector<1x32xf32>
    %294 = vector.broadcast %293 : vector<1x32xf32> to vector<16x32xf32>
    %295 = arith.addf %291, %294 : vector<16x32xf32>
    %296 = vector.extract_strided_slice %134 {offsets = [0, 32], sizes = [16, 32], strides = [1, 1]} : vector<16x128xf32> to vector<16x32xf32>
    %c0_177 = arith.constant 0 : index
    %c6_178 = arith.constant 6 : index
    %c0_179 = arith.constant 0 : index
    %297 = vector.load %arg15[%c0_177, %c6_178, %c0_179] : memref<2x16x32xf32, #tpu.memory_space<vmem>>, vector<1x1x32xf32>
    %298 = vector.shape_cast %297 : vector<1x1x32xf32> to vector<1x32xf32>
    %299 = vector.broadcast %298 : vector<1x32xf32> to vector<16x32xf32>
    %300 = arith.addf %296, %299 : vector<16x32xf32>
    %c0_180 = arith.constant 0 : index
    %c7_181 = arith.constant 7 : index
    %c0_182 = arith.constant 0 : index
    %301 = vector.load %arg15[%c0_180, %c7_181, %c0_182] : memref<2x16x32xf32, #tpu.memory_space<vmem>>, vector<1x1x32xf32>
    %302 = vector.shape_cast %301 : vector<1x1x32xf32> to vector<1x32xf32>
    %303 = arith.truncf %290 : vector<16x32xf32> to vector<16x32xbf16>
    %304 = arith.truncf %295 : vector<16x32xf32> to vector<16x32xbf16>
    %305 = arith.truncf %300 : vector<16x32xf32> to vector<16x32xbf16>
    %306 = vector.extract_strided_slice %303 {offsets = [0, 0], sizes = [16, 8], strides = [1, 1]} : vector<16x32xbf16> to vector<16x8xbf16>
    %307 = vector.extract_strided_slice %304 {offsets = [0, 0], sizes = [16, 8], strides = [1, 1]} : vector<16x32xbf16> to vector<16x8xbf16>
    %cst_183 = arith.constant dense<0.000000e+00> : vector<16x16xf32>
    %308 = tpu.matmul %306, %307, %cst_183 {dimension_numbers = #tpu.dot_dimension_numbers<[1], [1], [0], [0], [0, 0, 1, 0], [], []>} : vector<16x8xbf16>, vector<16x8xbf16>, vector<16x16xf32> -> vector<16x16xf32>
    %cst_184 = arith.constant 0.353553385 : f32
    %309 = vector.broadcast %cst_184 : f32 to vector<16x16xf32>
    %310 = arith.mulf %308, %309 : vector<16x16xf32>
    %311 = arith.addf %310, %130 : vector<16x16xf32>
    %cst_185 = arith.constant dense<0xFF800000> : vector<16xf32>
    %312 = vector.multi_reduction <maximumf>, %311, %cst_185 [1] : vector<16x16xf32> to vector<16xf32>
    %313 = vector.shape_cast %312 : vector<16xf32> to vector<16x1xf32>
    %314 = vector.broadcast %313 : vector<16x1xf32> to vector<16x16xf32>
    %315 = arith.subf %311, %314 : vector<16x16xf32>
    %316 = math.exp %315 : vector<16x16xf32>
    %cst_186 = arith.constant dense<0.000000e+00> : vector<16xf32>
    %317 = vector.multi_reduction <add>, %316, %cst_186 [1] : vector<16x16xf32> to vector<16xf32>
    %318 = vector.shape_cast %317 : vector<16xf32> to vector<16x1xf32>
    %319 = tpu.reciprocal %318 {approx = true} : vector<16x1xf32> -> vector<16x1xf32>
    %320 = vector.broadcast %319 : vector<16x1xf32> to vector<16x16xf32>
    %321 = arith.mulf %316, %320 : vector<16x16xf32>
    %322 = arith.truncf %321 : vector<16x16xf32> to vector<16x16xbf16>
    %323 = vector.extract_strided_slice %305 {offsets = [0, 0], sizes = [16, 8], strides = [1, 1]} : vector<16x32xbf16> to vector<16x8xbf16>
    %cst_187 = arith.constant dense<0.000000e+00> : vector<16x8xf32>
    %324 = tpu.matmul %322, %323, %cst_187 {dimension_numbers = #tpu.dot_dimension_numbers<[1], [0], [0], [1], [0, 0, 1, 1], [], []>} : vector<16x16xbf16>, vector<16x8xbf16>, vector<16x8xf32> -> vector<16x8xf32>
    %325 = arith.truncf %324 : vector<16x8xf32> to vector<16x8xbf16>
    %c0_188 = arith.constant 0 : index
    %c0_189 = arith.constant 0 : index
    %c0_190 = arith.constant 0 : index
    %326 = vector.load %arg11[%c0_188, %c0_189, %c0_190] : memref<2x32x32xbf16, #tpu.memory_space<vmem>>, vector<1x8x32xbf16>
    %327 = vector.shape_cast %326 : vector<1x8x32xbf16> to vector<8x32xbf16>
    %cst_191 = arith.constant dense<0.000000e+00> : vector<16x32xf32>
    %328 = tpu.matmul %325, %327, %cst_191 {dimension_numbers = #tpu.dot_dimension_numbers<[1], [0], [0], [1], [0, 0, 1, 1], [], []>} : vector<16x8xbf16>, vector<8x32xbf16>, vector<16x32xf32> -> vector<16x32xf32>
    %329 = vector.broadcast %302 : vector<1x32xf32> to vector<16x32xf32>
    %330 = arith.addf %329, %328 : vector<16x32xf32>
    %331 = vector.extract_strided_slice %303 {offsets = [0, 8], sizes = [16, 8], strides = [1, 1]} : vector<16x32xbf16> to vector<16x8xbf16>
    %332 = vector.extract_strided_slice %304 {offsets = [0, 8], sizes = [16, 8], strides = [1, 1]} : vector<16x32xbf16> to vector<16x8xbf16>
    %cst_192 = arith.constant dense<0.000000e+00> : vector<16x16xf32>
    %333 = tpu.matmul %331, %332, %cst_192 {dimension_numbers = #tpu.dot_dimension_numbers<[1], [1], [0], [0], [0, 0, 1, 0], [], []>} : vector<16x8xbf16>, vector<16x8xbf16>, vector<16x16xf32> -> vector<16x16xf32>
    %cst_193 = arith.constant 0.353553385 : f32
    %334 = vector.broadcast %cst_193 : f32 to vector<16x16xf32>
    %335 = arith.mulf %333, %334 : vector<16x16xf32>
    %336 = arith.addf %335, %130 : vector<16x16xf32>
    %cst_194 = arith.constant dense<0xFF800000> : vector<16xf32>
    %337 = vector.multi_reduction <maximumf>, %336, %cst_194 [1] : vector<16x16xf32> to vector<16xf32>
    %338 = vector.shape_cast %337 : vector<16xf32> to vector<16x1xf32>
    %339 = vector.broadcast %338 : vector<16x1xf32> to vector<16x16xf32>
    %340 = arith.subf %336, %339 : vector<16x16xf32>
    %341 = math.exp %340 : vector<16x16xf32>
    %cst_195 = arith.constant dense<0.000000e+00> : vector<16xf32>
    %342 = vector.multi_reduction <add>, %341, %cst_195 [1] : vector<16x16xf32> to vector<16xf32>
    %343 = vector.shape_cast %342 : vector<16xf32> to vector<16x1xf32>
    %344 = tpu.reciprocal %343 {approx = true} : vector<16x1xf32> -> vector<16x1xf32>
    %345 = vector.broadcast %344 : vector<16x1xf32> to vector<16x16xf32>
    %346 = arith.mulf %341, %345 : vector<16x16xf32>
    %347 = arith.truncf %346 : vector<16x16xf32> to vector<16x16xbf16>
    %348 = vector.extract_strided_slice %305 {offsets = [0, 8], sizes = [16, 8], strides = [1, 1]} : vector<16x32xbf16> to vector<16x8xbf16>
    %cst_196 = arith.constant dense<0.000000e+00> : vector<16x8xf32>
    %349 = tpu.matmul %347, %348, %cst_196 {dimension_numbers = #tpu.dot_dimension_numbers<[1], [0], [0], [1], [0, 0, 1, 1], [], []>} : vector<16x16xbf16>, vector<16x8xbf16>, vector<16x8xf32> -> vector<16x8xf32>
    %350 = arith.truncf %349 : vector<16x8xf32> to vector<16x8xbf16>
    %c0_197 = arith.constant 0 : index
    %c8_198 = arith.constant 8 : index
    %c0_199 = arith.constant 0 : index
    %351 = vector.load %arg11[%c0_197, %c8_198, %c0_199] : memref<2x32x32xbf16, #tpu.memory_space<vmem>>, vector<1x8x32xbf16>
    %352 = vector.shape_cast %351 : vector<1x8x32xbf16> to vector<8x32xbf16>
    %cst_200 = arith.constant dense<0.000000e+00> : vector<16x32xf32>
    %353 = tpu.matmul %350, %352, %cst_200 {dimension_numbers = #tpu.dot_dimension_numbers<[1], [0], [0], [1], [0, 0, 1, 1], [], []>} : vector<16x8xbf16>, vector<8x32xbf16>, vector<16x32xf32> -> vector<16x32xf32>
    %354 = arith.addf %330, %353 : vector<16x32xf32>
    %355 = vector.extract_strided_slice %303 {offsets = [0, 16], sizes = [16, 8], strides = [1, 1]} : vector<16x32xbf16> to vector<16x8xbf16>
    %356 = vector.extract_strided_slice %304 {offsets = [0, 16], sizes = [16, 8], strides = [1, 1]} : vector<16x32xbf16> to vector<16x8xbf16>
    %cst_201 = arith.constant dense<0.000000e+00> : vector<16x16xf32>
    %357 = tpu.matmul %355, %356, %cst_201 {dimension_numbers = #tpu.dot_dimension_numbers<[1], [1], [0], [0], [0, 0, 1, 0], [], []>} : vector<16x8xbf16>, vector<16x8xbf16>, vector<16x16xf32> -> vector<16x16xf32>
    %cst_202 = arith.constant 0.353553385 : f32
    %358 = vector.broadcast %cst_202 : f32 to vector<16x16xf32>
    %359 = arith.mulf %357, %358 : vector<16x16xf32>
    %360 = arith.addf %359, %130 : vector<16x16xf32>
    %cst_203 = arith.constant dense<0xFF800000> : vector<16xf32>
    %361 = vector.multi_reduction <maximumf>, %360, %cst_203 [1] : vector<16x16xf32> to vector<16xf32>
    %362 = vector.shape_cast %361 : vector<16xf32> to vector<16x1xf32>
    %363 = vector.broadcast %362 : vector<16x1xf32> to vector<16x16xf32>
    %364 = arith.subf %360, %363 : vector<16x16xf32>
    %365 = math.exp %364 : vector<16x16xf32>
    %cst_204 = arith.constant dense<0.000000e+00> : vector<16xf32>
    %366 = vector.multi_reduction <add>, %365, %cst_204 [1] : vector<16x16xf32> to vector<16xf32>
    %367 = vector.shape_cast %366 : vector<16xf32> to vector<16x1xf32>
    %368 = tpu.reciprocal %367 {approx = true} : vector<16x1xf32> -> vector<16x1xf32>
    %369 = vector.broadcast %368 : vector<16x1xf32> to vector<16x16xf32>
    %370 = arith.mulf %365, %369 : vector<16x16xf32>
    %371 = arith.truncf %370 : vector<16x16xf32> to vector<16x16xbf16>
    %372 = vector.extract_strided_slice %305 {offsets = [0, 16], sizes = [16, 8], strides = [1, 1]} : vector<16x32xbf16> to vector<16x8xbf16>
    %cst_205 = arith.constant dense<0.000000e+00> : vector<16x8xf32>
    %373 = tpu.matmul %371, %372, %cst_205 {dimension_numbers = #tpu.dot_dimension_numbers<[1], [0], [0], [1], [0, 0, 1, 1], [], []>} : vector<16x16xbf16>, vector<16x8xbf16>, vector<16x8xf32> -> vector<16x8xf32>
    %374 = arith.truncf %373 : vector<16x8xf32> to vector<16x8xbf16>
    %c0_206 = arith.constant 0 : index
    %c16_207 = arith.constant 16 : index
    %c0_208 = arith.constant 0 : index
    %375 = vector.load %arg11[%c0_206, %c16_207, %c0_208] : memref<2x32x32xbf16, #tpu.memory_space<vmem>>, vector<1x8x32xbf16>
    %376 = vector.shape_cast %375 : vector<1x8x32xbf16> to vector<8x32xbf16>
    %cst_209 = arith.constant dense<0.000000e+00> : vector<16x32xf32>
    %377 = tpu.matmul %374, %376, %cst_209 {dimension_numbers = #tpu.dot_dimension_numbers<[1], [0], [0], [1], [0, 0, 1, 1], [], []>} : vector<16x8xbf16>, vector<8x32xbf16>, vector<16x32xf32> -> vector<16x32xf32>
    %378 = arith.addf %354, %377 : vector<16x32xf32>
    %379 = vector.extract_strided_slice %303 {offsets = [0, 24], sizes = [16, 8], strides = [1, 1]} : vector<16x32xbf16> to vector<16x8xbf16>
    %380 = vector.extract_strided_slice %304 {offsets = [0, 24], sizes = [16, 8], strides = [1, 1]} : vector<16x32xbf16> to vector<16x8xbf16>
    %cst_210 = arith.constant dense<0.000000e+00> : vector<16x16xf32>
    %381 = tpu.matmul %379, %380, %cst_210 {dimension_numbers = #tpu.dot_dimension_numbers<[1], [1], [0], [0], [0, 0, 1, 0], [], []>} : vector<16x8xbf16>, vector<16x8xbf16>, vector<16x16xf32> -> vector<16x16xf32>
    %cst_211 = arith.constant 0.353553385 : f32
    %382 = vector.broadcast %cst_211 : f32 to vector<16x16xf32>
    %383 = arith.mulf %381, %382 : vector<16x16xf32>
    %384 = arith.addf %383, %130 : vector<16x16xf32>
    %cst_212 = arith.constant dense<0xFF800000> : vector<16xf32>
    %385 = vector.multi_reduction <maximumf>, %384, %cst_212 [1] : vector<16x16xf32> to vector<16xf32>
    %386 = vector.shape_cast %385 : vector<16xf32> to vector<16x1xf32>
    %387 = vector.broadcast %386 : vector<16x1xf32> to vector<16x16xf32>
    %388 = arith.subf %384, %387 : vector<16x16xf32>
    %389 = math.exp %388 : vector<16x16xf32>
    %cst_213 = arith.constant dense<0.000000e+00> : vector<16xf32>
    %390 = vector.multi_reduction <add>, %389, %cst_213 [1] : vector<16x16xf32> to vector<16xf32>
    %391 = vector.shape_cast %390 : vector<16xf32> to vector<16x1xf32>
    %392 = tpu.reciprocal %391 {approx = true} : vector<16x1xf32> -> vector<16x1xf32>
    %393 = vector.broadcast %392 : vector<16x1xf32> to vector<16x16xf32>
    %394 = arith.mulf %389, %393 : vector<16x16xf32>
    %395 = arith.truncf %394 : vector<16x16xf32> to vector<16x16xbf16>
    %396 = vector.extract_strided_slice %305 {offsets = [0, 24], sizes = [16, 8], strides = [1, 1]} : vector<16x32xbf16> to vector<16x8xbf16>
    %cst_214 = arith.constant dense<0.000000e+00> : vector<16x8xf32>
    %397 = tpu.matmul %395, %396, %cst_214 {dimension_numbers = #tpu.dot_dimension_numbers<[1], [0], [0], [1], [0, 0, 1, 1], [], []>} : vector<16x16xbf16>, vector<16x8xbf16>, vector<16x8xf32> -> vector<16x8xf32>
    %398 = arith.truncf %397 : vector<16x8xf32> to vector<16x8xbf16>
    %c0_215 = arith.constant 0 : index
    %c24_216 = arith.constant 24 : index
    %c0_217 = arith.constant 0 : index
    %399 = vector.load %arg11[%c0_215, %c24_216, %c0_217] : memref<2x32x32xbf16, #tpu.memory_space<vmem>>, vector<1x8x32xbf16>
    %400 = vector.shape_cast %399 : vector<1x8x32xbf16> to vector<8x32xbf16>
    %cst_218 = arith.constant dense<0.000000e+00> : vector<16x32xf32>
    %401 = tpu.matmul %398, %400, %cst_218 {dimension_numbers = #tpu.dot_dimension_numbers<[1], [0], [0], [1], [0, 0, 1, 1], [], []>} : vector<16x8xbf16>, vector<8x32xbf16>, vector<16x32xf32> -> vector<16x32xf32>
    %402 = arith.addf %378, %401 : vector<16x32xf32>
    %403 = arith.addf %282, %402 : vector<16x32xf32>
    %c0_219 = arith.constant 0 : index
    %c10_220 = arith.constant 10 : index
    %c0_221 = arith.constant 0 : index
    %404 = vector.load %arg15[%c0_219, %c10_220, %c0_221] : memref<2x16x32xf32, #tpu.memory_space<vmem>>, vector<1x1x32xf32>
    %405 = vector.shape_cast %404 : vector<1x1x32xf32> to vector<1x32xf32>
    %c0_222 = arith.constant 0 : index
    %c11_223 = arith.constant 11 : index
    %c0_224 = arith.constant 0 : index
    %406 = vector.load %arg15[%c0_222, %c11_223, %c0_224] : memref<2x16x32xf32, #tpu.memory_space<vmem>>, vector<1x1x32xf32>
    %407 = vector.shape_cast %406 : vector<1x1x32xf32> to vector<1x32xf32>
    %cst_225 = arith.constant dense<0.000000e+00> : vector<16xf32>
    %408 = vector.multi_reduction <add>, %403, %cst_225 [1] : vector<16x32xf32> to vector<16xf32>
    %409 = vector.shape_cast %408 : vector<16xf32> to vector<16x1xf32>
    %cst_226 = arith.constant 3.200000e+01 : f32
    %410 = vector.broadcast %cst_226 : f32 to vector<16x1xf32>
    %411 = arith.divf %409, %410 : vector<16x1xf32>
    %412 = vector.broadcast %411 : vector<16x1xf32> to vector<16x32xf32>
    %413 = arith.subf %403, %412 : vector<16x32xf32>
    %414 = arith.mulf %413, %413 : vector<16x32xf32>
    %cst_227 = arith.constant dense<0.000000e+00> : vector<16xf32>
    %415 = vector.multi_reduction <add>, %414, %cst_227 [1] : vector<16x32xf32> to vector<16xf32>
    %416 = vector.shape_cast %415 : vector<16xf32> to vector<16x1xf32>
    %cst_228 = arith.constant 3.200000e+01 : f32
    %417 = vector.broadcast %cst_228 : f32 to vector<16x1xf32>
    %418 = arith.divf %416, %417 : vector<16x1xf32>
    %419 = vector.broadcast %411 : vector<16x1xf32> to vector<16x32xf32>
    %420 = arith.subf %403, %419 : vector<16x32xf32>
    %cst_229 = arith.constant 9.99999974E-6 : f32
    %421 = vector.broadcast %cst_229 : f32 to vector<16x1xf32>
    %422 = arith.addf %418, %421 : vector<16x1xf32>
    %423 = math.rsqrt %422 : vector<16x1xf32>
    %424 = vector.broadcast %423 : vector<16x1xf32> to vector<16x32xf32>
    %425 = arith.mulf %420, %424 : vector<16x32xf32>
    %426 = vector.broadcast %405 : vector<1x32xf32> to vector<16x32xf32>
    %427 = arith.mulf %425, %426 : vector<16x32xf32>
    %428 = vector.broadcast %407 : vector<1x32xf32> to vector<16x32xf32>
    %429 = arith.addf %427, %428 : vector<16x32xf32>
    %430 = arith.truncf %429 : vector<16x32xf32> to vector<16x32xbf16>
    %c0_230 = arith.constant 0 : index
    %c0_231 = arith.constant 0 : index
    %c0_232 = arith.constant 0 : index
    %431 = vector.load %arg12[%c0_230, %c0_231, %c0_232] : memref<2x32x128xbf16, #tpu.memory_space<vmem>>, vector<1x32x128xbf16>
    %432 = vector.shape_cast %431 : vector<1x32x128xbf16> to vector<32x128xbf16>
    %cst_233 = arith.constant dense<0.000000e+00> : vector<16x128xf32>
    %433 = tpu.matmul %430, %432, %cst_233 {dimension_numbers = #tpu.dot_dimension_numbers<[1], [0], [0], [1], [0, 0, 1, 1], [], []>} : vector<16x32xbf16>, vector<32x128xbf16>, vector<16x128xf32> -> vector<16x128xf32>
    %c0_234 = arith.constant 0 : index
    %c0_235 = arith.constant 0 : index
    %c0_236 = arith.constant 0 : index
    %434 = vector.load %arg13[%c0_234, %c0_235, %c0_236] : memref<2x1x128xf32, #tpu.memory_space<vmem>>, vector<1x1x128xf32>
    %435 = vector.shape_cast %434 : vector<1x1x128xf32> to vector<1x128xf32>
    %436 = vector.broadcast %435 : vector<1x128xf32> to vector<16x128xf32>
    %437 = arith.addf %433, %436 : vector<16x128xf32>
    %438 = arith.mulf %437, %437 : vector<16x128xf32>
    %439 = arith.mulf %437, %438 : vector<16x128xf32>
    %cst_237 = arith.constant 4.471500e-02 : f32
    %440 = vector.broadcast %cst_237 : f32 to vector<16x128xf32>
    %441 = arith.mulf %440, %439 : vector<16x128xf32>
    %442 = arith.addf %437, %441 : vector<16x128xf32>
    %cst_238 = arith.constant 0.797884583 : f32
    %443 = vector.broadcast %cst_238 : f32 to vector<16x128xf32>
    %444 = arith.mulf %443, %442 : vector<16x128xf32>
    %445 = math.tanh %444 : vector<16x128xf32>
    %cst_239 = arith.constant 1.000000e+00 : f32
    %446 = vector.broadcast %cst_239 : f32 to vector<16x128xf32>
    %447 = arith.addf %446, %445 : vector<16x128xf32>
    %cst_240 = arith.constant 5.000000e-01 : f32
    %448 = vector.broadcast %cst_240 : f32 to vector<16x128xf32>
    %449 = arith.mulf %448, %447 : vector<16x128xf32>
    %450 = arith.mulf %437, %449 : vector<16x128xf32>
    %451 = arith.truncf %450 : vector<16x128xf32> to vector<16x128xbf16>
    %c0_241 = arith.constant 0 : index
    %c0_242 = arith.constant 0 : index
    %c0_243 = arith.constant 0 : index
    %452 = vector.load %arg14[%c0_241, %c0_242, %c0_243] : memref<2x128x32xbf16, #tpu.memory_space<vmem>>, vector<1x128x32xbf16>
    %453 = vector.shape_cast %452 : vector<1x128x32xbf16> to vector<128x32xbf16>
    %cst_244 = arith.constant dense<0.000000e+00> : vector<16x32xf32>
    %454 = tpu.matmul %451, %453, %cst_244 {dimension_numbers = #tpu.dot_dimension_numbers<[1], [0], [0], [1], [0, 0, 1, 1], [], []>} : vector<16x128xbf16>, vector<128x32xbf16>, vector<16x32xf32> -> vector<16x32xf32>
    %c0_245 = arith.constant 0 : index
    %c14_246 = arith.constant 14 : index
    %c0_247 = arith.constant 0 : index
    %455 = vector.load %arg15[%c0_245, %c14_246, %c0_247] : memref<2x16x32xf32, #tpu.memory_space<vmem>>, vector<1x1x32xf32>
    %456 = vector.shape_cast %455 : vector<1x1x32xf32> to vector<1x32xf32>
    %457 = vector.broadcast %456 : vector<1x32xf32> to vector<16x32xf32>
    %458 = arith.addf %454, %457 : vector<16x32xf32>
    %459 = arith.addf %429, %458 : vector<16x32xf32>
    %c0_248 = arith.constant 0 : index
    %c12_249 = arith.constant 12 : index
    %c0_250 = arith.constant 0 : index
    %460 = vector.load %arg15[%c0_248, %c12_249, %c0_250] : memref<2x16x32xf32, #tpu.memory_space<vmem>>, vector<1x1x32xf32>
    %461 = vector.shape_cast %460 : vector<1x1x32xf32> to vector<1x32xf32>
    %c0_251 = arith.constant 0 : index
    %c13_252 = arith.constant 13 : index
    %c0_253 = arith.constant 0 : index
    %462 = vector.load %arg15[%c0_251, %c13_252, %c0_253] : memref<2x16x32xf32, #tpu.memory_space<vmem>>, vector<1x1x32xf32>
    %463 = vector.shape_cast %462 : vector<1x1x32xf32> to vector<1x32xf32>
    %cst_254 = arith.constant dense<0.000000e+00> : vector<16xf32>
    %464 = vector.multi_reduction <add>, %459, %cst_254 [1] : vector<16x32xf32> to vector<16xf32>
    %465 = vector.shape_cast %464 : vector<16xf32> to vector<16x1xf32>
    %cst_255 = arith.constant 3.200000e+01 : f32
    %466 = vector.broadcast %cst_255 : f32 to vector<16x1xf32>
    %467 = arith.divf %465, %466 : vector<16x1xf32>
    %468 = vector.broadcast %467 : vector<16x1xf32> to vector<16x32xf32>
    %469 = arith.subf %459, %468 : vector<16x32xf32>
    %470 = arith.mulf %469, %469 : vector<16x32xf32>
    %cst_256 = arith.constant dense<0.000000e+00> : vector<16xf32>
    %471 = vector.multi_reduction <add>, %470, %cst_256 [1] : vector<16x32xf32> to vector<16xf32>
    %472 = vector.shape_cast %471 : vector<16xf32> to vector<16x1xf32>
    %cst_257 = arith.constant 3.200000e+01 : f32
    %473 = vector.broadcast %cst_257 : f32 to vector<16x1xf32>
    %474 = arith.divf %472, %473 : vector<16x1xf32>
    %475 = vector.broadcast %467 : vector<16x1xf32> to vector<16x32xf32>
    %476 = arith.subf %459, %475 : vector<16x32xf32>
    %cst_258 = arith.constant 9.99999974E-6 : f32
    %477 = vector.broadcast %cst_258 : f32 to vector<16x1xf32>
    %478 = arith.addf %474, %477 : vector<16x1xf32>
    %479 = math.rsqrt %478 : vector<16x1xf32>
    %480 = vector.broadcast %479 : vector<16x1xf32> to vector<16x32xf32>
    %481 = arith.mulf %476, %480 : vector<16x32xf32>
    %482 = vector.broadcast %461 : vector<1x32xf32> to vector<16x32xf32>
    %483 = arith.mulf %481, %482 : vector<16x32xf32>
    %484 = vector.broadcast %463 : vector<1x32xf32> to vector<16x32xf32>
    %485 = arith.addf %483, %484 : vector<16x32xf32>
    %486 = arith.truncf %485 : vector<16x32xf32> to vector<16x32xbf16>
    %c1_259 = arith.constant 1 : index
    %c0_260 = arith.constant 0 : index
    %c0_261 = arith.constant 0 : index
    %487 = vector.load %arg7[%c1_259, %c0_260, %c0_261] : memref<2x32x96xbf16, #tpu.memory_space<vmem>>, vector<1x32x96xbf16>
    %488 = vector.shape_cast %487 : vector<1x32x96xbf16> to vector<32x96xbf16>
    %cst_262 = arith.constant dense<0.000000e+00> : vector<16x96xf32>
    %489 = tpu.matmul %486, %488, %cst_262 {dimension_numbers = #tpu.dot_dimension_numbers<[1], [0], [0], [1], [0, 0, 1, 1], [], []>} : vector<16x32xbf16>, vector<32x96xbf16>, vector<16x96xf32> -> vector<16x96xf32>
    %490 = vector.extract_strided_slice %489 {offsets = [0, 0], sizes = [16, 32], strides = [1, 1]} : vector<16x96xf32> to vector<16x32xf32>
    %c1_263 = arith.constant 1 : index
    %c0_264 = arith.constant 0 : index
    %c0_265 = arith.constant 0 : index
    %491 = vector.load %arg15[%c1_263, %c0_264, %c0_265] : memref<2x16x32xf32, #tpu.memory_space<vmem>>, vector<1x1x32xf32>
    %492 = vector.shape_cast %491 : vector<1x1x32xf32> to vector<1x32xf32>
    %493 = vector.broadcast %492 : vector<1x32xf32> to vector<16x32xf32>
    %494 = arith.addf %490, %493 : vector<16x32xf32>
    %495 = vector.extract_strided_slice %489 {offsets = [0, 32], sizes = [16, 32], strides = [1, 1]} : vector<16x96xf32> to vector<16x32xf32>
    %c1_266 = arith.constant 1 : index
    %c1_267 = arith.constant 1 : index
    %c0_268 = arith.constant 0 : index
    %496 = vector.load %arg15[%c1_266, %c1_267, %c0_268] : memref<2x16x32xf32, #tpu.memory_space<vmem>>, vector<1x1x32xf32>
    %497 = vector.shape_cast %496 : vector<1x1x32xf32> to vector<1x32xf32>
    %498 = vector.broadcast %497 : vector<1x32xf32> to vector<16x32xf32>
    %499 = arith.addf %495, %498 : vector<16x32xf32>
    %500 = vector.extract_strided_slice %489 {offsets = [0, 64], sizes = [16, 32], strides = [1, 1]} : vector<16x96xf32> to vector<16x32xf32>
    %c1_269 = arith.constant 1 : index
    %c2_270 = arith.constant 2 : index
    %c0_271 = arith.constant 0 : index
    %501 = vector.load %arg15[%c1_269, %c2_270, %c0_271] : memref<2x16x32xf32, #tpu.memory_space<vmem>>, vector<1x1x32xf32>
    %502 = vector.shape_cast %501 : vector<1x1x32xf32> to vector<1x32xf32>
    %503 = vector.broadcast %502 : vector<1x32xf32> to vector<16x32xf32>
    %504 = arith.addf %500, %503 : vector<16x32xf32>
    %c1_272 = arith.constant 1 : index
    %c3_273 = arith.constant 3 : index
    %c0_274 = arith.constant 0 : index
    %505 = vector.load %arg15[%c1_272, %c3_273, %c0_274] : memref<2x16x32xf32, #tpu.memory_space<vmem>>, vector<1x1x32xf32>
    %506 = vector.shape_cast %505 : vector<1x1x32xf32> to vector<1x32xf32>
    %507 = arith.truncf %494 : vector<16x32xf32> to vector<16x32xbf16>
    %508 = arith.truncf %499 : vector<16x32xf32> to vector<16x32xbf16>
    %509 = arith.truncf %504 : vector<16x32xf32> to vector<16x32xbf16>
    %510 = vector.extract_strided_slice %507 {offsets = [0, 0], sizes = [16, 8], strides = [1, 1]} : vector<16x32xbf16> to vector<16x8xbf16>
    %511 = vector.extract_strided_slice %508 {offsets = [0, 0], sizes = [16, 8], strides = [1, 1]} : vector<16x32xbf16> to vector<16x8xbf16>
    %cst_275 = arith.constant dense<0.000000e+00> : vector<16x16xf32>
    %512 = tpu.matmul %510, %511, %cst_275 {dimension_numbers = #tpu.dot_dimension_numbers<[1], [1], [0], [0], [0, 0, 1, 0], [], []>} : vector<16x8xbf16>, vector<16x8xbf16>, vector<16x16xf32> -> vector<16x16xf32>
    %cst_276 = arith.constant 0.353553385 : f32
    %513 = vector.broadcast %cst_276 : f32 to vector<16x16xf32>
    %514 = arith.mulf %512, %513 : vector<16x16xf32>
    %515 = arith.addf %514, %129 : vector<16x16xf32>
    %cst_277 = arith.constant dense<0xFF800000> : vector<16xf32>
    %516 = vector.multi_reduction <maximumf>, %515, %cst_277 [1] : vector<16x16xf32> to vector<16xf32>
    %517 = vector.shape_cast %516 : vector<16xf32> to vector<16x1xf32>
    %518 = vector.broadcast %517 : vector<16x1xf32> to vector<16x16xf32>
    %519 = arith.subf %515, %518 : vector<16x16xf32>
    %520 = math.exp %519 : vector<16x16xf32>
    %cst_278 = arith.constant dense<0.000000e+00> : vector<16xf32>
    %521 = vector.multi_reduction <add>, %520, %cst_278 [1] : vector<16x16xf32> to vector<16xf32>
    %522 = vector.shape_cast %521 : vector<16xf32> to vector<16x1xf32>
    %523 = tpu.reciprocal %522 {approx = true} : vector<16x1xf32> -> vector<16x1xf32>
    %524 = vector.broadcast %523 : vector<16x1xf32> to vector<16x16xf32>
    %525 = arith.mulf %520, %524 : vector<16x16xf32>
    %526 = arith.truncf %525 : vector<16x16xf32> to vector<16x16xbf16>
    %527 = vector.extract_strided_slice %509 {offsets = [0, 0], sizes = [16, 8], strides = [1, 1]} : vector<16x32xbf16> to vector<16x8xbf16>
    %cst_279 = arith.constant dense<0.000000e+00> : vector<16x8xf32>
    %528 = tpu.matmul %526, %527, %cst_279 {dimension_numbers = #tpu.dot_dimension_numbers<[1], [0], [0], [1], [0, 0, 1, 1], [], []>} : vector<16x16xbf16>, vector<16x8xbf16>, vector<16x8xf32> -> vector<16x8xf32>
    %529 = arith.truncf %528 : vector<16x8xf32> to vector<16x8xbf16>
    %c1_280 = arith.constant 1 : index
    %c0_281 = arith.constant 0 : index
    %c0_282 = arith.constant 0 : index
    %530 = vector.load %arg8[%c1_280, %c0_281, %c0_282] : memref<2x32x32xbf16, #tpu.memory_space<vmem>>, vector<1x8x32xbf16>
    %531 = vector.shape_cast %530 : vector<1x8x32xbf16> to vector<8x32xbf16>
    %cst_283 = arith.constant dense<0.000000e+00> : vector<16x32xf32>
    %532 = tpu.matmul %529, %531, %cst_283 {dimension_numbers = #tpu.dot_dimension_numbers<[1], [0], [0], [1], [0, 0, 1, 1], [], []>} : vector<16x8xbf16>, vector<8x32xbf16>, vector<16x32xf32> -> vector<16x32xf32>
    %533 = vector.broadcast %506 : vector<1x32xf32> to vector<16x32xf32>
    %534 = arith.addf %533, %532 : vector<16x32xf32>
    %535 = vector.extract_strided_slice %507 {offsets = [0, 8], sizes = [16, 8], strides = [1, 1]} : vector<16x32xbf16> to vector<16x8xbf16>
    %536 = vector.extract_strided_slice %508 {offsets = [0, 8], sizes = [16, 8], strides = [1, 1]} : vector<16x32xbf16> to vector<16x8xbf16>
    %cst_284 = arith.constant dense<0.000000e+00> : vector<16x16xf32>
    %537 = tpu.matmul %535, %536, %cst_284 {dimension_numbers = #tpu.dot_dimension_numbers<[1], [1], [0], [0], [0, 0, 1, 0], [], []>} : vector<16x8xbf16>, vector<16x8xbf16>, vector<16x16xf32> -> vector<16x16xf32>
    %cst_285 = arith.constant 0.353553385 : f32
    %538 = vector.broadcast %cst_285 : f32 to vector<16x16xf32>
    %539 = arith.mulf %537, %538 : vector<16x16xf32>
    %540 = arith.addf %539, %129 : vector<16x16xf32>
    %cst_286 = arith.constant dense<0xFF800000> : vector<16xf32>
    %541 = vector.multi_reduction <maximumf>, %540, %cst_286 [1] : vector<16x16xf32> to vector<16xf32>
    %542 = vector.shape_cast %541 : vector<16xf32> to vector<16x1xf32>
    %543 = vector.broadcast %542 : vector<16x1xf32> to vector<16x16xf32>
    %544 = arith.subf %540, %543 : vector<16x16xf32>
    %545 = math.exp %544 : vector<16x16xf32>
    %cst_287 = arith.constant dense<0.000000e+00> : vector<16xf32>
    %546 = vector.multi_reduction <add>, %545, %cst_287 [1] : vector<16x16xf32> to vector<16xf32>
    %547 = vector.shape_cast %546 : vector<16xf32> to vector<16x1xf32>
    %548 = tpu.reciprocal %547 {approx = true} : vector<16x1xf32> -> vector<16x1xf32>
    %549 = vector.broadcast %548 : vector<16x1xf32> to vector<16x16xf32>
    %550 = arith.mulf %545, %549 : vector<16x16xf32>
    %551 = arith.truncf %550 : vector<16x16xf32> to vector<16x16xbf16>
    %552 = vector.extract_strided_slice %509 {offsets = [0, 8], sizes = [16, 8], strides = [1, 1]} : vector<16x32xbf16> to vector<16x8xbf16>
    %cst_288 = arith.constant dense<0.000000e+00> : vector<16x8xf32>
    %553 = tpu.matmul %551, %552, %cst_288 {dimension_numbers = #tpu.dot_dimension_numbers<[1], [0], [0], [1], [0, 0, 1, 1], [], []>} : vector<16x16xbf16>, vector<16x8xbf16>, vector<16x8xf32> -> vector<16x8xf32>
    %554 = arith.truncf %553 : vector<16x8xf32> to vector<16x8xbf16>
    %c1_289 = arith.constant 1 : index
    %c8_290 = arith.constant 8 : index
    %c0_291 = arith.constant 0 : index
    %555 = vector.load %arg8[%c1_289, %c8_290, %c0_291] : memref<2x32x32xbf16, #tpu.memory_space<vmem>>, vector<1x8x32xbf16>
    %556 = vector.shape_cast %555 : vector<1x8x32xbf16> to vector<8x32xbf16>
    %cst_292 = arith.constant dense<0.000000e+00> : vector<16x32xf32>
    %557 = tpu.matmul %554, %556, %cst_292 {dimension_numbers = #tpu.dot_dimension_numbers<[1], [0], [0], [1], [0, 0, 1, 1], [], []>} : vector<16x8xbf16>, vector<8x32xbf16>, vector<16x32xf32> -> vector<16x32xf32>
    %558 = arith.addf %534, %557 : vector<16x32xf32>
    %559 = vector.extract_strided_slice %507 {offsets = [0, 16], sizes = [16, 8], strides = [1, 1]} : vector<16x32xbf16> to vector<16x8xbf16>
    %560 = vector.extract_strided_slice %508 {offsets = [0, 16], sizes = [16, 8], strides = [1, 1]} : vector<16x32xbf16> to vector<16x8xbf16>
    %cst_293 = arith.constant dense<0.000000e+00> : vector<16x16xf32>
    %561 = tpu.matmul %559, %560, %cst_293 {dimension_numbers = #tpu.dot_dimension_numbers<[1], [1], [0], [0], [0, 0, 1, 0], [], []>} : vector<16x8xbf16>, vector<16x8xbf16>, vector<16x16xf32> -> vector<16x16xf32>
    %cst_294 = arith.constant 0.353553385 : f32
    %562 = vector.broadcast %cst_294 : f32 to vector<16x16xf32>
    %563 = arith.mulf %561, %562 : vector<16x16xf32>
    %564 = arith.addf %563, %129 : vector<16x16xf32>
    %cst_295 = arith.constant dense<0xFF800000> : vector<16xf32>
    %565 = vector.multi_reduction <maximumf>, %564, %cst_295 [1] : vector<16x16xf32> to vector<16xf32>
    %566 = vector.shape_cast %565 : vector<16xf32> to vector<16x1xf32>
    %567 = vector.broadcast %566 : vector<16x1xf32> to vector<16x16xf32>
    %568 = arith.subf %564, %567 : vector<16x16xf32>
    %569 = math.exp %568 : vector<16x16xf32>
    %cst_296 = arith.constant dense<0.000000e+00> : vector<16xf32>
    %570 = vector.multi_reduction <add>, %569, %cst_296 [1] : vector<16x16xf32> to vector<16xf32>
    %571 = vector.shape_cast %570 : vector<16xf32> to vector<16x1xf32>
    %572 = tpu.reciprocal %571 {approx = true} : vector<16x1xf32> -> vector<16x1xf32>
    %573 = vector.broadcast %572 : vector<16x1xf32> to vector<16x16xf32>
    %574 = arith.mulf %569, %573 : vector<16x16xf32>
    %575 = arith.truncf %574 : vector<16x16xf32> to vector<16x16xbf16>
    %576 = vector.extract_strided_slice %509 {offsets = [0, 16], sizes = [16, 8], strides = [1, 1]} : vector<16x32xbf16> to vector<16x8xbf16>
    %cst_297 = arith.constant dense<0.000000e+00> : vector<16x8xf32>
    %577 = tpu.matmul %575, %576, %cst_297 {dimension_numbers = #tpu.dot_dimension_numbers<[1], [0], [0], [1], [0, 0, 1, 1], [], []>} : vector<16x16xbf16>, vector<16x8xbf16>, vector<16x8xf32> -> vector<16x8xf32>
    %578 = arith.truncf %577 : vector<16x8xf32> to vector<16x8xbf16>
    %c1_298 = arith.constant 1 : index
    %c16_299 = arith.constant 16 : index
    %c0_300 = arith.constant 0 : index
    %579 = vector.load %arg8[%c1_298, %c16_299, %c0_300] : memref<2x32x32xbf16, #tpu.memory_space<vmem>>, vector<1x8x32xbf16>
    %580 = vector.shape_cast %579 : vector<1x8x32xbf16> to vector<8x32xbf16>
    %cst_301 = arith.constant dense<0.000000e+00> : vector<16x32xf32>
    %581 = tpu.matmul %578, %580, %cst_301 {dimension_numbers = #tpu.dot_dimension_numbers<[1], [0], [0], [1], [0, 0, 1, 1], [], []>} : vector<16x8xbf16>, vector<8x32xbf16>, vector<16x32xf32> -> vector<16x32xf32>
    %582 = arith.addf %558, %581 : vector<16x32xf32>
    %583 = vector.extract_strided_slice %507 {offsets = [0, 24], sizes = [16, 8], strides = [1, 1]} : vector<16x32xbf16> to vector<16x8xbf16>
    %584 = vector.extract_strided_slice %508 {offsets = [0, 24], sizes = [16, 8], strides = [1, 1]} : vector<16x32xbf16> to vector<16x8xbf16>
    %cst_302 = arith.constant dense<0.000000e+00> : vector<16x16xf32>
    %585 = tpu.matmul %583, %584, %cst_302 {dimension_numbers = #tpu.dot_dimension_numbers<[1], [1], [0], [0], [0, 0, 1, 0], [], []>} : vector<16x8xbf16>, vector<16x8xbf16>, vector<16x16xf32> -> vector<16x16xf32>
    %cst_303 = arith.constant 0.353553385 : f32
    %586 = vector.broadcast %cst_303 : f32 to vector<16x16xf32>
    %587 = arith.mulf %585, %586 : vector<16x16xf32>
    %588 = arith.addf %587, %129 : vector<16x16xf32>
    %cst_304 = arith.constant dense<0xFF800000> : vector<16xf32>
    %589 = vector.multi_reduction <maximumf>, %588, %cst_304 [1] : vector<16x16xf32> to vector<16xf32>
    %590 = vector.shape_cast %589 : vector<16xf32> to vector<16x1xf32>
    %591 = vector.broadcast %590 : vector<16x1xf32> to vector<16x16xf32>
    %592 = arith.subf %588, %591 : vector<16x16xf32>
    %593 = math.exp %592 : vector<16x16xf32>
    %cst_305 = arith.constant dense<0.000000e+00> : vector<16xf32>
    %594 = vector.multi_reduction <add>, %593, %cst_305 [1] : vector<16x16xf32> to vector<16xf32>
    %595 = vector.shape_cast %594 : vector<16xf32> to vector<16x1xf32>
    %596 = tpu.reciprocal %595 {approx = true} : vector<16x1xf32> -> vector<16x1xf32>
    %597 = vector.broadcast %596 : vector<16x1xf32> to vector<16x16xf32>
    %598 = arith.mulf %593, %597 : vector<16x16xf32>
    %599 = arith.truncf %598 : vector<16x16xf32> to vector<16x16xbf16>
    %600 = vector.extract_strided_slice %509 {offsets = [0, 24], sizes = [16, 8], strides = [1, 1]} : vector<16x32xbf16> to vector<16x8xbf16>
    %cst_306 = arith.constant dense<0.000000e+00> : vector<16x8xf32>
    %601 = tpu.matmul %599, %600, %cst_306 {dimension_numbers = #tpu.dot_dimension_numbers<[1], [0], [0], [1], [0, 0, 1, 1], [], []>} : vector<16x16xbf16>, vector<16x8xbf16>, vector<16x8xf32> -> vector<16x8xf32>
    %602 = arith.truncf %601 : vector<16x8xf32> to vector<16x8xbf16>
    %c1_307 = arith.constant 1 : index
    %c24_308 = arith.constant 24 : index
    %c0_309 = arith.constant 0 : index
    %603 = vector.load %arg8[%c1_307, %c24_308, %c0_309] : memref<2x32x32xbf16, #tpu.memory_space<vmem>>, vector<1x8x32xbf16>
    %604 = vector.shape_cast %603 : vector<1x8x32xbf16> to vector<8x32xbf16>
    %cst_310 = arith.constant dense<0.000000e+00> : vector<16x32xf32>
    %605 = tpu.matmul %602, %604, %cst_310 {dimension_numbers = #tpu.dot_dimension_numbers<[1], [0], [0], [1], [0, 0, 1, 1], [], []>} : vector<16x8xbf16>, vector<8x32xbf16>, vector<16x32xf32> -> vector<16x32xf32>
    %606 = arith.addf %582, %605 : vector<16x32xf32>
    %607 = arith.addf %485, %606 : vector<16x32xf32>
    %c1_311 = arith.constant 1 : index
    %c8_312 = arith.constant 8 : index
    %c0_313 = arith.constant 0 : index
    %608 = vector.load %arg15[%c1_311, %c8_312, %c0_313] : memref<2x16x32xf32, #tpu.memory_space<vmem>>, vector<1x1x32xf32>
    %609 = vector.shape_cast %608 : vector<1x1x32xf32> to vector<1x32xf32>
    %c1_314 = arith.constant 1 : index
    %c9_315 = arith.constant 9 : index
    %c0_316 = arith.constant 0 : index
    %610 = vector.load %arg15[%c1_314, %c9_315, %c0_316] : memref<2x16x32xf32, #tpu.memory_space<vmem>>, vector<1x1x32xf32>
    %611 = vector.shape_cast %610 : vector<1x1x32xf32> to vector<1x32xf32>
    %cst_317 = arith.constant dense<0.000000e+00> : vector<16xf32>
    %612 = vector.multi_reduction <add>, %607, %cst_317 [1] : vector<16x32xf32> to vector<16xf32>
    %613 = vector.shape_cast %612 : vector<16xf32> to vector<16x1xf32>
    %cst_318 = arith.constant 3.200000e+01 : f32
    %614 = vector.broadcast %cst_318 : f32 to vector<16x1xf32>
    %615 = arith.divf %613, %614 : vector<16x1xf32>
    %616 = vector.broadcast %615 : vector<16x1xf32> to vector<16x32xf32>
    %617 = arith.subf %607, %616 : vector<16x32xf32>
    %618 = arith.mulf %617, %617 : vector<16x32xf32>
    %cst_319 = arith.constant dense<0.000000e+00> : vector<16xf32>
    %619 = vector.multi_reduction <add>, %618, %cst_319 [1] : vector<16x32xf32> to vector<16xf32>
    %620 = vector.shape_cast %619 : vector<16xf32> to vector<16x1xf32>
    %cst_320 = arith.constant 3.200000e+01 : f32
    %621 = vector.broadcast %cst_320 : f32 to vector<16x1xf32>
    %622 = arith.divf %620, %621 : vector<16x1xf32>
    %623 = vector.broadcast %615 : vector<16x1xf32> to vector<16x32xf32>
    %624 = arith.subf %607, %623 : vector<16x32xf32>
    %cst_321 = arith.constant 9.99999974E-6 : f32
    %625 = vector.broadcast %cst_321 : f32 to vector<16x1xf32>
    %626 = arith.addf %622, %625 : vector<16x1xf32>
    %627 = math.rsqrt %626 : vector<16x1xf32>
    %628 = vector.broadcast %627 : vector<16x1xf32> to vector<16x32xf32>
    %629 = arith.mulf %624, %628 : vector<16x32xf32>
    %630 = vector.broadcast %609 : vector<1x32xf32> to vector<16x32xf32>
    %631 = arith.mulf %629, %630 : vector<16x32xf32>
    %632 = vector.broadcast %611 : vector<1x32xf32> to vector<16x32xf32>
    %633 = arith.addf %631, %632 : vector<16x32xf32>
    %634 = arith.truncf %633 : vector<16x32xf32> to vector<16x32xbf16>
    %c1_322 = arith.constant 1 : index
    %c0_323 = arith.constant 0 : index
    %c0_324 = arith.constant 0 : index
    %635 = vector.load %arg9[%c1_322, %c0_323, %c0_324] : memref<2x32x32xbf16, #tpu.memory_space<vmem>>, vector<1x32x32xbf16>
    %636 = vector.shape_cast %635 : vector<1x32x32xbf16> to vector<32x32xbf16>
    %cst_325 = arith.constant dense<0.000000e+00> : vector<16x32xf32>
    %637 = tpu.matmul %634, %636, %cst_325 {dimension_numbers = #tpu.dot_dimension_numbers<[1], [0], [0], [1], [0, 0, 1, 1], [], []>} : vector<16x32xbf16>, vector<32x32xbf16>, vector<16x32xf32> -> vector<16x32xf32>
    %c1_326 = arith.constant 1 : index
    %c4_327 = arith.constant 4 : index
    %c0_328 = arith.constant 0 : index
    %638 = vector.load %arg15[%c1_326, %c4_327, %c0_328] : memref<2x16x32xf32, #tpu.memory_space<vmem>>, vector<1x1x32xf32>
    %639 = vector.shape_cast %638 : vector<1x1x32xf32> to vector<1x32xf32>
    %640 = vector.broadcast %639 : vector<1x32xf32> to vector<16x32xf32>
    %641 = arith.addf %637, %640 : vector<16x32xf32>
    %642 = vector.extract_strided_slice %134 {offsets = [0, 64], sizes = [16, 32], strides = [1, 1]} : vector<16x128xf32> to vector<16x32xf32>
    %c1_329 = arith.constant 1 : index
    %c5_330 = arith.constant 5 : index
    %c0_331 = arith.constant 0 : index
    %643 = vector.load %arg15[%c1_329, %c5_330, %c0_331] : memref<2x16x32xf32, #tpu.memory_space<vmem>>, vector<1x1x32xf32>
    %644 = vector.shape_cast %643 : vector<1x1x32xf32> to vector<1x32xf32>
    %645 = vector.broadcast %644 : vector<1x32xf32> to vector<16x32xf32>
    %646 = arith.addf %642, %645 : vector<16x32xf32>
    %647 = vector.extract_strided_slice %134 {offsets = [0, 96], sizes = [16, 32], strides = [1, 1]} : vector<16x128xf32> to vector<16x32xf32>
    %c1_332 = arith.constant 1 : index
    %c6_333 = arith.constant 6 : index
    %c0_334 = arith.constant 0 : index
    %648 = vector.load %arg15[%c1_332, %c6_333, %c0_334] : memref<2x16x32xf32, #tpu.memory_space<vmem>>, vector<1x1x32xf32>
    %649 = vector.shape_cast %648 : vector<1x1x32xf32> to vector<1x32xf32>
    %650 = vector.broadcast %649 : vector<1x32xf32> to vector<16x32xf32>
    %651 = arith.addf %647, %650 : vector<16x32xf32>
    %c1_335 = arith.constant 1 : index
    %c7_336 = arith.constant 7 : index
    %c0_337 = arith.constant 0 : index
    %652 = vector.load %arg15[%c1_335, %c7_336, %c0_337] : memref<2x16x32xf32, #tpu.memory_space<vmem>>, vector<1x1x32xf32>
    %653 = vector.shape_cast %652 : vector<1x1x32xf32> to vector<1x32xf32>
    %654 = arith.truncf %641 : vector<16x32xf32> to vector<16x32xbf16>
    %655 = arith.truncf %646 : vector<16x32xf32> to vector<16x32xbf16>
    %656 = arith.truncf %651 : vector<16x32xf32> to vector<16x32xbf16>
    %657 = vector.extract_strided_slice %654 {offsets = [0, 0], sizes = [16, 8], strides = [1, 1]} : vector<16x32xbf16> to vector<16x8xbf16>
    %658 = vector.extract_strided_slice %655 {offsets = [0, 0], sizes = [16, 8], strides = [1, 1]} : vector<16x32xbf16> to vector<16x8xbf16>
    %cst_338 = arith.constant dense<0.000000e+00> : vector<16x16xf32>
    %659 = tpu.matmul %657, %658, %cst_338 {dimension_numbers = #tpu.dot_dimension_numbers<[1], [1], [0], [0], [0, 0, 1, 0], [], []>} : vector<16x8xbf16>, vector<16x8xbf16>, vector<16x16xf32> -> vector<16x16xf32>
    %cst_339 = arith.constant 0.353553385 : f32
    %660 = vector.broadcast %cst_339 : f32 to vector<16x16xf32>
    %661 = arith.mulf %659, %660 : vector<16x16xf32>
    %662 = arith.addf %661, %130 : vector<16x16xf32>
    %cst_340 = arith.constant dense<0xFF800000> : vector<16xf32>
    %663 = vector.multi_reduction <maximumf>, %662, %cst_340 [1] : vector<16x16xf32> to vector<16xf32>
    %664 = vector.shape_cast %663 : vector<16xf32> to vector<16x1xf32>
    %665 = vector.broadcast %664 : vector<16x1xf32> to vector<16x16xf32>
    %666 = arith.subf %662, %665 : vector<16x16xf32>
    %667 = math.exp %666 : vector<16x16xf32>
    %cst_341 = arith.constant dense<0.000000e+00> : vector<16xf32>
    %668 = vector.multi_reduction <add>, %667, %cst_341 [1] : vector<16x16xf32> to vector<16xf32>
    %669 = vector.shape_cast %668 : vector<16xf32> to vector<16x1xf32>
    %670 = tpu.reciprocal %669 {approx = true} : vector<16x1xf32> -> vector<16x1xf32>
    %671 = vector.broadcast %670 : vector<16x1xf32> to vector<16x16xf32>
    %672 = arith.mulf %667, %671 : vector<16x16xf32>
    %673 = arith.truncf %672 : vector<16x16xf32> to vector<16x16xbf16>
    %674 = vector.extract_strided_slice %656 {offsets = [0, 0], sizes = [16, 8], strides = [1, 1]} : vector<16x32xbf16> to vector<16x8xbf16>
    %cst_342 = arith.constant dense<0.000000e+00> : vector<16x8xf32>
    %675 = tpu.matmul %673, %674, %cst_342 {dimension_numbers = #tpu.dot_dimension_numbers<[1], [0], [0], [1], [0, 0, 1, 1], [], []>} : vector<16x16xbf16>, vector<16x8xbf16>, vector<16x8xf32> -> vector<16x8xf32>
    %676 = arith.truncf %675 : vector<16x8xf32> to vector<16x8xbf16>
    %c1_343 = arith.constant 1 : index
    %c0_344 = arith.constant 0 : index
    %c0_345 = arith.constant 0 : index
    %677 = vector.load %arg11[%c1_343, %c0_344, %c0_345] : memref<2x32x32xbf16, #tpu.memory_space<vmem>>, vector<1x8x32xbf16>
    %678 = vector.shape_cast %677 : vector<1x8x32xbf16> to vector<8x32xbf16>
    %cst_346 = arith.constant dense<0.000000e+00> : vector<16x32xf32>
    %679 = tpu.matmul %676, %678, %cst_346 {dimension_numbers = #tpu.dot_dimension_numbers<[1], [0], [0], [1], [0, 0, 1, 1], [], []>} : vector<16x8xbf16>, vector<8x32xbf16>, vector<16x32xf32> -> vector<16x32xf32>
    %680 = vector.broadcast %653 : vector<1x32xf32> to vector<16x32xf32>
    %681 = arith.addf %680, %679 : vector<16x32xf32>
    %682 = vector.extract_strided_slice %654 {offsets = [0, 8], sizes = [16, 8], strides = [1, 1]} : vector<16x32xbf16> to vector<16x8xbf16>
    %683 = vector.extract_strided_slice %655 {offsets = [0, 8], sizes = [16, 8], strides = [1, 1]} : vector<16x32xbf16> to vector<16x8xbf16>
    %cst_347 = arith.constant dense<0.000000e+00> : vector<16x16xf32>
    %684 = tpu.matmul %682, %683, %cst_347 {dimension_numbers = #tpu.dot_dimension_numbers<[1], [1], [0], [0], [0, 0, 1, 0], [], []>} : vector<16x8xbf16>, vector<16x8xbf16>, vector<16x16xf32> -> vector<16x16xf32>
    %cst_348 = arith.constant 0.353553385 : f32
    %685 = vector.broadcast %cst_348 : f32 to vector<16x16xf32>
    %686 = arith.mulf %684, %685 : vector<16x16xf32>
    %687 = arith.addf %686, %130 : vector<16x16xf32>
    %cst_349 = arith.constant dense<0xFF800000> : vector<16xf32>
    %688 = vector.multi_reduction <maximumf>, %687, %cst_349 [1] : vector<16x16xf32> to vector<16xf32>
    %689 = vector.shape_cast %688 : vector<16xf32> to vector<16x1xf32>
    %690 = vector.broadcast %689 : vector<16x1xf32> to vector<16x16xf32>
    %691 = arith.subf %687, %690 : vector<16x16xf32>
    %692 = math.exp %691 : vector<16x16xf32>
    %cst_350 = arith.constant dense<0.000000e+00> : vector<16xf32>
    %693 = vector.multi_reduction <add>, %692, %cst_350 [1] : vector<16x16xf32> to vector<16xf32>
    %694 = vector.shape_cast %693 : vector<16xf32> to vector<16x1xf32>
    %695 = tpu.reciprocal %694 {approx = true} : vector<16x1xf32> -> vector<16x1xf32>
    %696 = vector.broadcast %695 : vector<16x1xf32> to vector<16x16xf32>
    %697 = arith.mulf %692, %696 : vector<16x16xf32>
    %698 = arith.truncf %697 : vector<16x16xf32> to vector<16x16xbf16>
    %699 = vector.extract_strided_slice %656 {offsets = [0, 8], sizes = [16, 8], strides = [1, 1]} : vector<16x32xbf16> to vector<16x8xbf16>
    %cst_351 = arith.constant dense<0.000000e+00> : vector<16x8xf32>
    %700 = tpu.matmul %698, %699, %cst_351 {dimension_numbers = #tpu.dot_dimension_numbers<[1], [0], [0], [1], [0, 0, 1, 1], [], []>} : vector<16x16xbf16>, vector<16x8xbf16>, vector<16x8xf32> -> vector<16x8xf32>
    %701 = arith.truncf %700 : vector<16x8xf32> to vector<16x8xbf16>
    %c1_352 = arith.constant 1 : index
    %c8_353 = arith.constant 8 : index
    %c0_354 = arith.constant 0 : index
    %702 = vector.load %arg11[%c1_352, %c8_353, %c0_354] : memref<2x32x32xbf16, #tpu.memory_space<vmem>>, vector<1x8x32xbf16>
    %703 = vector.shape_cast %702 : vector<1x8x32xbf16> to vector<8x32xbf16>
    %cst_355 = arith.constant dense<0.000000e+00> : vector<16x32xf32>
    %704 = tpu.matmul %701, %703, %cst_355 {dimension_numbers = #tpu.dot_dimension_numbers<[1], [0], [0], [1], [0, 0, 1, 1], [], []>} : vector<16x8xbf16>, vector<8x32xbf16>, vector<16x32xf32> -> vector<16x32xf32>
    %705 = arith.addf %681, %704 : vector<16x32xf32>
    %706 = vector.extract_strided_slice %654 {offsets = [0, 16], sizes = [16, 8], strides = [1, 1]} : vector<16x32xbf16> to vector<16x8xbf16>
    %707 = vector.extract_strided_slice %655 {offsets = [0, 16], sizes = [16, 8], strides = [1, 1]} : vector<16x32xbf16> to vector<16x8xbf16>
    %cst_356 = arith.constant dense<0.000000e+00> : vector<16x16xf32>
    %708 = tpu.matmul %706, %707, %cst_356 {dimension_numbers = #tpu.dot_dimension_numbers<[1], [1], [0], [0], [0, 0, 1, 0], [], []>} : vector<16x8xbf16>, vector<16x8xbf16>, vector<16x16xf32> -> vector<16x16xf32>
    %cst_357 = arith.constant 0.353553385 : f32
    %709 = vector.broadcast %cst_357 : f32 to vector<16x16xf32>
    %710 = arith.mulf %708, %709 : vector<16x16xf32>
    %711 = arith.addf %710, %130 : vector<16x16xf32>
    %cst_358 = arith.constant dense<0xFF800000> : vector<16xf32>
    %712 = vector.multi_reduction <maximumf>, %711, %cst_358 [1] : vector<16x16xf32> to vector<16xf32>
    %713 = vector.shape_cast %712 : vector<16xf32> to vector<16x1xf32>
    %714 = vector.broadcast %713 : vector<16x1xf32> to vector<16x16xf32>
    %715 = arith.subf %711, %714 : vector<16x16xf32>
    %716 = math.exp %715 : vector<16x16xf32>
    %cst_359 = arith.constant dense<0.000000e+00> : vector<16xf32>
    %717 = vector.multi_reduction <add>, %716, %cst_359 [1] : vector<16x16xf32> to vector<16xf32>
    %718 = vector.shape_cast %717 : vector<16xf32> to vector<16x1xf32>
    %719 = tpu.reciprocal %718 {approx = true} : vector<16x1xf32> -> vector<16x1xf32>
    %720 = vector.broadcast %719 : vector<16x1xf32> to vector<16x16xf32>
    %721 = arith.mulf %716, %720 : vector<16x16xf32>
    %722 = arith.truncf %721 : vector<16x16xf32> to vector<16x16xbf16>
    %723 = vector.extract_strided_slice %656 {offsets = [0, 16], sizes = [16, 8], strides = [1, 1]} : vector<16x32xbf16> to vector<16x8xbf16>
    %cst_360 = arith.constant dense<0.000000e+00> : vector<16x8xf32>
    %724 = tpu.matmul %722, %723, %cst_360 {dimension_numbers = #tpu.dot_dimension_numbers<[1], [0], [0], [1], [0, 0, 1, 1], [], []>} : vector<16x16xbf16>, vector<16x8xbf16>, vector<16x8xf32> -> vector<16x8xf32>
    %725 = arith.truncf %724 : vector<16x8xf32> to vector<16x8xbf16>
    %c1_361 = arith.constant 1 : index
    %c16_362 = arith.constant 16 : index
    %c0_363 = arith.constant 0 : index
    %726 = vector.load %arg11[%c1_361, %c16_362, %c0_363] : memref<2x32x32xbf16, #tpu.memory_space<vmem>>, vector<1x8x32xbf16>
    %727 = vector.shape_cast %726 : vector<1x8x32xbf16> to vector<8x32xbf16>
    %cst_364 = arith.constant dense<0.000000e+00> : vector<16x32xf32>
    %728 = tpu.matmul %725, %727, %cst_364 {dimension_numbers = #tpu.dot_dimension_numbers<[1], [0], [0], [1], [0, 0, 1, 1], [], []>} : vector<16x8xbf16>, vector<8x32xbf16>, vector<16x32xf32> -> vector<16x32xf32>
    %729 = arith.addf %705, %728 : vector<16x32xf32>
    %730 = vector.extract_strided_slice %654 {offsets = [0, 24], sizes = [16, 8], strides = [1, 1]} : vector<16x32xbf16> to vector<16x8xbf16>
    %731 = vector.extract_strided_slice %655 {offsets = [0, 24], sizes = [16, 8], strides = [1, 1]} : vector<16x32xbf16> to vector<16x8xbf16>
    %cst_365 = arith.constant dense<0.000000e+00> : vector<16x16xf32>
    %732 = tpu.matmul %730, %731, %cst_365 {dimension_numbers = #tpu.dot_dimension_numbers<[1], [1], [0], [0], [0, 0, 1, 0], [], []>} : vector<16x8xbf16>, vector<16x8xbf16>, vector<16x16xf32> -> vector<16x16xf32>
    %cst_366 = arith.constant 0.353553385 : f32
    %733 = vector.broadcast %cst_366 : f32 to vector<16x16xf32>
    %734 = arith.mulf %732, %733 : vector<16x16xf32>
    %735 = arith.addf %734, %130 : vector<16x16xf32>
    %cst_367 = arith.constant dense<0xFF800000> : vector<16xf32>
    %736 = vector.multi_reduction <maximumf>, %735, %cst_367 [1] : vector<16x16xf32> to vector<16xf32>
    %737 = vector.shape_cast %736 : vector<16xf32> to vector<16x1xf32>
    %738 = vector.broadcast %737 : vector<16x1xf32> to vector<16x16xf32>
    %739 = arith.subf %735, %738 : vector<16x16xf32>
    %740 = math.exp %739 : vector<16x16xf32>
    %cst_368 = arith.constant dense<0.000000e+00> : vector<16xf32>
    %741 = vector.multi_reduction <add>, %740, %cst_368 [1] : vector<16x16xf32> to vector<16xf32>
    %742 = vector.shape_cast %741 : vector<16xf32> to vector<16x1xf32>
    %743 = tpu.reciprocal %742 {approx = true} : vector<16x1xf32> -> vector<16x1xf32>
    %744 = vector.broadcast %743 : vector<16x1xf32> to vector<16x16xf32>
    %745 = arith.mulf %740, %744 : vector<16x16xf32>
    %746 = arith.truncf %745 : vector<16x16xf32> to vector<16x16xbf16>
    %747 = vector.extract_strided_slice %656 {offsets = [0, 24], sizes = [16, 8], strides = [1, 1]} : vector<16x32xbf16> to vector<16x8xbf16>
    %cst_369 = arith.constant dense<0.000000e+00> : vector<16x8xf32>
    %748 = tpu.matmul %746, %747, %cst_369 {dimension_numbers = #tpu.dot_dimension_numbers<[1], [0], [0], [1], [0, 0, 1, 1], [], []>} : vector<16x16xbf16>, vector<16x8xbf16>, vector<16x8xf32> -> vector<16x8xf32>
    %749 = arith.truncf %748 : vector<16x8xf32> to vector<16x8xbf16>
    %c1_370 = arith.constant 1 : index
    %c24_371 = arith.constant 24 : index
    %c0_372 = arith.constant 0 : index
    %750 = vector.load %arg11[%c1_370, %c24_371, %c0_372] : memref<2x32x32xbf16, #tpu.memory_space<vmem>>, vector<1x8x32xbf16>
    %751 = vector.shape_cast %750 : vector<1x8x32xbf16> to vector<8x32xbf16>
    %cst_373 = arith.constant dense<0.000000e+00> : vector<16x32xf32>
    %752 = tpu.matmul %749, %751, %cst_373 {dimension_numbers = #tpu.dot_dimension_numbers<[1], [0], [0], [1], [0, 0, 1, 1], [], []>} : vector<16x8xbf16>, vector<8x32xbf16>, vector<16x32xf32> -> vector<16x32xf32>
    %753 = arith.addf %729, %752 : vector<16x32xf32>
    %754 = arith.addf %633, %753 : vector<16x32xf32>
    %c1_374 = arith.constant 1 : index
    %c10_375 = arith.constant 10 : index
    %c0_376 = arith.constant 0 : index
    %755 = vector.load %arg15[%c1_374, %c10_375, %c0_376] : memref<2x16x32xf32, #tpu.memory_space<vmem>>, vector<1x1x32xf32>
    %756 = vector.shape_cast %755 : vector<1x1x32xf32> to vector<1x32xf32>
    %c1_377 = arith.constant 1 : index
    %c11_378 = arith.constant 11 : index
    %c0_379 = arith.constant 0 : index
    %757 = vector.load %arg15[%c1_377, %c11_378, %c0_379] : memref<2x16x32xf32, #tpu.memory_space<vmem>>, vector<1x1x32xf32>
    %758 = vector.shape_cast %757 : vector<1x1x32xf32> to vector<1x32xf32>
    %cst_380 = arith.constant dense<0.000000e+00> : vector<16xf32>
    %759 = vector.multi_reduction <add>, %754, %cst_380 [1] : vector<16x32xf32> to vector<16xf32>
    %760 = vector.shape_cast %759 : vector<16xf32> to vector<16x1xf32>
    %cst_381 = arith.constant 3.200000e+01 : f32
    %761 = vector.broadcast %cst_381 : f32 to vector<16x1xf32>
    %762 = arith.divf %760, %761 : vector<16x1xf32>
    %763 = vector.broadcast %762 : vector<16x1xf32> to vector<16x32xf32>
    %764 = arith.subf %754, %763 : vector<16x32xf32>
    %765 = arith.mulf %764, %764 : vector<16x32xf32>
    %cst_382 = arith.constant dense<0.000000e+00> : vector<16xf32>
    %766 = vector.multi_reduction <add>, %765, %cst_382 [1] : vector<16x32xf32> to vector<16xf32>
    %767 = vector.shape_cast %766 : vector<16xf32> to vector<16x1xf32>
    %cst_383 = arith.constant 3.200000e+01 : f32
    %768 = vector.broadcast %cst_383 : f32 to vector<16x1xf32>
    %769 = arith.divf %767, %768 : vector<16x1xf32>
    %770 = vector.broadcast %762 : vector<16x1xf32> to vector<16x32xf32>
    %771 = arith.subf %754, %770 : vector<16x32xf32>
    %cst_384 = arith.constant 9.99999974E-6 : f32
    %772 = vector.broadcast %cst_384 : f32 to vector<16x1xf32>
    %773 = arith.addf %769, %772 : vector<16x1xf32>
    %774 = math.rsqrt %773 : vector<16x1xf32>
    %775 = vector.broadcast %774 : vector<16x1xf32> to vector<16x32xf32>
    %776 = arith.mulf %771, %775 : vector<16x32xf32>
    %777 = vector.broadcast %756 : vector<1x32xf32> to vector<16x32xf32>
    %778 = arith.mulf %776, %777 : vector<16x32xf32>
    %779 = vector.broadcast %758 : vector<1x32xf32> to vector<16x32xf32>
    %780 = arith.addf %778, %779 : vector<16x32xf32>
    %781 = arith.truncf %780 : vector<16x32xf32> to vector<16x32xbf16>
    %c1_385 = arith.constant 1 : index
    %c0_386 = arith.constant 0 : index
    %c0_387 = arith.constant 0 : index
    %782 = vector.load %arg12[%c1_385, %c0_386, %c0_387] : memref<2x32x128xbf16, #tpu.memory_space<vmem>>, vector<1x32x128xbf16>
    %783 = vector.shape_cast %782 : vector<1x32x128xbf16> to vector<32x128xbf16>
    %cst_388 = arith.constant dense<0.000000e+00> : vector<16x128xf32>
    %784 = tpu.matmul %781, %783, %cst_388 {dimension_numbers = #tpu.dot_dimension_numbers<[1], [0], [0], [1], [0, 0, 1, 1], [], []>} : vector<16x32xbf16>, vector<32x128xbf16>, vector<16x128xf32> -> vector<16x128xf32>
    %c1_389 = arith.constant 1 : index
    %c0_390 = arith.constant 0 : index
    %c0_391 = arith.constant 0 : index
    %785 = vector.load %arg13[%c1_389, %c0_390, %c0_391] : memref<2x1x128xf32, #tpu.memory_space<vmem>>, vector<1x1x128xf32>
    %786 = vector.shape_cast %785 : vector<1x1x128xf32> to vector<1x128xf32>
    %787 = vector.broadcast %786 : vector<1x128xf32> to vector<16x128xf32>
    %788 = arith.addf %784, %787 : vector<16x128xf32>
    %789 = arith.mulf %788, %788 : vector<16x128xf32>
    %790 = arith.mulf %788, %789 : vector<16x128xf32>
    %cst_392 = arith.constant 4.471500e-02 : f32
    %791 = vector.broadcast %cst_392 : f32 to vector<16x128xf32>
    %792 = arith.mulf %791, %790 : vector<16x128xf32>
    %793 = arith.addf %788, %792 : vector<16x128xf32>
    %cst_393 = arith.constant 0.797884583 : f32
    %794 = vector.broadcast %cst_393 : f32 to vector<16x128xf32>
    %795 = arith.mulf %794, %793 : vector<16x128xf32>
    %796 = math.tanh %795 : vector<16x128xf32>
    %cst_394 = arith.constant 1.000000e+00 : f32
    %797 = vector.broadcast %cst_394 : f32 to vector<16x128xf32>
    %798 = arith.addf %797, %796 : vector<16x128xf32>
    %cst_395 = arith.constant 5.000000e-01 : f32
    %799 = vector.broadcast %cst_395 : f32 to vector<16x128xf32>
    %800 = arith.mulf %799, %798 : vector<16x128xf32>
    %801 = arith.mulf %788, %800 : vector<16x128xf32>
    %802 = arith.truncf %801 : vector<16x128xf32> to vector<16x128xbf16>
    %c1_396 = arith.constant 1 : index
    %c0_397 = arith.constant 0 : index
    %c0_398 = arith.constant 0 : index
    %803 = vector.load %arg14[%c1_396, %c0_397, %c0_398] : memref<2x128x32xbf16, #tpu.memory_space<vmem>>, vector<1x128x32xbf16>
    %804 = vector.shape_cast %803 : vector<1x128x32xbf16> to vector<128x32xbf16>
    %cst_399 = arith.constant dense<0.000000e+00> : vector<16x32xf32>
    %805 = tpu.matmul %802, %804, %cst_399 {dimension_numbers = #tpu.dot_dimension_numbers<[1], [0], [0], [1], [0, 0, 1, 1], [], []>} : vector<16x128xbf16>, vector<128x32xbf16>, vector<16x32xf32> -> vector<16x32xf32>
    %c1_400 = arith.constant 1 : index
    %c14_401 = arith.constant 14 : index
    %c0_402 = arith.constant 0 : index
    %806 = vector.load %arg15[%c1_400, %c14_401, %c0_402] : memref<2x16x32xf32, #tpu.memory_space<vmem>>, vector<1x1x32xf32>
    %807 = vector.shape_cast %806 : vector<1x1x32xf32> to vector<1x32xf32>
    %808 = vector.broadcast %807 : vector<1x32xf32> to vector<16x32xf32>
    %809 = arith.addf %805, %808 : vector<16x32xf32>
    %810 = arith.addf %780, %809 : vector<16x32xf32>
    %c1_403 = arith.constant 1 : index
    %c12_404 = arith.constant 12 : index
    %c0_405 = arith.constant 0 : index
    %811 = vector.load %arg15[%c1_403, %c12_404, %c0_405] : memref<2x16x32xf32, #tpu.memory_space<vmem>>, vector<1x1x32xf32>
    %812 = vector.shape_cast %811 : vector<1x1x32xf32> to vector<1x32xf32>
    %c1_406 = arith.constant 1 : index
    %c13_407 = arith.constant 13 : index
    %c0_408 = arith.constant 0 : index
    %813 = vector.load %arg15[%c1_406, %c13_407, %c0_408] : memref<2x16x32xf32, #tpu.memory_space<vmem>>, vector<1x1x32xf32>
    %814 = vector.shape_cast %813 : vector<1x1x32xf32> to vector<1x32xf32>
    %cst_409 = arith.constant dense<0.000000e+00> : vector<16xf32>
    %815 = vector.multi_reduction <add>, %810, %cst_409 [1] : vector<16x32xf32> to vector<16xf32>
    %816 = vector.shape_cast %815 : vector<16xf32> to vector<16x1xf32>
    %cst_410 = arith.constant 3.200000e+01 : f32
    %817 = vector.broadcast %cst_410 : f32 to vector<16x1xf32>
    %818 = arith.divf %816, %817 : vector<16x1xf32>
    %819 = vector.broadcast %818 : vector<16x1xf32> to vector<16x32xf32>
    %820 = arith.subf %810, %819 : vector<16x32xf32>
    %821 = arith.mulf %820, %820 : vector<16x32xf32>
    %cst_411 = arith.constant dense<0.000000e+00> : vector<16xf32>
    %822 = vector.multi_reduction <add>, %821, %cst_411 [1] : vector<16x32xf32> to vector<16xf32>
    %823 = vector.shape_cast %822 : vector<16xf32> to vector<16x1xf32>
    %cst_412 = arith.constant 3.200000e+01 : f32
    %824 = vector.broadcast %cst_412 : f32 to vector<16x1xf32>
    %825 = arith.divf %823, %824 : vector<16x1xf32>
    %826 = vector.broadcast %818 : vector<16x1xf32> to vector<16x32xf32>
    %827 = arith.subf %810, %826 : vector<16x32xf32>
    %cst_413 = arith.constant 9.99999974E-6 : f32
    %828 = vector.broadcast %cst_413 : f32 to vector<16x1xf32>
    %829 = arith.addf %825, %828 : vector<16x1xf32>
    %830 = math.rsqrt %829 : vector<16x1xf32>
    %831 = vector.broadcast %830 : vector<16x1xf32> to vector<16x32xf32>
    %832 = arith.mulf %827, %831 : vector<16x32xf32>
    %833 = vector.broadcast %812 : vector<1x32xf32> to vector<16x32xf32>
    %834 = arith.mulf %832, %833 : vector<16x32xf32>
    %835 = vector.broadcast %814 : vector<1x32xf32> to vector<16x32xf32>
    %836 = arith.addf %834, %835 : vector<16x32xf32>
    %c0_414 = arith.constant 0 : index
    %c0_415 = arith.constant 0 : index
    %837 = vector.load %arg16[%c0_414, %c0_415] : memref<16x32xf32, #tpu.memory_space<vmem>>, vector<16x32xf32>
    tpu.vector_store %arg16[%c0_414, %c0_415], %836 {strides = array<i32>} : memref<16x32xf32, #tpu.memory_space<vmem>>, vector<16x32xf32>,
    return
  }
  func.func @transform_0(%arg0: i32, %arg1: memref<16xi32, #tpu.memory_space<smem>>) -> (i32, i32) {
    %c0_i32 = arith.constant 0 : i32
    %c0_i32_0 = arith.constant 0 : i32
    %c0_i32_1 = arith.constant 0 : i32
    return %c0_i32, %c0_i32_0 : i32, i32
  }
  func.func @transform_1(%arg0: i32, %arg1: memref<16xi32, #tpu.memory_space<smem>>) -> (i32, i32) {
    %c0_i32 = arith.constant 0 : i32
    %c0_i32_0 = arith.constant 0 : i32
    %c0_i32_1 = arith.constant 0 : i32
    return %c0_i32, %c0_i32_0 : i32, i32
  }
  func.func @transform_2(%arg0: i32, %arg1: memref<16xi32, #tpu.memory_space<smem>>) -> (i32, i32) {
    %c0_i32 = arith.constant 0 : i32
    %c0_i32_0 = arith.constant 0 : i32
    %c0_i32_1 = arith.constant 0 : i32
    return %c0_i32, %c0_i32_0 : i32, i32
  }
  func.func @transform_3(%arg0: i32, %arg1: memref<16xi32, #tpu.memory_space<smem>>) -> (i32, i32) {
    %c0_i32 = arith.constant 0 : i32
    %c0_i32_0 = arith.constant 0 : i32
    %c0_i32_1 = arith.constant 0 : i32
    return %c0_i32, %c0_i32_0 : i32, i32
  }
  func.func @transform_4(%arg0: i32, %arg1: memref<16xi32, #tpu.memory_space<smem>>) -> (i32, i32) {
    %c0_i32 = arith.constant 0 : i32
    %c0_i32_0 = arith.constant 0 : i32
    %c0_i32_1 = arith.constant 0 : i32
    return %c0_i32, %c0_i32_0 : i32, i32
  }
  func.func @transform_5(%arg0: i32, %arg1: memref<16xi32, #tpu.memory_space<smem>>) -> (i32, i32, i32) {
    %c0_i32 = arith.constant 0 : i32
    %c0_i32_0 = arith.constant 0 : i32
    %c0_i32_1 = arith.constant 0 : i32
    %c0_i32_2 = arith.constant 0 : i32
    return %c0_i32, %c0_i32_0, %c0_i32_1 : i32, i32, i32
  }
  func.func @transform_6(%arg0: i32, %arg1: memref<16xi32, #tpu.memory_space<smem>>) -> (i32, i32, i32) {
    %c0_i32 = arith.constant 0 : i32
    %c0_i32_0 = arith.constant 0 : i32
    %c0_i32_1 = arith.constant 0 : i32
    %c0_i32_2 = arith.constant 0 : i32
    return %c0_i32, %c0_i32_0, %c0_i32_1 : i32, i32, i32
  }
  func.func @transform_7(%arg0: i32, %arg1: memref<16xi32, #tpu.memory_space<smem>>) -> (i32, i32, i32) {
    %c0_i32 = arith.constant 0 : i32
    %c0_i32_0 = arith.constant 0 : i32
    %c0_i32_1 = arith.constant 0 : i32
    %c0_i32_2 = arith.constant 0 : i32
    return %c0_i32, %c0_i32_0, %c0_i32_1 : i32, i32, i32
  }
  func.func @transform_8(%arg0: i32, %arg1: memref<16xi32, #tpu.memory_space<smem>>) -> (i32, i32) {
    %c0_i32 = arith.constant 0 : i32
    %c0_i32_0 = arith.constant 0 : i32
    %c0_i32_1 = arith.constant 0 : i32
    return %c0_i32, %c0_i32_0 : i32, i32
  }
  func.func @transform_9(%arg0: i32, %arg1: memref<16xi32, #tpu.memory_space<smem>>) -> (i32, i32, i32) {
    %c0_i32 = arith.constant 0 : i32
    %c0_i32_0 = arith.constant 0 : i32
    %c0_i32_1 = arith.constant 0 : i32
    %c0_i32_2 = arith.constant 0 : i32
    return %c0_i32, %c0_i32_0, %c0_i32_1 : i32, i32, i32
  }
  func.func @transform_10(%arg0: i32, %arg1: memref<16xi32, #tpu.memory_space<smem>>) -> (i32, i32, i32) {
    %c0_i32 = arith.constant 0 : i32
    %c0_i32_0 = arith.constant 0 : i32
    %c0_i32_1 = arith.constant 0 : i32
    %c0_i32_2 = arith.constant 0 : i32
    return %c0_i32, %c0_i32_0, %c0_i32_1 : i32, i32, i32
  }
  func.func @transform_11(%arg0: i32, %arg1: memref<16xi32, #tpu.memory_space<smem>>) -> (i32, i32, i32) {
    %c0_i32 = arith.constant 0 : i32
    %c0_i32_0 = arith.constant 0 : i32
    %c0_i32_1 = arith.constant 0 : i32
    %c0_i32_2 = arith.constant 0 : i32
    return %c0_i32, %c0_i32_0, %c0_i32_1 : i32, i32, i32
  }
  func.func @transform_12(%arg0: i32, %arg1: memref<16xi32, #tpu.memory_space<smem>>) -> (i32, i32, i32) {
    %c0_i32 = arith.constant 0 : i32
    %c0_i32_0 = arith.constant 0 : i32
    %c0_i32_1 = arith.constant 0 : i32
    %c0_i32_2 = arith.constant 0 : i32
    return %c0_i32, %c0_i32_0, %c0_i32_1 : i32, i32, i32
  }
  func.func @transform_13(%arg0: i32, %arg1: memref<16xi32, #tpu.memory_space<smem>>) -> (i32, i32, i32) {
    %c0_i32 = arith.constant 0 : i32
    %c0_i32_0 = arith.constant 0 : i32
    %c0_i32_1 = arith.constant 0 : i32
    %c0_i32_2 = arith.constant 0 : i32
    return %c0_i32, %c0_i32_0, %c0_i32_1 : i32, i32, i32
  }
  func.func @transform_14(%arg0: i32, %arg1: memref<16xi32, #tpu.memory_space<smem>>) -> (i32, i32) {
    %c0_i32 = arith.constant 0 : i32
    %c0_i32_0 = arith.constant 0 : i32
    %c0_i32_1 = arith.constant 0 : i32
    return %c0_i32, %c0_i32_0 : i32, i32
  }
}

</mosaic_0001>

<llo_original>
// kernel: bart_decoder.1
$region0: #{bart_decoder.1}
  #allocation0 [shape = 'u32[]', space=smem, size = 0x4, offset = 0x4, fixed_abs, tag = 'smem constant byte address 0x4 - core index']
  #allocation1 [shape = 'u32[144,128]{1,0:T(1,128)}', space=vmem, size = 0x12000, scoped, tag = 'internal scratch']
  #allocation2 [shape = 'f32[16,32]{1,0:T(8,128)}', space=vmem, size = 0x2000, scoped, tag = 'scratch operand']
  #allocation3 [shape = 's32[1]{0}', space=sflag, size = 0x4, scoped, tag = 'scoped memory for bart_decoder.1']
  #allocation4 [shape = 'u8[512]{0}', space=smem, size = 0x200, scoped, tag = 'prefetched SMEM operand 0']
  %s0 = inlined_call_operand.vmem [shape: s32[16], index: 0, kind: input, shape index: {}]
  %s1 = inlined_call_operand.vmem [shape: f32[8,32], index: 1, kind: input, shape index: {}]
  %s2 = inlined_call_operand.vmem [shape: f32[16,32], index: 2, kind: input, shape index: {}]
  %s3 = inlined_call_operand.vmem [shape: f32[16,16], index: 3, kind: input, shape index: {}]
  %s4 = inlined_call_operand.vmem [shape: f32[16,16], index: 4, kind: input, shape index: {}]
  %s5 = inlined_call_operand.vmem [shape: f32[50,32], index: 5, kind: input, shape index: {}]
  %s6 = inlined_call_operand.vmem [shape: bf16[2,32,96], index: 6, kind: input, shape index: {}]
  %s7 = inlined_call_operand.vmem [shape: bf16[2,32,32], index: 7, kind: input, shape index: {}]
  %s8 = inlined_call_operand.vmem [shape: bf16[2,32,32], index: 8, kind: input, shape index: {}]
  %s9 = inlined_call_operand.vmem [shape: bf16[32,128], index: 9, kind: input, shape index: {}]
  %s10 = inlined_call_operand.vmem [shape: bf16[2,32,32], index: 10, kind: input, shape index: {}]
  %s11 = inlined_call_operand.vmem [shape: bf16[2,32,128], index: 11, kind: input, shape index: {}]
  %s12 = inlined_call_operand.vmem [shape: f32[2,1,128], index: 12, kind: input, shape index: {}]
  %s13 = inlined_call_operand.vmem [shape: bf16[2,128,32], index: 13, kind: input, shape index: {}]
  %s14 = inlined_call_operand.vmem [shape: f32[2,16,32], index: 14, kind: input, shape index: {}]
  %s15 = inlined_call_operand.hbm [shape: f32[16,32], index: 15, kind: output, shape index: {}]
  %s16 = sld [smem:[#allocation0]]
  $region66: #{bart_decoder.1} parent=0
    _
  %s18 = ssub.s32 1, %s16
  %s19 = scalar_select 0, %s18, %s16
  %s20 = sshll.u32 %s0, 4
  %s21 = int_to_ptr.vmem [resolvable:$true] %s20
  %23 = dma.vmem_to_smem %s21, 16, [#allocation4], [#allocation3]
  %24 = dma.done [#allocation3], 16
  %25 = sfence
  $region1: #{bart_decoder.1} parent=0
    #allocation5 [shape = 'u8[8192]{0}', space=vmem, size = 0x2000, scoped, tag = 'output window, operand 0, single buffered']
    #allocation6 [shape = 's32[1]{0}', space=sflag, size = 0x4, scoped, tag = 'scoped memory for bart_decoder.1']
    %26 = vsyncpa [#allocation6], 0
    // Predicated region
    $region2: #{bart_decoder.1} parent=1 // pred_check
      _
    $region3: #{bart_decoder.1} parent=1 // pred_check_branch
      %28 = sbr.rel (0) target = $region5
    $region4: #{bart_decoder.1} parent=1 // pred_region
      _
    $region5: #{bart_decoder.1} parent=1 // pred_fallthru
      _
    // Predicated region
    $region6: #{bart_decoder.1} parent=1 // pred_check
      _
    $region7: #{bart_decoder.1} parent=1 // pred_check_branch
      %30 = sbr.rel (0) target = $region9
    $region8: #{bart_decoder.1} parent=1 // pred_region
      _
    $region9: #{bart_decoder.1} parent=1 // pred_fallthru
      _
    // Predicated region
    $region10: #{bart_decoder.1} parent=1 // pred_check
      _
    $region11: #{bart_decoder.1} parent=1 // pred_check_branch
      %32 = sbr.rel (0) target = $region13
    $region12: #{bart_decoder.1} parent=1 // pred_region
      _
    $region13: #{bart_decoder.1} parent=1 // pred_fallthru
      _
    // Predicated region
    $region14: #{bart_decoder.1} parent=1 // pred_check
      _
    $region15: #{bart_decoder.1} parent=1 // pred_check_branch
      %34 = sbr.rel (0) target = $region17
    $region16: #{bart_decoder.1} parent=1 // pred_region
      _
    $region17: #{bart_decoder.1} parent=1 // pred_fallthru
      _
    // Predicated region
    $region18: #{bart_decoder.1} parent=1 // pred_check
      _
    $region19: #{bart_decoder.1} parent=1 // pred_check_branch
      %36 = sbr.rel (0) target = $region21
    $region20: #{bart_decoder.1} parent=1 // pred_region
      _
    $region21: #{bart_decoder.1} parent=1 // pred_fallthru
      _
    // Predicated region
    $region22: #{bart_decoder.1} parent=1 // pred_check
      _
    $region23: #{bart_decoder.1} parent=1 // pred_check_branch
      %38 = sbr.rel (0) target = $region25
    $region24: #{bart_decoder.1} parent=1 // pred_region
      _
    $region25: #{bart_decoder.1} parent=1 // pred_fallthru
      _
    // Predicated region
    $region26: #{bart_decoder.1} parent=1 // pred_check
      _
    $region27: #{bart_decoder.1} parent=1 // pred_check_branch
      %40 = sbr.rel (0) target = $region29
    $region28: #{bart_decoder.1} parent=1 // pred_region
      _
    $region29: #{bart_decoder.1} parent=1 // pred_fallthru
      _
    // Predicated region
    $region30: #{bart_decoder.1} parent=1 // pred_check
      _
    $region31: #{bart_decoder.1} parent=1 // pred_check_branch
      %42 = sbr.rel (0) target = $region33
    $region32: #{bart_decoder.1} parent=1 // pred_region
      _
    $region33: #{bart_decoder.1} parent=1 // pred_fallthru
      _
    // Predicated region
    $region34: #{bart_decoder.1} parent=1 // pred_check
      _
    $region35: #{bart_decoder.1} parent=1 // pred_check_branch
      %44 = sbr.rel (0) target = $region37
    $region36: #{bart_decoder.1} parent=1 // pred_region
      _
    $region37: #{bart_decoder.1} parent=1 // pred_fallthru
      _
    // Predicated region
    $region38: #{bart_decoder.1} parent=1 // pred_check
      _
    $region39: #{bart_decoder.1} parent=1 // pred_check_branch
      %46 = sbr.rel (0) target = $region41
    $region40: #{bart_decoder.1} parent=1 // pred_region
      _
    $region41: #{bart_decoder.1} parent=1 // pred_fallthru
      _
    // Predicated region
    $region42: #{bart_decoder.1} parent=1 // pred_check
      _
    $region43: #{bart_decoder.1} parent=1 // pred_check_branch
      %48 = sbr.rel (0) target = $region45
    $region44: #{bart_decoder.1} parent=1 // pred_region
      _
    $region45: #{bart_decoder.1} parent=1 // pred_fallthru
      _
    // Predicated region
    $region46: #{bart_decoder.1} parent=1 // pred_check
      _
    $region47: #{bart_decoder.1} parent=1 // pred_check_branch
      %50 = sbr.rel (0) target = $region49
    $region48: #{bart_decoder.1} parent=1 // pred_region
      _
    $region49: #{bart_decoder.1} parent=1 // pred_fallthru
      _
    // Predicated region
    $region50: #{bart_decoder.1} parent=1 // pred_check
      _
    $region51: #{bart_decoder.1} parent=1 // pred_check_branch
      %52 = sbr.rel (0) target = $region53
    $region52: #{bart_decoder.1} parent=1 // pred_region
      _
    $region53: #{bart_decoder.1} parent=1 // pred_fallthru
      _
    // Predicated region
    $region54: #{bart_decoder.1} parent=1 // pred_check
      _
    $region55: #{bart_decoder.1} parent=1 // pred_check_branch
      %54 = sbr.rel (0) target = $region57
    $region56: #{bart_decoder.1} parent=1 // pred_region
      _
    $region57: #{bart_decoder.1} parent=1 // pred_fallthru
      _
    %s56 = sld [smem:[#allocation4]]
    %s57 = scalar_lea.vmem %s5, %s56
    %v58 = vld [vmem:[%s57] sm:$0x1]
    %v59 = vmul.f32 %v58, 5.656854
    %v60 = vld [vmem:[%s1] sm:$0x1]
    %v61 = vadd.f32 %v59, %v60
    %vm62 = vcmask 253952
    %63 = vst.msk [vmem:[#allocation2] sm:$0x1] %vm62, %v61
    %s64 = sld [smem:[#allocation4 + $0x1]]
    %s65 = scalar_lea.vmem %s5, %s64
    %v66 = vld [vmem:[%s65] sm:$0x1]
    %v67 = vmul.f32 %v66, 5.656854
    %v68 = vld [vmem:[%s1 + $0x1] sm:$0x1]
    %v69 = vadd.f32 %v67, %v68
    %70 = vst.msk [vmem:[#allocation2 + $0x1] sm:$0x1] %vm62, %v69
    %s71 = sld [smem:[#allocation4 + $0x2]]
    %s72 = scalar_lea.vmem %s5, %s71
    %v73 = vld [vmem:[%s72] sm:$0x1]
    %v74 = vmul.f32 %v73, 5.656854
    %v75 = vld [vmem:[%s1 + $0x2] sm:$0x1]
    %v76 = vadd.f32 %v74, %v75
    %77 = vst.msk [vmem:[#allocation2 + $0x2] sm:$0x1] %vm62, %v76
    %s78 = sld [smem:[#allocation4 + $0x3]]
    %s79 = scalar_lea.vmem %s5, %s78
    %v80 = vld [vmem:[%s79] sm:$0x1]
    %v81 = vmul.f32 %v80, 5.656854
    %v82 = vld [vmem:[%s1 + $0x3] sm:$0x1]
    %v83 = vadd.f32 %v81, %v82
    %84 = vst.msk [vmem:[#allocation2 + $0x3] sm:$0x1] %vm62, %v83
    %s85 = sld [smem:[#allocation4 + $0x4]]
    %s86 = scalar_lea.vmem %s5, %s85
    %v87 = vld [vmem:[%s86] sm:$0x1]
    %v88 = vmul.f32 %v87, 5.656854
    %v89 = vld [vmem:[%s1 + $0x4] sm:$0x1]
    %v90 = vadd.f32 %v88, %v89
    %91 = vst.msk [vmem:[#allocation2 + $0x4] sm:$0x1] %vm62, %v90
    %s92 = sld [smem:[#allocation4 + $0x5]]
    %s93 = scalar_lea.vmem %s5, %s92
    %v94 = vld [vmem:[%s93] sm:$0x1]
    %v95 = vmul.f32 %v94, 5.656854
    %v96 = vld [vmem:[%s1 + $0x5] sm:$0x1]
    %v97 = vadd.f32 %v95, %v96
    %98 = vst.msk [vmem:[#allocation2 + $0x5] sm:$0x1] %vm62, %v97
    %s99 = sld [smem:[#allocation4 + $0x6]]
    %s100 = scalar_lea.vmem %s5, %s99
    %v101 = vld [vmem:[%s100] sm:$0x1]
    %v102 = vmul.f32 %v101, 5.656854
    %v103 = vld [vmem:[%s1 + $0x6] sm:$0x1]
    %v104 = vadd.f32 %v102, %v103
    %105 = vst.msk [vmem:[#allocation2 + $0x6] sm:$0x1] %vm62, %v104
    %s106 = sld [smem:[#allocation4 + $0x7]]
    %s107 = scalar_lea.vmem %s5, %s106
    %v108 = vld [vmem:[%s107] sm:$0x1]
    %v109 = vmul.f32 %v108, 5.656854
    %v110 = vld [vmem:[%s1 + $0x7] sm:$0x1]
    %v111 = vadd.f32 %v109, %v110
    %112 = vst.msk [vmem:[#allocation2 + $0x7] sm:$0x1] %vm62, %v111
    %s113 = sld [smem:[#allocation4 + $0x8]]
    %s114 = scalar_lea.vmem %s5, %s113
    %v115 = vld [vmem:[%s114] sm:$0x1]
    %v116 = vmul.f32 %v115, 5.656854
    %v117 = vld [vmem:[%s1] sm:$0x1]
    %v118 = vadd.f32 %v116, %v117
    %119 = vst.msk [vmem:[#allocation2 + $0x8] sm:$0x1] %vm62, %v118
    %s120 = sld [smem:[#allocation4 + $0x9]]
    %s121 = scalar_lea.vmem %s5, %s120
    %v122 = vld [vmem:[%s121] sm:$0x1]
    %v123 = vmul.f32 %v122, 5.656854
    %v124 = vld [vmem:[%s1 + $0x1] sm:$0x1]
    %v125 = vadd.f32 %v123, %v124
    %126 = vst.msk [vmem:[#allocation2 + $0x9] sm:$0x1] %vm62, %v125
    %s127 = sld [smem:[#allocation4 + $0xa]]
    %s128 = scalar_lea.vmem %s5, %s127
    %v129 = vld [vmem:[%s128] sm:$0x1]
    %v130 = vmul.f32 %v129, 5.656854
    %v131 = vld [vmem:[%s1 + $0x2] sm:$0x1]
    %v132 = vadd.f32 %v130, %v131
    %133 = vst.msk [vmem:[#allocation2 + $0xa] sm:$0x1] %vm62, %v132
    %s134 = sld [smem:[#allocation4 + $0xb]]
    %s135 = scalar_lea.vmem %s5, %s134
    %v136 = vld [vmem:[%s135] sm:$0x1]
    %v137 = vmul.f32 %v136, 5.656854
    %v138 = vld [vmem:[%s1 + $0x3] sm:$0x1]
    %v139 = vadd.f32 %v137, %v138
    %140 = vst.msk [vmem:[#allocation2 + $0xb] sm:$0x1] %vm62, %v139
    %s141 = sld [smem:[#allocation4 + $0xc]]
    %s142 = scalar_lea.vmem %s5, %s141
    %v143 = vld [vmem:[%s142] sm:$0x1]
    %v144 = vmul.f32 %v143, 5.656854
    %v145 = vld [vmem:[%s1 + $0x4] sm:$0x1]
    %v146 = vadd.f32 %v144, %v145
    %147 = vst.msk [vmem:[#allocation2 + $0xc] sm:$0x1] %vm62, %v146
    %s148 = sld [smem:[#allocation4 + $0xd]]
    %s149 = scalar_lea.vmem %s5, %s148
    %v150 = vld [vmem:[%s149] sm:$0x1]
    %v151 = vmul.f32 %v150, 5.656854
    %v152 = vld [vmem:[%s1 + $0x5] sm:$0x1]
    %v153 = vadd.f32 %v151, %v152
    %154 = vst.msk [vmem:[#allocation2 + $0xd] sm:$0x1] %vm62, %v153
    %s155 = sld [smem:[#allocation4 + $0xe]]
    %s156 = scalar_lea.vmem %s5, %s155
    %v157 = vld [vmem:[%s156] sm:$0x1]
    %v158 = vmul.f32 %v157, 5.656854
    %v159 = vld [vmem:[%s1 + $0x6] sm:$0x1]
    %v160 = vadd.f32 %v158, %v159
    %161 = vst.msk [vmem:[#allocation2 + $0xe] sm:$0x1] %vm62, %v160
    %s162 = sld [smem:[#allocation4 + $0xf]]
    %s163 = scalar_lea.vmem %s5, %s162
    %v164 = vld [vmem:[%s163] sm:$0x1]
    %v165 = vmul.f32 %v164, 5.656854
    %v166 = vld [vmem:[%s1 + $0x7] sm:$0x1]
    %v167 = vadd.f32 %v165, %v166
    %168 = vst.msk [vmem:[#allocation2 + $0xf] sm:$0x1] %vm62, %v167
    %v169 = vld [vmem:[#allocation2] sm:$0xff]
    %v170 = vld [vmem:[#allocation2 + $0x8] sm:$0xff]
    %v171 = vld [vmem:[%s3] sm:$0xff]
    %v172 = vld [vmem:[%s3 + $0x8] sm:$0xff]
    %v173 = vld [vmem:[%s4] sm:$0xff]
    %v174 = vld [vmem:[%s4 + $0x8] sm:$0xff]
    %v175 = vld [vmem:[%s2] sm:$0xff]
    %v176 = vld [vmem:[%s2 + $0x8] sm:$0xff]
    %v177 = vpack.c.bf16 %v176, %v175
    %v178 = vld [vmem:[%s9] sm:$0xf]
    %v179 = vld [vmem:[%s9 + $0x4] sm:$0xf]
    %v180 = vld [vmem:[%s9 + $0x8] sm:$0xf]
    %v181 = vld [vmem:[%s9 + $0xc] sm:$0xf]
    %v186 = vunpack.c.l.b16 %v178
    %v187 = vunpack.c.l.b16 %v179
    %v188 = vunpack.c.l.b16 %v180
    %v189 = vunpack.c.l.b16 %v181
    %v190 = vpack.c.b16 %v187, %v186
    %v191 = vpack.c.b16 %v189, %v188
    %vm194 = vcmask 261120
    %v196 = vsel %vm194, %v177, 0
    %198 = vmatprep.subr.bf16.mxu0 0
    %199 = vmatpush1.bf16.msra.mxu0 %v190
    %200 = vmatprep.subr.bf16.mxu0 0
    %201 = vmatpush1.bf16.msra.mxu0 %v191
    %202 = vmatprep.subr.bf16.mxu0 0
    %203 = vmatpush1.bf16.msra.mxu0 0
    %204 = vmatprep.subr.bf16.mxu0 0
    %205 = vmatpush1.bf16.msra.mxu0 0
    %206 = vmatprep.subr.bf16.mxu0 0
    %207 = vmatpush1.bf16.msra.mxu0 0
    %208 = vmatprep.subr.bf16.mxu0 0
    %209 = vmatpush1.bf16.msra.mxu0 0
    %210 = vmatprep.subr.bf16.mxu0 0
    %211 = vmatpush1.bf16.msra.mxu0 0
    %212 = vmatprep.subr.bf16.mxu0 0
    %213 = vmatpush1.bf16.msra.mxu0 0
    %214 = vmatprep.subr.bf16.mxu0 0
    %215 = vmatpush1.bf16.msra.mxu0 0
    %216 = vmatprep.subr.bf16.mxu0 0
    %217 = vmatpush1.bf16.msra.mxu0 0
    %218 = vmatprep.subr.bf16.mxu0 0
    %219 = vmatpush1.bf16.msra.mxu0 0
    %220 = vmatprep.subr.bf16.mxu0 0
    %221 = vmatpush1.bf16.msra.mxu0 0
    %222 = vmatprep.subr.bf16.mxu0 0
    %223 = vmatpush1.bf16.msra.mxu0 0
    %224 = vmatprep.subr.bf16.mxu0 0
    %225 = vmatpush1.bf16.msra.mxu0 0
    %226 = vmatprep.subr.bf16.mxu0 0
    %227 = vmatpush1.bf16.msra.mxu0 0
    %228 = vmatprep.subr.bf16.mxu0 0
    %229 = vmatpush1.bf16.msra.mxu0 0
    %230 = vmatprep.mubr.bf16.mxu0 0
    %231 = vmatmul.mubr.bf16.gmra.mrb[0].mxu0 %v196
    %v232 = vpop.f32.mrb[0].mxu0
    %v233 = vadd.f32 0.0, %v232
    %v234 = vpop.f32.mrb[0].mxu0
    %v235 = vpop.f32.mrb[0].mxu0
    %v236 = vadd.f32 0.0, %v235
    %v237 = vpop.f32.mrb[0].mxu0
    %238 = vdwg.mxu0
    %v239 = vpack.c.bf16 %v170, %v169
    %v240 = vld [vmem:[%s6] sm:$0xf]
    %v241 = vld [vmem:[%s6 + $0x4] sm:$0xf]
    %v242 = vld [vmem:[%s6 + $0x8] sm:$0xf]
    %v243 = vld [vmem:[%s6 + $0xc] sm:$0xf]
    %v248 = vunpack.c.l.b16 %v240
    %v249 = vunpack.c.l.b16 %v241
    %v250 = vunpack.c.l.b16 %v242
    %v251 = vunpack.c.l.b16 %v243
    %v252 = vpack.c.b16 %v249, %v248
    %v253 = vpack.c.b16 %v251, %v250
    %v257 = vsel %vm194, %v239, 0
    %259 = vmatprep.subr.bf16.mxu0 0
    %260 = vmatpush1.bf16.msra.mxu0 %v252
    %261 = vmatprep.subr.bf16.mxu0 0
    %262 = vmatpush1.bf16.msra.mxu0 %v253
    %263 = vmatprep.subr.bf16.mxu0 0
    %264 = vmatpush1.bf16.msra.mxu0 0
    %265 = vmatprep.subr.bf16.mxu0 0
    %266 = vmatpush1.bf16.msra.mxu0 0
    %267 = vmatprep.subr.bf16.mxu0 0
    %268 = vmatpush1.bf16.msra.mxu0 0
    %269 = vmatprep.subr.bf16.mxu0 0
    %270 = vmatpush1.bf16.msra.mxu0 0
    %271 = vmatprep.subr.bf16.mxu0 0
    %272 = vmatpush1.bf16.msra.mxu0 0
    %273 = vmatprep.subr.bf16.mxu0 0
    %274 = vmatpush1.bf16.msra.mxu0 0
    %275 = vmatprep.subr.bf16.mxu0 0
    %276 = vmatpush1.bf16.msra.mxu0 0
    %277 = vmatprep.subr.bf16.mxu0 0
    %278 = vmatpush1.bf16.msra.mxu0 0
    %279 = vmatprep.subr.bf16.mxu0 0
    %280 = vmatpush1.bf16.msra.mxu0 0
    %281 = vmatprep.subr.bf16.mxu0 0
    %282 = vmatpush1.bf16.msra.mxu0 0
    %283 = vmatprep.subr.bf16.mxu0 0
    %284 = vmatpush1.bf16.msra.mxu0 0
    %285 = vmatprep.subr.bf16.mxu0 0
    %286 = vmatpush1.bf16.msra.mxu0 0
    %287 = vmatprep.subr.bf16.mxu0 0
    %288 = vmatpush1.bf16.msra.mxu0 0
    %289 = vmatprep.subr.bf16.mxu0 0
    %290 = vmatpush1.bf16.msra.mxu0 0
    %291 = vmatprep.mubr.bf16.mxu0 0
    %292 = vmatmul.mubr.bf16.gmra.mrb[0].mxu0 %v257
    %v293 = vpop.f32.mrb[0].mxu0
    %v294 = vadd.f32 0.0, %v293
    %v295 = vpop.f32.mrb[0].mxu0
    %v296 = vpop.f32.mrb[0].mxu0
    %v297 = vadd.f32 0.0, %v296
    %v298 = vpop.f32.mrb[0].mxu0
    %299 = vdwg.mxu0
    %v300 = vld [vmem:[%s14] sm:$0x1]
    %v301 = vlaneseq
    %v302 = vshrl.u32 %v301, 7
    %v303 = vsub.s32 0, %v302
    %v304 = vrot.slane %v300, %v303
    %v305 = vadd.f32 %v294, %v304
    %v306 = vadd.f32 %v297, %v304
    %v307 = vld [vmem:[%s14 + $0x1] sm:$0x1]
    %v308 = vlaneseq
    %v309 = vshrl.u32 %v308, 7
    %v310 = vsub.s32 0, %v309
    %v311 = vrot.slane %v307, %v310
    %313 = vrot.lane.b32.xlu0 %v311, 32
    %v314 = vpop.permute.xlu0 %313
    %v316 = vadd.f32 %v294, %v314
    %v317 = vadd.f32 %v297, %v314
    %v318 = vld [vmem:[%s14 + $0x2] sm:$0x1]
    %v319 = vlaneseq
    %v320 = vshrl.u32 %v319, 7
    %v321 = vsub.s32 0, %v320
    %v322 = vrot.slane %v318, %v321
    %324 = vrot.lane.b32.xlu0 %v322, 64
    %v325 = vpop.permute.xlu0 %324
    %v327 = vadd.f32 %v294, %v325
    %v328 = vadd.f32 %v297, %v325
    %v329 = vld [vmem:[%s14 + $0x3] sm:$0x1]
    %v330 = vpack.c.bf16 %v306, %v305
    %v331 = vpack.c.bf16 %v317, %v316
    %v332 = vpack.c.bf16 %v328, %v327
    %334 = vrot.lane.b32.xlu0 %v331, 96
    %v335 = vpop.permute.xlu0 %334
    %vm336 = vcmask 64512
    %v338 = vsel %vm336, %v330, 0
    %v341 = vsel %vm336, %v335, 0
    %343 = vmatprep.subr.bf16.mxu0 0
    %344 = vmatpush1.bf16.xpose.msra.mxu0 %v341
    %345 = vmatprep.subr.bf16.mxu0 0
    %346 = vmatpush1.bf16.xpose.msra.mxu0 0
    %347 = vmatprep.subr.bf16.mxu0 0
    %348 = vmatpush1.bf16.xpose.msra.mxu0 0
    %349 = vmatprep.subr.bf16.mxu0 0
    %350 = vmatpush1.bf16.xpose.msra.mxu0 0
    %351 = vmatprep.subr.bf16.mxu0 0
    %352 = vmatpush1.bf16.xpose.msra.mxu0 0
    %353 = vmatprep.subr.bf16.mxu0 0
    %354 = vmatpush1.bf16.xpose.msra.mxu0 0
    %355 = vmatprep.subr.bf16.mxu0 0
    %356 = vmatpush1.bf16.xpose.msra.mxu0 0
    %357 = vmatprep.subr.bf16.mxu0 0
    %358 = vmatpush1.bf16.xpose.msra.mxu0 0
    %359 = vmatprep.subr.bf16.mxu0 0
    %360 = vmatpush1.bf16.xpose.msra.mxu0 0
    %361 = vmatprep.subr.bf16.mxu0 0
    %362 = vmatpush1.bf16.xpose.msra.mxu0 0
    %363 = vmatprep.subr.bf16.mxu0 0
    %364 = vmatpush1.bf16.xpose.msra.mxu0 0
    %365 = vmatprep.subr.bf16.mxu0 0
    %366 = vmatpush1.bf16.xpose.msra.mxu0 0
    %367 = vmatprep.subr.bf16.mxu0 0
    %368 = vmatpush1.bf16.xpose.msra.mxu0 0
    %369 = vmatprep.subr.bf16.mxu0 0
    %370 = vmatpush1.bf16.xpose.msra.mxu0 0
    %371 = vmatprep.subr.bf16.mxu0 0
    %372 = vmatpush1.bf16.xpose.msra.mxu0 0
    %373 = vmatprep.subr.bf16.mxu0 0
    %374 = vmatpush1.bf16.xpose.msra.mxu0 0
    %375 = vmatprep.mubr.bf16.mxu0 0
    %376 = vmatmul.mubr.bf16.gmra.mrb[0].mxu0 %v338
    %v377 = vpop.f32.mrb[0].mxu0
    %v378 = vadd.f32 0.0, %v377
    %v379 = vpop.f32.mrb[0].mxu0
    %v380 = vpop.f32.mrb[0].mxu0
    %v381 = vadd.f32 0.0, %v380
    %v382 = vpop.f32.mrb[0].mxu0
    %383 = vdwg.mxu0
    %v384 = vmul.f32 %v378, 0.35355338
    %v385 = vmul.f32 %v381, 0.35355338
    %v386 = vadd.f32 %v384, %v171
    %v387 = vadd.f32 %v385, %v172
    %vm388 = vcmask 130048
    %v389 = vsel %vm388, %v386, -inf
    %390 = vmax.xlane.f32.xlu0 %v389
    %v391 = vpop.xlane.xlu0 %390
    %v392 = vsel %vm388, %v387, -inf
    %393 = vmax.xlane.f32.xlu0 %v392
    %v394 = vpop.xlane.xlu0 %393
    %v395 = vsub.f32 %v386, %v391
    %v396 = vsub.f32 %v387, %v394
    %v397 = vmul.f32 %v395, 1.442695
    %v398 = vpow.pop %v397
    %v399 = vmul.f32 %v396, 1.442695
    %v400 = vpow.pop %v399
    %v401 = vsel %vm388, %v398, 0.0
    %402 = vadd.xlane.f32.xlu0 %v401
    %v403 = vpop.xlane.xlu0 %402
    %v404 = vsel %vm388, %v400, 0.0
    %405 = vadd.xlane.f32.xlu0 %v404
    %v406 = vpop.xlane.xlu0 %405
    %v407 = vrcp.pop %v403
    %v408 = vrcp.pop %v406
    %v409 = vmul.f32 %v398, %v407
    %v410 = vmul.f32 %v400, %v408
    %v411 = vpack.c.bf16 %v410, %v409
    %413 = vrot.lane.b32.xlu0 %v332, 64
    %v414 = vpop.permute.xlu0 %413
    %v417 = vsel %vm388, %v411, 0
    %419 = vmatprep.subr.bf16.mxu0 0
    %420 = vmatpush1.bf16.msra.mxu0 %v414
    %421 = vmatprep.subr.bf16.mxu0 0
    %422 = vmatpush1.bf16.msra.mxu0 0
    %423 = vmatprep.subr.bf16.mxu0 0
    %424 = vmatpush1.bf16.msra.mxu0 0
    %425 = vmatprep.subr.bf16.mxu0 0
    %426 = vmatpush1.bf16.msra.mxu0 0
    %427 = vmatprep.subr.bf16.mxu0 0
    %428 = vmatpush1.bf16.msra.mxu0 0
    %429 = vmatprep.subr.bf16.mxu0 0
    %430 = vmatpush1.bf16.msra.mxu0 0
    %431 = vmatprep.subr.bf16.mxu0 0
    %432 = vmatpush1.bf16.msra.mxu0 0
    %433 = vmatprep.subr.bf16.mxu0 0
    %434 = vmatpush1.bf16.msra.mxu0 0
    %435 = vmatprep.subr.bf16.mxu0 0
    %436 = vmatpush1.bf16.msra.mxu0 0
    %437 = vmatprep.subr.bf16.mxu0 0
    %438 = vmatpush1.bf16.msra.mxu0 0
    %439 = vmatprep.subr.bf16.mxu0 0
    %440 = vmatpush1.bf16.msra.mxu0 0
    %441 = vmatprep.subr.bf16.mxu0 0
    %442 = vmatpush1.bf16.msra.mxu0 0
    %443 = vmatprep.subr.bf16.mxu0 0
    %444 = vmatpush1.bf16.msra.mxu0 0
    %445 = vmatprep.subr.bf16.mxu0 0
    %446 = vmatpush1.bf16.msra.mxu0 0
    %447 = vmatprep.subr.bf16.mxu0 0
    %448 = vmatpush1.bf16.msra.mxu0 0
    %449 = vmatprep.subr.bf16.mxu0 0
    %450 = vmatpush1.bf16.msra.mxu0 0
    %451 = vmatprep.mubr.bf16.mxu0 0
    %452 = vmatmul.mubr.bf16.gmra.mrb[0].mxu0 %v417
    %v453 = vpop.f32.mrb[0].mxu0
    %v454 = vadd.f32 0.0, %v453
    %v455 = vpop.f32.mrb[0].mxu0
    %v456 = vpop.f32.mrb[0].mxu0
    %v457 = vadd.f32 0.0, %v456
    %v458 = vpop.f32.mrb[0].mxu0
    %459 = vdwg.mxu0
    %v460 = vpack.c.bf16 %v457, %v454
    %v461 = vld [vmem:[%s7] sm:$0xf]
    %v463 = vsel %vm336, %v460, 0
    %vm465 = vcmask 1043456
    %v467 = vsel %vm465, %v461, 0
    %469 = vmatprep.subr.bf16.mxu0 0
    %470 = vmatpush1.bf16.msra.mxu0 %v467
    %471 = vmatprep.subr.bf16.mxu0 0
    %472 = vmatpush1.bf16.msra.mxu0 0
    %473 = vmatprep.subr.bf16.mxu0 0
    %474 = vmatpush1.bf16.msra.mxu0 0
    %475 = vmatprep.subr.bf16.mxu0 0
    %476 = vmatpush1.bf16.msra.mxu0 0
    %477 = vmatprep.subr.bf16.mxu0 0
    %478 = vmatpush1.bf16.msra.mxu0 0
    %479 = vmatprep.subr.bf16.mxu0 0
    %480 = vmatpush1.bf16.msra.mxu0 0
    %481 = vmatprep.subr.bf16.mxu0 0
    %482 = vmatpush1.bf16.msra.mxu0 0
    %483 = vmatprep.subr.bf16.mxu0 0
    %484 = vmatpush1.bf16.msra.mxu0 0
    %485 = vmatprep.subr.bf16.mxu0 0
    %486 = vmatpush1.bf16.msra.mxu0 0
    %487 = vmatprep.subr.bf16.mxu0 0
    %488 = vmatpush1.bf16.msra.mxu0 0
    %489 = vmatprep.subr.bf16.mxu0 0
    %490 = vmatpush1.bf16.msra.mxu0 0
    %491 = vmatprep.subr.bf16.mxu0 0
    %492 = vmatpush1.bf16.msra.mxu0 0
    %493 = vmatprep.subr.bf16.mxu0 0
    %494 = vmatpush1.bf16.msra.mxu0 0
    %495 = vmatprep.subr.bf16.mxu0 0
    %496 = vmatpush1.bf16.msra.mxu0 0
    %497 = vmatprep.subr.bf16.mxu0 0
    %498 = vmatpush1.bf16.msra.mxu0 0
    %499 = vmatprep.subr.bf16.mxu0 0
    %500 = vmatpush1.bf16.msra.mxu0 0
    %501 = vmatprep.mubr.bf16.mxu0 0
    %502 = vmatmul.mubr.bf16.gmra.mrb[0].mxu0 %v463
    %v503 = vpop.f32.mrb[0].mxu0
    %v504 = vadd.f32 0.0, %v503
    %v505 = vpop.f32.mrb[0].mxu0
    %v506 = vpop.f32.mrb[0].mxu0
    %v507 = vadd.f32 0.0, %v506
    %v508 = vpop.f32.mrb[0].mxu0
    %509 = vdwg.mxu0
    %v510 = vlaneseq
    %v511 = vshrl.u32 %v510, 7
    %v512 = vsub.s32 0, %v511
    %v513 = vrot.slane %v329, %v512
    %v514 = vadd.f32 %v513, %v504
    %v515 = vadd.f32 %v513, %v507
    %517 = vrot.lane.b32.xlu0 %v330, 120
    %v518 = vpop.permute.xlu0 %517
    %519 = vrot.lane.b32.xlu0 %v331, 88
    %v520 = vpop.permute.xlu0 %519
    %v522 = vsel %vm336, %v518, 0
    %v525 = vsel %vm336, %v520, 0
    %527 = vmatprep.subr.bf16.mxu0 0
    %528 = vmatpush1.bf16.xpose.msra.mxu0 %v525
    %529 = vmatprep.subr.bf16.mxu0 0
    %530 = vmatpush1.bf16.xpose.msra.mxu0 0
    %531 = vmatprep.subr.bf16.mxu0 0
    %532 = vmatpush1.bf16.xpose.msra.mxu0 0
    %533 = vmatprep.subr.bf16.mxu0 0
    %534 = vmatpush1.bf16.xpose.msra.mxu0 0
    %535 = vmatprep.subr.bf16.mxu0 0
    %536 = vmatpush1.bf16.xpose.msra.mxu0 0
    %537 = vmatprep.subr.bf16.mxu0 0
    %538 = vmatpush1.bf16.xpose.msra.mxu0 0
    %539 = vmatprep.subr.bf16.mxu0 0
    %540 = vmatpush1.bf16.xpose.msra.mxu0 0
    %541 = vmatprep.subr.bf16.mxu0 0
    %542 = vmatpush1.bf16.xpose.msra.mxu0 0
    %543 = vmatprep.subr.bf16.mxu0 0
    %544 = vmatpush1.bf16.xpose.msra.mxu0 0
    %545 = vmatprep.subr.bf16.mxu0 0
    %546 = vmatpush1.bf16.xpose.msra.mxu0 0
    %547 = vmatprep.subr.bf16.mxu0 0
    %548 = vmatpush1.bf16.xpose.msra.mxu0 0
    %549 = vmatprep.subr.bf16.mxu0 0
    %550 = vmatpush1.bf16.xpose.msra.mxu0 0
    %551 = vmatprep.subr.bf16.mxu0 0
    %552 = vmatpush1.bf16.xpose.msra.mxu0 0
    %553 = vmatprep.subr.bf16.mxu0 0
    %554 = vmatpush1.bf16.xpose.msra.mxu0 0
    %555 = vmatprep.subr.bf16.mxu0 0
    %556 = vmatpush1.bf16.xpose.msra.mxu0 0
    %557 = vmatprep.subr.bf16.mxu0 0
    %558 = vmatpush1.bf16.xpose.msra.mxu0 0
    %559 = vmatprep.mubr.bf16.mxu0 0
    %560 = vmatmul.mubr.bf16.gmra.mrb[0].mxu0 %v522
    %v561 = vpop.f32.mrb[0].mxu0
    %v562 = vadd.f32 0.0, %v561
    %v563 = vpop.f32.mrb[0].mxu0
    %v564 = vpop.f32.mrb[0].mxu0
    %v565 = vadd.f32 0.0, %v564
    %v566 = vpop.f32.mrb[0].mxu0
    %567 = vdwg.mxu0
    %v568 = vmul.f32 %v562, 0.35355338
    %v569 = vmul.f32 %v565, 0.35355338
    %v570 = vadd.f32 %v568, %v171
    %v571 = vadd.f32 %v569, %v172
    %v572 = vsel %vm388, %v570, -inf
    %573 = vmax.xlane.f32.xlu0 %v572
    %v574 = vpop.xlane.xlu0 %573
    %v575 = vsel %vm388, %v571, -inf
    %576 = vmax.xlane.f32.xlu0 %v575
    %v577 = vpop.xlane.xlu0 %576
    %v578 = vsub.f32 %v570, %v574
    %v579 = vsub.f32 %v571, %v577
    %v580 = vmul.f32 %v578, 1.442695
    %v581 = vpow.pop %v580
    %v582 = vmul.f32 %v579, 1.442695
    %v583 = vpow.pop %v582
    %v584 = vsel %vm388, %v581, 0.0
    %585 = vadd.xlane.f32.xlu0 %v584
    %v586 = vpop.xlane.xlu0 %585
    %v587 = vsel %vm388, %v583, 0.0
    %588 = vadd.xlane.f32.xlu0 %v587
    %v589 = vpop.xlane.xlu0 %588
    %v590 = vrcp.pop %v586
    %v591 = vrcp.pop %v589
    %v592 = vmul.f32 %v581, %v590
    %v593 = vmul.f32 %v583, %v591
    %v594 = vpack.c.bf16 %v593, %v592
    %595 = vrot.lane.b32.xlu0 %v332, 56
    %v596 = vpop.permute.xlu0 %595
    %v599 = vsel %vm388, %v594, 0
    %601 = vmatprep.subr.bf16.mxu0 0
    %602 = vmatpush1.bf16.msra.mxu0 %v596
    %603 = vmatprep.subr.bf16.mxu0 0
    %604 = vmatpush1.bf16.msra.mxu0 0
    %605 = vmatprep.subr.bf16.mxu0 0
    %606 = vmatpush1.bf16.msra.mxu0 0
    %607 = vmatprep.subr.bf16.mxu0 0
    %608 = vmatpush1.bf16.msra.mxu0 0
    %609 = vmatprep.subr.bf16.mxu0 0
    %610 = vmatpush1.bf16.msra.mxu0 0
    %611 = vmatprep.subr.bf16.mxu0 0
    %612 = vmatpush1.bf16.msra.mxu0 0
    %613 = vmatprep.subr.bf16.mxu0 0
    %614 = vmatpush1.bf16.msra.mxu0 0
    %615 = vmatprep.subr.bf16.mxu0 0
    %616 = vmatpush1.bf16.msra.mxu0 0
    %617 = vmatprep.subr.bf16.mxu0 0
    %618 = vmatpush1.bf16.msra.mxu0 0
    %619 = vmatprep.subr.bf16.mxu0 0
    %620 = vmatpush1.bf16.msra.mxu0 0
    %621 = vmatprep.subr.bf16.mxu0 0
    %622 = vmatpush1.bf16.msra.mxu0 0
    %623 = vmatprep.subr.bf16.mxu0 0
    %624 = vmatpush1.bf16.msra.mxu0 0
    %625 = vmatprep.subr.bf16.mxu0 0
    %626 = vmatpush1.bf16.msra.mxu0 0
    %627 = vmatprep.subr.bf16.mxu0 0
    %628 = vmatpush1.bf16.msra.mxu0 0
    %629 = vmatprep.subr.bf16.mxu0 0
    %630 = vmatpush1.bf16.msra.mxu0 0
    %631 = vmatprep.subr.bf16.mxu0 0
    %632 = vmatpush1.bf16.msra.mxu0 0
    %633 = vmatprep.mubr.bf16.mxu0 0
    %634 = vmatmul.mubr.bf16.gmra.mrb[0].mxu0 %v599
    %v635 = vpop.f32.mrb[0].mxu0
    %v636 = vadd.f32 0.0, %v635
    %v637 = vpop.f32.mrb[0].mxu0
    %v638 = vpop.f32.mrb[0].mxu0
    %v639 = vadd.f32 0.0, %v638
    %v640 = vpop.f32.mrb[0].mxu0
    %641 = vdwg.mxu0
    %v642 = vpack.c.bf16 %v639, %v636
    %v643 = vld [vmem:[%s7 + $0x4] sm:$0xf]
    %v645 = vsel %vm336, %v642, 0
    %v648 = vsel %vm465, %v643, 0
    %650 = vmatprep.subr.bf16.mxu0 0
    %651 = vmatpush1.bf16.msra.mxu0 %v648
    %652 = vmatprep.subr.bf16.mxu0 0
    %653 = vmatpush1.bf16.msra.mxu0 0
    %654 = vmatprep.subr.bf16.mxu0 0
    %655 = vmatpush1.bf16.msra.mxu0 0
    %656 = vmatprep.subr.bf16.mxu0 0
    %657 = vmatpush1.bf16.msra.mxu0 0
    %658 = vmatprep.subr.bf16.mxu0 0
    %659 = vmatpush1.bf16.msra.mxu0 0
    %660 = vmatprep.subr.bf16.mxu0 0
    %661 = vmatpush1.bf16.msra.mxu0 0
    %662 = vmatprep.subr.bf16.mxu0 0
    %663 = vmatpush1.bf16.msra.mxu0 0
    %664 = vmatprep.subr.bf16.mxu0 0
    %665 = vmatpush1.bf16.msra.mxu0 0
    %666 = vmatprep.subr.bf16.mxu0 0
    %667 = vmatpush1.bf16.msra.mxu0 0
    %668 = vmatprep.subr.bf16.mxu0 0
    %669 = vmatpush1.bf16.msra.mxu0 0
    %670 = vmatprep.subr.bf16.mxu0 0
    %671 = vmatpush1.bf16.msra.mxu0 0
    %672 = vmatprep.subr.bf16.mxu0 0
    %673 = vmatpush1.bf16.msra.mxu0 0
    %674 = vmatprep.subr.bf16.mxu0 0
    %675 = vmatpush1.bf16.msra.mxu0 0
    %676 = vmatprep.subr.bf16.mxu0 0
    %677 = vmatpush1.bf16.msra.mxu0 0
    %678 = vmatprep.subr.bf16.mxu0 0
    %679 = vmatpush1.bf16.msra.mxu0 0
    %680 = vmatprep.subr.bf16.mxu0 0
    %681 = vmatpush1.bf16.msra.mxu0 0
    %682 = vmatprep.mubr.bf16.mxu0 0
    %683 = vmatmul.mubr.bf16.gmra.mrb[0].mxu0 %v645
    %v684 = vpop.f32.mrb[0].mxu0
    %v685 = vadd.f32 0.0, %v684
    %v686 = vpop.f32.mrb[0].mxu0
    %v687 = vpop.f32.mrb[0].mxu0
    %v688 = vadd.f32 0.0, %v687
    %v689 = vpop.f32.mrb[0].mxu0
    %690 = vdwg.mxu0
    %v691 = vadd.f32 %v514, %v685
    %v692 = vadd.f32 %v515, %v688
    %693 = vrot.lane.b32.xlu0 %v330, 112
    %v694 = vpop.permute.xlu0 %693
    %695 = vrot.lane.b32.xlu0 %v331, 80
    %v696 = vpop.permute.xlu0 %695
    %v698 = vsel %vm336, %v694, 0
    %v701 = vsel %vm336, %v696, 0
    %703 = vmatprep.subr.bf16.mxu0 0
    %704 = vmatpush1.bf16.xpose.msra.mxu0 %v701
    %705 = vmatprep.subr.bf16.mxu0 0
    %706 = vmatpush1.bf16.xpose.msra.mxu0 0
    %707 = vmatprep.subr.bf16.mxu0 0
    %708 = vmatpush1.bf16.xpose.msra.mxu0 0
    %709 = vmatprep.subr.bf16.mxu0 0
    %710 = vmatpush1.bf16.xpose.msra.mxu0 0
    %711 = vmatprep.subr.bf16.mxu0 0
    %712 = vmatpush1.bf16.xpose.msra.mxu0 0
    %713 = vmatprep.subr.bf16.mxu0 0
    %714 = vmatpush1.bf16.xpose.msra.mxu0 0
    %715 = vmatprep.subr.bf16.mxu0 0
    %716 = vmatpush1.bf16.xpose.msra.mxu0 0
    %717 = vmatprep.subr.bf16.mxu0 0
    %718 = vmatpush1.bf16.xpose.msra.mxu0 0
    %719 = vmatprep.subr.bf16.mxu0 0
    %720 = vmatpush1.bf16.xpose.msra.mxu0 0
    %721 = vmatprep.subr.bf16.mxu0 0
    %722 = vmatpush1.bf16.xpose.msra.mxu0 0
    %723 = vmatprep.subr.bf16.mxu0 0
    %724 = vmatpush1.bf16.xpose.msra.mxu0 0
    %725 = vmatprep.subr.bf16.mxu0 0
    %726 = vmatpush1.bf16.xpose.msra.mxu0 0
    %727 = vmatprep.subr.bf16.mxu0 0
    %728 = vmatpush1.bf16.xpose.msra.mxu0 0
    %729 = vmatprep.subr.bf16.mxu0 0
    %730 = vmatpush1.bf16.xpose.msra.mxu0 0
    %731 = vmatprep.subr.bf16.mxu0 0
    %732 = vmatpush1.bf16.xpose.msra.mxu0 0
    %733 = vmatprep.subr.bf16.mxu0 0
    %734 = vmatpush1.bf16.xpose.msra.mxu0 0
    %735 = vmatprep.mubr.bf16.mxu0 0
    %736 = vmatmul.mubr.bf16.gmra.mrb[0].mxu0 %v698
    %v737 = vpop.f32.mrb[0].mxu0
    %v738 = vadd.f32 0.0, %v737
    %v739 = vpop.f32.mrb[0].mxu0
    %v740 = vpop.f32.mrb[0].mxu0
    %v741 = vadd.f32 0.0, %v740
    %v742 = vpop.f32.mrb[0].mxu0
    %743 = vdwg.mxu0
    %v744 = vmul.f32 %v738, 0.35355338
    %v745 = vmul.f32 %v741, 0.35355338
    %v746 = vadd.f32 %v744, %v171
    %v747 = vadd.f32 %v745, %v172
    %v748 = vsel %vm388, %v746, -inf
    %749 = vmax.xlane.f32.xlu0 %v748
    %v750 = vpop.xlane.xlu0 %749
    %v751 = vsel %vm388, %v747, -inf
    %752 = vmax.xlane.f32.xlu0 %v751
    %v753 = vpop.xlane.xlu0 %752
    %v754 = vsub.f32 %v746, %v750
    %v755 = vsub.f32 %v747, %v753
    %v756 = vmul.f32 %v754, 1.442695
    %v757 = vpow.pop %v756
    %v758 = vmul.f32 %v755, 1.442695
    %v759 = vpow.pop %v758
    %v760 = vsel %vm388, %v757, 0.0
    %761 = vadd.xlane.f32.xlu0 %v760
    %v762 = vpop.xlane.xlu0 %761
    %v763 = vsel %vm388, %v759, 0.0
    %764 = vadd.xlane.f32.xlu0 %v763
    %v765 = vpop.xlane.xlu0 %764
    %v766 = vrcp.pop %v762
    %v767 = vrcp.pop %v765
    %v768 = vmul.f32 %v757, %v766
    %v769 = vmul.f32 %v759, %v767
    %v770 = vpack.c.bf16 %v769, %v768
    %771 = vrot.lane.b32.xlu0 %v332, 48
    %v772 = vpop.permute.xlu0 %771
    %v775 = vsel %vm388, %v770, 0
    %777 = vmatprep.subr.bf16.mxu0 0
    %778 = vmatpush1.bf16.msra.mxu0 %v772
    %779 = vmatprep.subr.bf16.mxu0 0
    %780 = vmatpush1.bf16.msra.mxu0 0
    %781 = vmatprep.subr.bf16.mxu0 0
    %782 = vmatpush1.bf16.msra.mxu0 0
    %783 = vmatprep.subr.bf16.mxu0 0
    %784 = vmatpush1.bf16.msra.mxu0 0
    %785 = vmatprep.subr.bf16.mxu0 0
    %786 = vmatpush1.bf16.msra.mxu0 0
    %787 = vmatprep.subr.bf16.mxu0 0
    %788 = vmatpush1.bf16.msra.mxu0 0
    %789 = vmatprep.subr.bf16.mxu0 0
    %790 = vmatpush1.bf16.msra.mxu0 0
    %791 = vmatprep.subr.bf16.mxu0 0
    %792 = vmatpush1.bf16.msra.mxu0 0
    %793 = vmatprep.subr.bf16.mxu0 0
    %794 = vmatpush1.bf16.msra.mxu0 0
    %795 = vmatprep.subr.bf16.mxu0 0
    %796 = vmatpush1.bf16.msra.mxu0 0
    %797 = vmatprep.subr.bf16.mxu0 0
    %798 = vmatpush1.bf16.msra.mxu0 0
    %799 = vmatprep.subr.bf16.mxu0 0
    %800 = vmatpush1.bf16.msra.mxu0 0
    %801 = vmatprep.subr.bf16.mxu0 0
    %802 = vmatpush1.bf16.msra.mxu0 0
    %803 = vmatprep.subr.bf16.mxu0 0
    %804 = vmatpush1.bf16.msra.mxu0 0
    %805 = vmatprep.subr.bf16.mxu0 0
    %806 = vmatpush1.bf16.msra.mxu0 0
    %807 = vmatprep.subr.bf16.mxu0 0
    %808 = vmatpush1.bf16.msra.mxu0 0
    %809 = vmatprep.mubr.bf16.mxu0 0
    %810 = vmatmul.mubr.bf16.gmra.mrb[0].mxu0 %v775
    %v811 = vpop.f32.mrb[0].mxu0
    %v812 = vadd.f32 0.0, %v811
    %v813 = vpop.f32.mrb[0].mxu0
    %v814 = vpop.f32.mrb[0].mxu0
    %v815 = vadd.f32 0.0, %v814
    %v816 = vpop.f32.mrb[0].mxu0
    %817 = vdwg.mxu0
    %v818 = vpack.c.bf16 %v815, %v812
    %v819 = vld [vmem:[%s7 + $0x8] sm:$0xf]
    %v821 = vsel %vm336, %v818, 0
    %v824 = vsel %vm465, %v819, 0
    %826 = vmatprep.subr.bf16.mxu0 0
    %827 = vmatpush1.bf16.msra.mxu0 %v824
    %828 = vmatprep.subr.bf16.mxu0 0
    %829 = vmatpush1.bf16.msra.mxu0 0
    %830 = vmatprep.subr.bf16.mxu0 0
    %831 = vmatpush1.bf16.msra.mxu0 0
    %832 = vmatprep.subr.bf16.mxu0 0
    %833 = vmatpush1.bf16.msra.mxu0 0
    %834 = vmatprep.subr.bf16.mxu0 0
    %835 = vmatpush1.bf16.msra.mxu0 0
    %836 = vmatprep.subr.bf16.mxu0 0
    %837 = vmatpush1.bf16.msra.mxu0 0
    %838 = vmatprep.subr.bf16.mxu0 0
    %839 = vmatpush1.bf16.msra.mxu0 0
    %840 = vmatprep.subr.bf16.mxu0 0
    %841 = vmatpush1.bf16.msra.mxu0 0
    %842 = vmatprep.subr.bf16.mxu0 0
    %843 = vmatpush1.bf16.msra.mxu0 0
    %844 = vmatprep.subr.bf16.mxu0 0
    %845 = vmatpush1.bf16.msra.mxu0 0
    %846 = vmatprep.subr.bf16.mxu0 0
    %847 = vmatpush1.bf16.msra.mxu0 0
    %848 = vmatprep.subr.bf16.mxu0 0
    %849 = vmatpush1.bf16.msra.mxu0 0
    %850 = vmatprep.subr.bf16.mxu0 0
    %851 = vmatpush1.bf16.msra.mxu0 0
    %852 = vmatprep.subr.bf16.mxu0 0
    %853 = vmatpush1.bf16.msra.mxu0 0
    %854 = vmatprep.subr.bf16.mxu0 0
    %855 = vmatpush1.bf16.msra.mxu0 0
    %856 = vmatprep.subr.bf16.mxu0 0
    %857 = vmatpush1.bf16.msra.mxu0 0
    %858 = vmatprep.mubr.bf16.mxu0 0
    %859 = vmatmul.mubr.bf16.gmra.mrb[0].mxu0 %v821
    %v860 = vpop.f32.mrb[0].mxu0
    %v861 = vadd.f32 0.0, %v860
    %v862 = vpop.f32.mrb[0].mxu0
    %v863 = vpop.f32.mrb[0].mxu0
    %v864 = vadd.f32 0.0, %v863
    %v865 = vpop.f32.mrb[0].mxu0
    %866 = vdwg.mxu0
    %v867 = vadd.f32 %v691, %v861
    %v868 = vadd.f32 %v692, %v864
    %869 = vrot.lane.b32.xlu0 %v330, 104
    %v870 = vpop.permute.xlu0 %869
    %871 = vrot.lane.b32.xlu0 %v331, 72
    %v872 = vpop.permute.xlu0 %871
    %v874 = vsel %vm336, %v870, 0
    %v877 = vsel %vm336, %v872, 0
    %879 = vmatprep.subr.bf16.mxu0 0
    %880 = vmatpush1.bf16.xpose.msra.mxu0 %v877
    %881 = vmatprep.subr.bf16.mxu0 0
    %882 = vmatpush1.bf16.xpose.msra.mxu0 0
    %883 = vmatprep.subr.bf16.mxu0 0
    %884 = vmatpush1.bf16.xpose.msra.mxu0 0
    %885 = vmatprep.subr.bf16.mxu0 0
    %886 = vmatpush1.bf16.xpose.msra.mxu0 0
    %887 = vmatprep.subr.bf16.mxu0 0
    %888 = vmatpush1.bf16.xpose.msra.mxu0 0
    %889 = vmatprep.subr.bf16.mxu0 0
    %890 = vmatpush1.bf16.xpose.msra.mxu0 0
    %891 = vmatprep.subr.bf16.mxu0 0
    %892 = vmatpush1.bf16.xpose.msra.mxu0 0
    %893 = vmatprep.subr.bf16.mxu0 0
    %894 = vmatpush1.bf16.xpose.msra.mxu0 0
    %895 = vmatprep.subr.bf16.mxu0 0
    %896 = vmatpush1.bf16.xpose.msra.mxu0 0
    %897 = vmatprep.subr.bf16.mxu0 0
    %898 = vmatpush1.bf16.xpose.msra.mxu0 0
    %899 = vmatprep.subr.bf16.mxu0 0
    %900 = vmatpush1.bf16.xpose.msra.mxu0 0
    %901 = vmatprep.subr.bf16.mxu0 0
    %902 = vmatpush1.bf16.xpose.msra.mxu0 0
    %903 = vmatprep.subr.bf16.mxu0 0
    %904 = vmatpush1.bf16.xpose.msra.mxu0 0
    %905 = vmatprep.subr.bf16.mxu0 0
    %906 = vmatpush1.bf16.xpose.msra.mxu0 0
    %907 = vmatprep.subr.bf16.mxu0 0
    %908 = vmatpush1.bf16.xpose.msra.mxu0 0
    %909 = vmatprep.subr.bf16.mxu0 0
    %910 = vmatpush1.bf16.xpose.msra.mxu0 0
    %911 = vmatprep.mubr.bf16.mxu0 0
    %912 = vmatmul.mubr.bf16.gmra.mrb[0].mxu0 %v874
    %v913 = vpop.f32.mrb[0].mxu0
    %v914 = vadd.f32 0.0, %v913
    %v915 = vpop.f32.mrb[0].mxu0
    %v916 = vpop.f32.mrb[0].mxu0
    %v917 = vadd.f32 0.0, %v916
    %v918 = vpop.f32.mrb[0].mxu0
    %919 = vdwg.mxu0
    %v920 = vmul.f32 %v914, 0.35355338
    %v921 = vmul.f32 %v917, 0.35355338
    %v922 = vadd.f32 %v920, %v171
    %v923 = vadd.f32 %v921, %v172
    %v924 = vsel %vm388, %v922, -inf
    %925 = vmax.xlane.f32.xlu0 %v924
    %v926 = vpop.xlane.xlu0 %925
    %v927 = vsel %vm388, %v923, -inf
    %928 = vmax.xlane.f32.xlu0 %v927
    %v929 = vpop.xlane.xlu0 %928
    %v930 = vsub.f32 %v922, %v926
    %v931 = vsub.f32 %v923, %v929
    %v932 = vmul.f32 %v930, 1.442695
    %v933 = vpow.pop %v932
    %v934 = vmul.f32 %v931, 1.442695
    %v935 = vpow.pop %v934
    %v936 = vsel %vm388, %v933, 0.0
    %937 = vadd.xlane.f32.xlu0 %v936
    %v938 = vpop.xlane.xlu0 %937
    %v939 = vsel %vm388, %v935, 0.0
    %940 = vadd.xlane.f32.xlu0 %v939
    %v941 = vpop.xlane.xlu0 %940
    %v942 = vrcp.pop %v938
    %v943 = vrcp.pop %v941
    %v944 = vmul.f32 %v933, %v942
    %v945 = vmul.f32 %v935, %v943
    %v946 = vpack.c.bf16 %v945, %v944
    %947 = vrot.lane.b32.xlu0 %v332, 40
    %v948 = vpop.permute.xlu0 %947
    %v951 = vsel %vm388, %v946, 0
    %953 = vmatprep.subr.bf16.mxu0 0
    %954 = vmatpush1.bf16.msra.mxu0 %v948
    %955 = vmatprep.subr.bf16.mxu0 0
    %956 = vmatpush1.bf16.msra.mxu0 0
    %957 = vmatprep.subr.bf16.mxu0 0
    %958 = vmatpush1.bf16.msra.mxu0 0
    %959 = vmatprep.subr.bf16.mxu0 0
    %960 = vmatpush1.bf16.msra.mxu0 0
    %961 = vmatprep.subr.bf16.mxu0 0
    %962 = vmatpush1.bf16.msra.mxu0 0
    %963 = vmatprep.subr.bf16.mxu0 0
    %964 = vmatpush1.bf16.msra.mxu0 0
    %965 = vmatprep.subr.bf16.mxu0 0
    %966 = vmatpush1.bf16.msra.mxu0 0
    %967 = vmatprep.subr.bf16.mxu0 0
    %968 = vmatpush1.bf16.msra.mxu0 0
    %969 = vmatprep.subr.bf16.mxu0 0
    %970 = vmatpush1.bf16.msra.mxu0 0
    %971 = vmatprep.subr.bf16.mxu0 0
    %972 = vmatpush1.bf16.msra.mxu0 0
    %973 = vmatprep.subr.bf16.mxu0 0
    %974 = vmatpush1.bf16.msra.mxu0 0
    %975 = vmatprep.subr.bf16.mxu0 0
    %976 = vmatpush1.bf16.msra.mxu0 0
    %977 = vmatprep.subr.bf16.mxu0 0
    %978 = vmatpush1.bf16.msra.mxu0 0
    %979 = vmatprep.subr.bf16.mxu0 0
    %980 = vmatpush1.bf16.msra.mxu0 0
    %981 = vmatprep.subr.bf16.mxu0 0
    %982 = vmatpush1.bf16.msra.mxu0 0
    %983 = vmatprep.subr.bf16.mxu0 0
    %984 = vmatpush1.bf16.msra.mxu0 0
    %985 = vmatprep.mubr.bf16.mxu0 0
    %986 = vmatmul.mubr.bf16.gmra.mrb[0].mxu0 %v951
    %v987 = vpop.f32.mrb[0].mxu0
    %v988 = vadd.f32 0.0, %v987
    %v989 = vpop.f32.mrb[0].mxu0
    %v990 = vpop.f32.mrb[0].mxu0
    %v991 = vadd.f32 0.0, %v990
    %v992 = vpop.f32.mrb[0].mxu0
    %993 = vdwg.mxu0
    %v994 = vpack.c.bf16 %v991, %v988
    %v995 = vld [vmem:[%s7 + $0xc] sm:$0xf]
    %v997 = vsel %vm336, %v994, 0
    %v1000 = vsel %vm465, %v995, 0
    %1002 = vmatprep.subr.bf16.mxu0 0
    %1003 = vmatpush1.bf16.msra.mxu0 %v1000
    %1004 = vmatprep.subr.bf16.mxu0 0
    %1005 = vmatpush1.bf16.msra.mxu0 0
    %1006 = vmatprep.subr.bf16.mxu0 0
    %1007 = vmatpush1.bf16.msra.mxu0 0
    %1008 = vmatprep.subr.bf16.mxu0 0
    %1009 = vmatpush1.bf16.msra.mxu0 0
    %1010 = vmatprep.subr.bf16.mxu0 0
    %1011 = vmatpush1.bf16.msra.mxu0 0
    %1012 = vmatprep.subr.bf16.mxu0 0
    %1013 = vmatpush1.bf16.msra.mxu0 0
    %1014 = vmatprep.subr.bf16.mxu0 0
    %1015 = vmatpush1.bf16.msra.mxu0 0
    %1016 = vmatprep.subr.bf16.mxu0 0
    %1017 = vmatpush1.bf16.msra.mxu0 0
    %1018 = vmatprep.subr.bf16.mxu0 0
    %1019 = vmatpush1.bf16.msra.mxu0 0
    %1020 = vmatprep.subr.bf16.mxu0 0
    %1021 = vmatpush1.bf16.msra.mxu0 0
    %1022 = vmatprep.subr.bf16.mxu0 0
    %1023 = vmatpush1.bf16.msra.mxu0 0
    %1024 = vmatprep.subr.bf16.mxu0 0
    %1025 = vmatpush1.bf16.msra.mxu0 0
    %1026 = vmatprep.subr.bf16.mxu0 0
    %1027 = vmatpush1.bf16.msra.mxu0 0
    %1028 = vmatprep.subr.bf16.mxu0 0
    %1029 = vmatpush1.bf16.msra.mxu0 0
    %1030 = vmatprep.subr.bf16.mxu0 0
    %1031 = vmatpush1.bf16.msra.mxu0 0
    %1032 = vmatprep.subr.bf16.mxu0 0
    %1033 = vmatpush1.bf16.msra.mxu0 0
    %1034 = vmatprep.mubr.bf16.mxu0 0
    %1035 = vmatmul.mubr.bf16.gmra.mrb[0].mxu0 %v997
    %v1036 = vpop.f32.mrb[0].mxu0
    %v1037 = vadd.f32 0.0, %v1036
    %v1038 = vpop.f32.mrb[0].mxu0
    %v1039 = vpop.f32.mrb[0].mxu0
    %v1040 = vadd.f32 0.0, %v1039
    %v1041 = vpop.f32.mrb[0].mxu0
    %1042 = vdwg.mxu0
    %v1043 = vadd.f32 %v867, %v1037
    %v1044 = vadd.f32 %v868, %v1040
    %v1045 = vadd.f32 %v169, %v1043
    %v1046 = vadd.f32 %v170, %v1044
    %v1047 = vld [vmem:[%s14 + $0x8] sm:$0x1]
    %v1048 = vld [vmem:[%s14 + $0x9] sm:$0x1]
    %v1049 = vsel %vm194, %v1045, 0.0
    %1050 = vadd.xlane.f32.xlu0 %v1049
    %v1051 = vpop.xlane.xlu0 %1050
    %v1052 = vsel %vm194, %v1046, 0.0
    %1053 = vadd.xlane.f32.xlu0 %v1052
    %v1054 = vpop.xlane.xlu0 %1053
    %v1055 = vrcp.pop 32.0
    %v1056 = vmul.f32 %v1051, %v1055
    %v1057 = vmul.f32 %v1054, %v1055
    %v1058 = vsub.f32 %v1045, %v1056
    %v1059 = vsub.f32 %v1046, %v1057
    %v1060 = vmul.f32 %v1058, %v1058
    %v1061 = vmul.f32 %v1059, %v1059
    %v1062 = vsel %vm194, %v1060, 0.0
    %1063 = vadd.xlane.f32.xlu0 %v1062
    %v1064 = vpop.xlane.xlu0 %1063
    %v1065 = vsel %vm194, %v1061, 0.0
    %1066 = vadd.xlane.f32.xlu0 %v1065
    %v1067 = vpop.xlane.xlu0 %1066
    %v1068 = vmul.f32 %v1064, %v1055
    %v1069 = vmul.f32 %v1067, %v1055
    %v1070 = vadd.f32 %v1068, 1e-05
    %v1071 = vadd.f32 %v1069, 1e-05
    %v1072 = vrsqrt.pop %v1070
    %v1073 = vrsqrt.pop %v1071
    %v1074 = vmul.f32 %v1058, %v1072
    %v1075 = vmul.f32 %v1059, %v1073
    %v1076 = vlaneseq
    %v1077 = vshrl.u32 %v1076, 7
    %v1078 = vsub.s32 0, %v1077
    %v1079 = vrot.slane %v1047, %v1078
    %v1080 = vmul.f32 %v1074, %v1079
    %v1081 = vmul.f32 %v1075, %v1079
    %v1082 = vlaneseq
    %v1083 = vshrl.u32 %v1082, 7
    %v1084 = vsub.s32 0, %v1083
    %v1085 = vrot.slane %v1048, %v1084
    %v1086 = vadd.f32 %v1080, %v1085
    %v1087 = vadd.f32 %v1081, %v1085
    %v1088 = vpack.c.bf16 %v1087, %v1086
    %v1089 = vld [vmem:[%s8] sm:$0xf]
    %v1090 = vld [vmem:[%s8 + $0x4] sm:$0xf]
    %v1091 = vld [vmem:[%s8 + $0x8] sm:$0xf]
    %v1092 = vld [vmem:[%s8 + $0xc] sm:$0xf]
    %v1093 = vld [vmem:[%s14 + $0x4] sm:$0x1]
    %v1094 = vlaneseq
    %v1095 = vshrl.u32 %v1094, 7
    %v1096 = vsub.s32 0, %v1095
    %v1097 = vrot.slane %v1093, %v1096
    %v1102 = vunpack.c.l.b16 %v1089
    %v1103 = vunpack.c.l.b16 %v1090
    %v1104 = vunpack.c.l.b16 %v1091
    %v1105 = vunpack.c.l.b16 %v1092
    %v1106 = vpack.c.b16 %v1103, %v1102
    %v1107 = vpack.c.b16 %v1105, %v1104
    %v1111 = vsel %vm194, %v1088, 0
    %1113 = vmatprep.subr.bf16.mxu0 0
    %1114 = vmatpush1.bf16.msra.mxu0 %v1106
    %1115 = vmatprep.subr.bf16.mxu0 0
    %1116 = vmatpush1.bf16.msra.mxu0 %v1107
    %1117 = vmatprep.subr.bf16.mxu0 0
    %1118 = vmatpush1.bf16.msra.mxu0 0
    %1119 = vmatprep.subr.bf16.mxu0 0
    %1120 = vmatpush1.bf16.msra.mxu0 0
    %1121 = vmatprep.subr.bf16.mxu0 0
    %1122 = vmatpush1.bf16.msra.mxu0 0
    %1123 = vmatprep.subr.bf16.mxu0 0
    %1124 = vmatpush1.bf16.msra.mxu0 0
    %1125 = vmatprep.subr.bf16.mxu0 0
    %1126 = vmatpush1.bf16.msra.mxu0 0
    %1127 = vmatprep.subr.bf16.mxu0 0
    %1128 = vmatpush1.bf16.msra.mxu0 0
    %1129 = vmatprep.subr.bf16.mxu0 0
    %1130 = vmatpush1.bf16.msra.mxu0 0
    %1131 = vmatprep.subr.bf16.mxu0 0
    %1132 = vmatpush1.bf16.msra.mxu0 0
    %1133 = vmatprep.subr.bf16.mxu0 0
    %1134 = vmatpush1.bf16.msra.mxu0 0
    %1135 = vmatprep.subr.bf16.mxu0 0
    %1136 = vmatpush1.bf16.msra.mxu0 0
    %1137 = vmatprep.subr.bf16.mxu0 0
    %1138 = vmatpush1.bf16.msra.mxu0 0
    %1139 = vmatprep.subr.bf16.mxu0 0
    %1140 = vmatpush1.bf16.msra.mxu0 0
    %1141 = vmatprep.subr.bf16.mxu0 0
    %1142 = vmatpush1.bf16.msra.mxu0 0
    %1143 = vmatprep.subr.bf16.mxu0 0
    %1144 = vmatpush1.bf16.msra.mxu0 0
    %1145 = vmatprep.mubr.bf16.mxu0 0
    %1146 = vmatmul.mubr.bf16.gmra.mrb[0].mxu0 %v1111
    %v1147 = vpop.f32.mrb[0].mxu0
    %v1148 = vadd.f32 %v1097, %v1147
    %v1149 = vpop.f32.mrb[0].mxu0
    %v1150 = vpop.f32.mrb[0].mxu0
    %v1151 = vadd.f32 %v1097, %v1150
    %v1152 = vpop.f32.mrb[0].mxu0
    %1153 = vdwg.mxu0
    %v1154 = vld [vmem:[%s14 + $0x5] sm:$0x1]
    %v1155 = vlaneseq
    %v1156 = vshrl.u32 %v1155, 7
    %v1157 = vsub.s32 0, %v1156
    %v1158 = vrot.slane %v1154, %v1157
    %v1159 = vadd.f32 %v233, %v1158
    %v1160 = vadd.f32 %v236, %v1158
    %v1161 = vld [vmem:[%s14 + $0x6] sm:$0x1]
    %v1162 = vlaneseq
    %v1163 = vshrl.u32 %v1162, 7
    %v1164 = vsub.s32 0, %v1163
    %v1165 = vrot.slane %v1161, %v1164
    %1167 = vrot.lane.b32.xlu0 %v1165, 32
    %v1168 = vpop.permute.xlu0 %1167
    %v1170 = vadd.f32 %v233, %v1168
    %v1171 = vadd.f32 %v236, %v1168
    %v1172 = vld [vmem:[%s14 + $0x7] sm:$0x1]
    %v1173 = vpack.c.bf16 %v1151, %v1148
    %v1174 = vpack.c.bf16 %v1160, %v1159
    %v1175 = vpack.c.bf16 %v1171, %v1170
    %v1177 = vsel %vm336, %v1173, 0
    %v1180 = vsel %vm336, %v1174, 0
    %1182 = vmatprep.subr.bf16.mxu0 0
    %1183 = vmatpush1.bf16.xpose.msra.mxu0 %v1180
    %1184 = vmatprep.subr.bf16.mxu0 0
    %1185 = vmatpush1.bf16.xpose.msra.mxu0 0
    %1186 = vmatprep.subr.bf16.mxu0 0
    %1187 = vmatpush1.bf16.xpose.msra.mxu0 0
    %1188 = vmatprep.subr.bf16.mxu0 0
    %1189 = vmatpush1.bf16.xpose.msra.mxu0 0
    %1190 = vmatprep.subr.bf16.mxu0 0
    %1191 = vmatpush1.bf16.xpose.msra.mxu0 0
    %1192 = vmatprep.subr.bf16.mxu0 0
    %1193 = vmatpush1.bf16.xpose.msra.mxu0 0
    %1194 = vmatprep.subr.bf16.mxu0 0
    %1195 = vmatpush1.bf16.xpose.msra.mxu0 0
    %1196 = vmatprep.subr.bf16.mxu0 0
    %1197 = vmatpush1.bf16.xpose.msra.mxu0 0
    %1198 = vmatprep.subr.bf16.mxu0 0
    %1199 = vmatpush1.bf16.xpose.msra.mxu0 0
    %1200 = vmatprep.subr.bf16.mxu0 0
    %1201 = vmatpush1.bf16.xpose.msra.mxu0 0
    %1202 = vmatprep.subr.bf16.mxu0 0
    %1203 = vmatpush1.bf16.xpose.msra.mxu0 0
    %1204 = vmatprep.subr.bf16.mxu0 0
    %1205 = vmatpush1.bf16.xpose.msra.mxu0 0
    %1206 = vmatprep.subr.bf16.mxu0 0
    %1207 = vmatpush1.bf16.xpose.msra.mxu0 0
    %1208 = vmatprep.subr.bf16.mxu0 0
    %1209 = vmatpush1.bf16.xpose.msra.mxu0 0
    %1210 = vmatprep.subr.bf16.mxu0 0
    %1211 = vmatpush1.bf16.xpose.msra.mxu0 0
    %1212 = vmatprep.subr.bf16.mxu0 0
    %1213 = vmatpush1.bf16.xpose.msra.mxu0 0
    %1214 = vmatprep.mubr.bf16.mxu0 0
    %1215 = vmatmul.mubr.bf16.gmra.mrb[0].mxu0 %v1177
    %v1216 = vpop.f32.mrb[0].mxu0
    %v1217 = vadd.f32 0.0, %v1216
    %v1218 = vpop.f32.mrb[0].mxu0
    %v1219 = vpop.f32.mrb[0].mxu0
    %v1220 = vadd.f32 0.0, %v1219
    %v1221 = vpop.f32.mrb[0].mxu0
    %1222 = vdwg.mxu0
    %v1223 = vmul.f32 %v1217, 0.35355338
    %v1224 = vmul.f32 %v1220, 0.35355338
    %v1225 = vadd.f32 %v1223, %v173
    %v1226 = vadd.f32 %v1224, %v174
    %v1227 = vsel %vm388, %v1225, -inf
    %1228 = vmax.xlane.f32.xlu0 %v1227
    %v1229 = vpop.xlane.xlu0 %1228
    %v1230 = vsel %vm388, %v1226, -inf
    %1231 = vmax.xlane.f32.xlu0 %v1230
    %v1232 = vpop.xlane.xlu0 %1231
    %v1233 = vsub.f32 %v1225, %v1229
    %v1234 = vsub.f32 %v1226, %v1232
    %v1235 = vmul.f32 %v1233, 1.442695
    %v1236 = vpow.pop %v1235
    %v1237 = vmul.f32 %v1234, 1.442695
    %v1238 = vpow.pop %v1237
    %v1239 = vsel %vm388, %v1236, 0.0
    %1240 = vadd.xlane.f32.xlu0 %v1239
    %v1241 = vpop.xlane.xlu0 %1240
    %v1242 = vsel %vm388, %v1238, 0.0
    %1243 = vadd.xlane.f32.xlu0 %v1242
    %v1244 = vpop.xlane.xlu0 %1243
    %v1245 = vrcp.pop %v1241
    %v1246 = vrcp.pop %v1244
    %v1247 = vmul.f32 %v1236, %v1245
    %v1248 = vmul.f32 %v1238, %v1246
    %v1249 = vpack.c.bf16 %v1248, %v1247
    %1251 = vrot.lane.b32.xlu0 %v1175, 96
    %v1252 = vpop.permute.xlu0 %1251
    %v1255 = vsel %vm388, %v1249, 0
    %1257 = vmatprep.subr.bf16.mxu0 0
    %1258 = vmatpush1.bf16.msra.mxu0 %v1252
    %1259 = vmatprep.subr.bf16.mxu0 0
    %1260 = vmatpush1.bf16.msra.mxu0 0
    %1261 = vmatprep.subr.bf16.mxu0 0
    %1262 = vmatpush1.bf16.msra.mxu0 0
    %1263 = vmatprep.subr.bf16.mxu0 0
    %1264 = vmatpush1.bf16.msra.mxu0 0
    %1265 = vmatprep.subr.bf16.mxu0 0
    %1266 = vmatpush1.bf16.msra.mxu0 0
    %1267 = vmatprep.subr.bf16.mxu0 0
    %1268 = vmatpush1.bf16.msra.mxu0 0
    %1269 = vmatprep.subr.bf16.mxu0 0
    %1270 = vmatpush1.bf16.msra.mxu0 0
    %1271 = vmatprep.subr.bf16.mxu0 0
    %1272 = vmatpush1.bf16.msra.mxu0 0
    %1273 = vmatprep.subr.bf16.mxu0 0
    %1274 = vmatpush1.bf16.msra.mxu0 0
    %1275 = vmatprep.subr.bf16.mxu0 0
    %1276 = vmatpush1.bf16.msra.mxu0 0
    %1277 = vmatprep.subr.bf16.mxu0 0
    %1278 = vmatpush1.bf16.msra.mxu0 0
    %1279 = vmatprep.subr.bf16.mxu0 0
    %1280 = vmatpush1.bf16.msra.mxu0 0
    %1281 = vmatprep.subr.bf16.mxu0 0
    %1282 = vmatpush1.bf16.msra.mxu0 0
    %1283 = vmatprep.subr.bf16.mxu0 0
    %1284 = vmatpush1.bf16.msra.mxu0 0
    %1285 = vmatprep.subr.bf16.mxu0 0
    %1286 = vmatpush1.bf16.msra.mxu0 0
    %1287 = vmatprep.subr.bf16.mxu0 0
    %1288 = vmatpush1.bf16.msra.mxu0 0
    %1289 = vmatprep.mubr.bf16.mxu0 0
    %1290 = vmatmul.mubr.bf16.gmra.mrb[0].mxu0 %v1255
    %v1291 = vpop.f32.mrb[0].mxu0
    %v1292 = vadd.f32 0.0, %v1291
    %v1293 = vpop.f32.mrb[0].mxu0
    %v1294 = vpop.f32.mrb[0].mxu0
    %v1295 = vadd.f32 0.0, %v1294
    %v1296 = vpop.f32.mrb[0].mxu0
    %1297 = vdwg.mxu0
    %v1298 = vpack.c.bf16 %v1295, %v1292
    %v1299 = vld [vmem:[%s10] sm:$0xf]
    %v1301 = vsel %vm336, %v1298, 0
    %v1304 = vsel %vm465, %v1299, 0
    %1306 = vmatprep.subr.bf16.mxu0 0
    %1307 = vmatpush1.bf16.msra.mxu0 %v1304
    %1308 = vmatprep.subr.bf16.mxu0 0
    %1309 = vmatpush1.bf16.msra.mxu0 0
    %1310 = vmatprep.subr.bf16.mxu0 0
    %1311 = vmatpush1.bf16.msra.mxu0 0
    %1312 = vmatprep.subr.bf16.mxu0 0
    %1313 = vmatpush1.bf16.msra.mxu0 0
    %1314 = vmatprep.subr.bf16.mxu0 0
    %1315 = vmatpush1.bf16.msra.mxu0 0
    %1316 = vmatprep.subr.bf16.mxu0 0
    %1317 = vmatpush1.bf16.msra.mxu0 0
    %1318 = vmatprep.subr.bf16.mxu0 0
    %1319 = vmatpush1.bf16.msra.mxu0 0
    %1320 = vmatprep.subr.bf16.mxu0 0
    %1321 = vmatpush1.bf16.msra.mxu0 0
    %1322 = vmatprep.subr.bf16.mxu0 0
    %1323 = vmatpush1.bf16.msra.mxu0 0
    %1324 = vmatprep.subr.bf16.mxu0 0
    %1325 = vmatpush1.bf16.msra.mxu0 0
    %1326 = vmatprep.subr.bf16.mxu0 0
    %1327 = vmatpush1.bf16.msra.mxu0 0
    %1328 = vmatprep.subr.bf16.mxu0 0
    %1329 = vmatpush1.bf16.msra.mxu0 0
    %1330 = vmatprep.subr.bf16.mxu0 0
    %1331 = vmatpush1.bf16.msra.mxu0 0
    %1332 = vmatprep.subr.bf16.mxu0 0
    %1333 = vmatpush1.bf16.msra.mxu0 0
    %1334 = vmatprep.subr.bf16.mxu0 0
    %1335 = vmatpush1.bf16.msra.mxu0 0
    %1336 = vmatprep.subr.bf16.mxu0 0
    %1337 = vmatpush1.bf16.msra.mxu0 0
    %1338 = vmatprep.mubr.bf16.mxu0 0
    %1339 = vmatmul.mubr.bf16.gmra.mrb[0].mxu0 %v1301
    %v1340 = vpop.f32.mrb[0].mxu0
    %v1341 = vadd.f32 0.0, %v1340
    %v1342 = vpop.f32.mrb[0].mxu0
    %v1343 = vpop.f32.mrb[0].mxu0
    %v1344 = vadd.f32 0.0, %v1343
    %v1345 = vpop.f32.mrb[0].mxu0
    %1346 = vdwg.mxu0
    %v1347 = vlaneseq
    %v1348 = vshrl.u32 %v1347, 7
    %v1349 = vsub.s32 0, %v1348
    %v1350 = vrot.slane %v1172, %v1349
    %v1351 = vadd.f32 %v1350, %v1341
    %v1352 = vadd.f32 %v1350, %v1344
    %1354 = vrot.lane.b32.xlu0 %v1173, 120
    %v1355 = vpop.permute.xlu0 %1354
    %1357 = vrot.lane.b32.xlu0 %v1174, 120
    %v1358 = vpop.permute.xlu0 %1357
    %v1360 = vsel %vm336, %v1355, 0
    %v1363 = vsel %vm336, %v1358, 0
    %1365 = vmatprep.subr.bf16.mxu0 0
    %1366 = vmatpush1.bf16.xpose.msra.mxu0 %v1363
    %1367 = vmatprep.subr.bf16.mxu0 0
    %1368 = vmatpush1.bf16.xpose.msra.mxu0 0
    %1369 = vmatprep.subr.bf16.mxu0 0
    %1370 = vmatpush1.bf16.xpose.msra.mxu0 0
    %1371 = vmatprep.subr.bf16.mxu0 0
    %1372 = vmatpush1.bf16.xpose.msra.mxu0 0
    %1373 = vmatprep.subr.bf16.mxu0 0
    %1374 = vmatpush1.bf16.xpose.msra.mxu0 0
    %1375 = vmatprep.subr.bf16.mxu0 0
    %1376 = vmatpush1.bf16.xpose.msra.mxu0 0
    %1377 = vmatprep.subr.bf16.mxu0 0
    %1378 = vmatpush1.bf16.xpose.msra.mxu0 0
    %1379 = vmatprep.subr.bf16.mxu0 0
    %1380 = vmatpush1.bf16.xpose.msra.mxu0 0
    %1381 = vmatprep.subr.bf16.mxu0 0
    %1382 = vmatpush1.bf16.xpose.msra.mxu0 0
    %1383 = vmatprep.subr.bf16.mxu0 0
    %1384 = vmatpush1.bf16.xpose.msra.mxu0 0
    %1385 = vmatprep.subr.bf16.mxu0 0
    %1386 = vmatpush1.bf16.xpose.msra.mxu0 0
    %1387 = vmatprep.subr.bf16.mxu0 0
    %1388 = vmatpush1.bf16.xpose.msra.mxu0 0
    %1389 = vmatprep.subr.bf16.mxu0 0
    %1390 = vmatpush1.bf16.xpose.msra.mxu0 0
    %1391 = vmatprep.subr.bf16.mxu0 0
    %1392 = vmatpush1.bf16.xpose.msra.mxu0 0
    %1393 = vmatprep.subr.bf16.mxu0 0
    %1394 = vmatpush1.bf16.xpose.msra.mxu0 0
    %1395 = vmatprep.subr.bf16.mxu0 0
    %1396 = vmatpush1.bf16.xpose.msra.mxu0 0
    %1397 = vmatprep.mubr.bf16.mxu0 0
    %1398 = vmatmul.mubr.bf16.gmra.mrb[0].mxu0 %v1360
    %v1399 = vpop.f32.mrb[0].mxu0
    %v1400 = vadd.f32 0.0, %v1399
    %v1401 = vpop.f32.mrb[0].mxu0
    %v1402 = vpop.f32.mrb[0].mxu0
    %v1403 = vadd.f32 0.0, %v1402
    %v1404 = vpop.f32.mrb[0].mxu0
    %1405 = vdwg.mxu0
    %v1406 = vmul.f32 %v1400, 0.35355338
    %v1407 = vmul.f32 %v1403, 0.35355338
    %v1408 = vadd.f32 %v1406, %v173
    %v1409 = vadd.f32 %v1407, %v174
    %v1410 = vsel %vm388, %v1408, -inf
    %1411 = vmax.xlane.f32.xlu0 %v1410
    %v1412 = vpop.xlane.xlu0 %1411
    %v1413 = vsel %vm388, %v1409, -inf
    %1414 = vmax.xlane.f32.xlu0 %v1413
    %v1415 = vpop.xlane.xlu0 %1414
    %v1416 = vsub.f32 %v1408, %v1412
    %v1417 = vsub.f32 %v1409, %v1415
    %v1418 = vmul.f32 %v1416, 1.442695
    %v1419 = vpow.pop %v1418
    %v1420 = vmul.f32 %v1417, 1.442695
    %v1421 = vpow.pop %v1420
    %v1422 = vsel %vm388, %v1419, 0.0
    %1423 = vadd.xlane.f32.xlu0 %v1422
    %v1424 = vpop.xlane.xlu0 %1423
    %v1425 = vsel %vm388, %v1421, 0.0
    %1426 = vadd.xlane.f32.xlu0 %v1425
    %v1427 = vpop.xlane.xlu0 %1426
    %v1428 = vrcp.pop %v1424
    %v1429 = vrcp.pop %v1427
    %v1430 = vmul.f32 %v1419, %v1428
    %v1431 = vmul.f32 %v1421, %v1429
    %v1432 = vpack.c.bf16 %v1431, %v1430
    %1433 = vrot.lane.b32.xlu0 %v1175, 88
    %v1434 = vpop.permute.xlu0 %1433
    %v1437 = vsel %vm388, %v1432, 0
    %1439 = vmatprep.subr.bf16.mxu0 0
    %1440 = vmatpush1.bf16.msra.mxu0 %v1434
    %1441 = vmatprep.subr.bf16.mxu0 0
    %1442 = vmatpush1.bf16.msra.mxu0 0
    %1443 = vmatprep.subr.bf16.mxu0 0
    %1444 = vmatpush1.bf16.msra.mxu0 0
    %1445 = vmatprep.subr.bf16.mxu0 0
    %1446 = vmatpush1.bf16.msra.mxu0 0
    %1447 = vmatprep.subr.bf16.mxu0 0
    %1448 = vmatpush1.bf16.msra.mxu0 0
    %1449 = vmatprep.subr.bf16.mxu0 0
    %1450 = vmatpush1.bf16.msra.mxu0 0
    %1451 = vmatprep.subr.bf16.mxu0 0
    %1452 = vmatpush1.bf16.msra.mxu0 0
    %1453 = vmatprep.subr.bf16.mxu0 0
    %1454 = vmatpush1.bf16.msra.mxu0 0
    %1455 = vmatprep.subr.bf16.mxu0 0
    %1456 = vmatpush1.bf16.msra.mxu0 0
    %1457 = vmatprep.subr.bf16.mxu0 0
    %1458 = vmatpush1.bf16.msra.mxu0 0
    %1459 = vmatprep.subr.bf16.mxu0 0
    %1460 = vmatpush1.bf16.msra.mxu0 0
    %1461 = vmatprep.subr.bf16.mxu0 0
    %1462 = vmatpush1.bf16.msra.mxu0 0
    %1463 = vmatprep.subr.bf16.mxu0 0
    %1464 = vmatpush1.bf16.msra.mxu0 0
    %1465 = vmatprep.subr.bf16.mxu0 0
    %1466 = vmatpush1.bf16.msra.mxu0 0
    %1467 = vmatprep.subr.bf16.mxu0 0
    %1468 = vmatpush1.bf16.msra.mxu0 0
    %1469 = vmatprep.subr.bf16.mxu0 0
    %1470 = vmatpush1.bf16.msra.mxu0 0
    %1471 = vmatprep.mubr.bf16.mxu0 0
    %1472 = vmatmul.mubr.bf16.gmra.mrb[0].mxu0 %v1437
    %v1473 = vpop.f32.mrb[0].mxu0
    %v1474 = vadd.f32 0.0, %v1473
    %v1475 = vpop.f32.mrb[0].mxu0
    %v1476 = vpop.f32.mrb[0].mxu0
    %v1477 = vadd.f32 0.0, %v1476
    %v1478 = vpop.f32.mrb[0].mxu0
    %1479 = vdwg.mxu0
    %v1480 = vpack.c.bf16 %v1477, %v1474
    %v1481 = vld [vmem:[%s10 + $0x4] sm:$0xf]
    %v1483 = vsel %vm336, %v1480, 0
    %v1486 = vsel %vm465, %v1481, 0
    %1488 = vmatprep.subr.bf16.mxu0 0
    %1489 = vmatpush1.bf16.msra.mxu0 %v1486
    %1490 = vmatprep.subr.bf16.mxu0 0
    %1491 = vmatpush1.bf16.msra.mxu0 0
    %1492 = vmatprep.subr.bf16.mxu0 0
    %1493 = vmatpush1.bf16.msra.mxu0 0
    %1494 = vmatprep.subr.bf16.mxu0 0
    %1495 = vmatpush1.bf16.msra.mxu0 0
    %1496 = vmatprep.subr.bf16.mxu0 0
    %1497 = vmatpush1.bf16.msra.mxu0 0
    %1498 = vmatprep.subr.bf16.mxu0 0
    %1499 = vmatpush1.bf16.msra.mxu0 0
    %1500 = vmatprep.subr.bf16.mxu0 0
    %1501 = vmatpush1.bf16.msra.mxu0 0
    %1502 = vmatprep.subr.bf16.mxu0 0
    %1503 = vmatpush1.bf16.msra.mxu0 0
    %1504 = vmatprep.subr.bf16.mxu0 0
    %1505 = vmatpush1.bf16.msra.mxu0 0
    %1506 = vmatprep.subr.bf16.mxu0 0
    %1507 = vmatpush1.bf16.msra.mxu0 0
    %1508 = vmatprep.subr.bf16.mxu0 0
    %1509 = vmatpush1.bf16.msra.mxu0 0
    %1510 = vmatprep.subr.bf16.mxu0 0
    %1511 = vmatpush1.bf16.msra.mxu0 0
    %1512 = vmatprep.subr.bf16.mxu0 0
    %1513 = vmatpush1.bf16.msra.mxu0 0
    %1514 = vmatprep.subr.bf16.mxu0 0
    %1515 = vmatpush1.bf16.msra.mxu0 0
    %1516 = vmatprep.subr.bf16.mxu0 0
    %1517 = vmatpush1.bf16.msra.mxu0 0
    %1518 = vmatprep.subr.bf16.mxu0 0
    %1519 = vmatpush1.bf16.msra.mxu0 0
    %1520 = vmatprep.mubr.bf16.mxu0 0
    %1521 = vmatmul.mubr.bf16.gmra.mrb[0].mxu0 %v1483
    %v1522 = vpop.f32.mrb[0].mxu0
    %v1523 = vadd.f32 0.0, %v1522
    %v1524 = vpop.f32.mrb[0].mxu0
    %v1525 = vpop.f32.mrb[0].mxu0
    %v1526 = vadd.f32 0.0, %v1525
    %v1527 = vpop.f32.mrb[0].mxu0
    %1528 = vdwg.mxu0
    %v1529 = vadd.f32 %v1351, %v1523
    %v1530 = vadd.f32 %v1352, %v1526
    %1531 = vrot.lane.b32.xlu0 %v1173, 112
    %v1532 = vpop.permute.xlu0 %1531
    %1533 = vrot.lane.b32.xlu0 %v1174, 112
    %v1534 = vpop.permute.xlu0 %1533
    %v1536 = vsel %vm336, %v1532, 0
    %v1539 = vsel %vm336, %v1534, 0
    %1541 = vmatprep.subr.bf16.mxu0 0
    %1542 = vmatpush1.bf16.xpose.msra.mxu0 %v1539
    %1543 = vmatprep.subr.bf16.mxu0 0
    %1544 = vmatpush1.bf16.xpose.msra.mxu0 0
    %1545 = vmatprep.subr.bf16.mxu0 0
    %1546 = vmatpush1.bf16.xpose.msra.mxu0 0
    %1547 = vmatprep.subr.bf16.mxu0 0
    %1548 = vmatpush1.bf16.xpose.msra.mxu0 0
    %1549 = vmatprep.subr.bf16.mxu0 0
    %1550 = vmatpush1.bf16.xpose.msra.mxu0 0
    %1551 = vmatprep.subr.bf16.mxu0 0
    %1552 = vmatpush1.bf16.xpose.msra.mxu0 0
    %1553 = vmatprep.subr.bf16.mxu0 0
    %1554 = vmatpush1.bf16.xpose.msra.mxu0 0
    %1555 = vmatprep.subr.bf16.mxu0 0
    %1556 = vmatpush1.bf16.xpose.msra.mxu0 0
    %1557 = vmatprep.subr.bf16.mxu0 0
    %1558 = vmatpush1.bf16.xpose.msra.mxu0 0
    %1559 = vmatprep.subr.bf16.mxu0 0
    %1560 = vmatpush1.bf16.xpose.msra.mxu0 0
    %1561 = vmatprep.subr.bf16.mxu0 0
    %1562 = vmatpush1.bf16.xpose.msra.mxu0 0
    %1563 = vmatprep.subr.bf16.mxu0 0
    %1564 = vmatpush1.bf16.xpose.msra.mxu0 0
    %1565 = vmatprep.subr.bf16.mxu0 0
    %1566 = vmatpush1.bf16.xpose.msra.mxu0 0
    %1567 = vmatprep.subr.bf16.mxu0 0
    %1568 = vmatpush1.bf16.xpose.msra.mxu0 0
    %1569 = vmatprep.subr.bf16.mxu0 0
    %1570 = vmatpush1.bf16.xpose.msra.mxu0 0
    %1571 = vmatprep.subr.bf16.mxu0 0
    %1572 = vmatpush1.bf16.xpose.msra.mxu0 0
    %1573 = vmatprep.mubr.bf16.mxu0 0
    %1574 = vmatmul.mubr.bf16.gmra.mrb[0].mxu0 %v1536
    %v1575 = vpop.f32.mrb[0].mxu0
    %v1576 = vadd.f32 0.0, %v1575
    %v1577 = vpop.f32.mrb[0].mxu0
    %v1578 = vpop.f32.mrb[0].mxu0
    %v1579 = vadd.f32 0.0, %v1578
    %v1580 = vpop.f32.mrb[0].mxu0
    %1581 = vdwg.mxu0
    %v1582 = vmul.f32 %v1576, 0.35355338
    %v1583 = vmul.f32 %v1579, 0.35355338
    %v1584 = vadd.f32 %v1582, %v173
    %v1585 = vadd.f32 %v1583, %v174
    %v1586 = vsel %vm388, %v1584, -inf
    %1587 = vmax.xlane.f32.xlu0 %v1586
    %v1588 = vpop.xlane.xlu0 %1587
    %v1589 = vsel %vm388, %v1585, -inf
    %1590 = vmax.xlane.f32.xlu0 %v1589
    %v1591 = vpop.xlane.xlu0 %1590
    %v1592 = vsub.f32 %v1584, %v1588
    %v1593 = vsub.f32 %v1585, %v1591
    %v1594 = vmul.f32 %v1592, 1.442695
    %v1595 = vpow.pop %v1594
    %v1596 = vmul.f32 %v1593, 1.442695
    %v1597 = vpow.pop %v1596
    %v1598 = vsel %vm388, %v1595, 0.0
    %1599 = vadd.xlane.f32.xlu0 %v1598
    %v1600 = vpop.xlane.xlu0 %1599
    %v1601 = vsel %vm388, %v1597, 0.0
    %1602 = vadd.xlane.f32.xlu0 %v1601
    %v1603 = vpop.xlane.xlu0 %1602
    %v1604 = vrcp.pop %v1600
    %v1605 = vrcp.pop %v1603
    %v1606 = vmul.f32 %v1595, %v1604
    %v1607 = vmul.f32 %v1597, %v1605
    %v1608 = vpack.c.bf16 %v1607, %v1606
    %1609 = vrot.lane.b32.xlu0 %v1175, 80
    %v1610 = vpop.permute.xlu0 %1609
    %v1613 = vsel %vm388, %v1608, 0
    %1615 = vmatprep.subr.bf16.mxu0 0
    %1616 = vmatpush1.bf16.msra.mxu0 %v1610
    %1617 = vmatprep.subr.bf16.mxu0 0
    %1618 = vmatpush1.bf16.msra.mxu0 0
    %1619 = vmatprep.subr.bf16.mxu0 0
    %1620 = vmatpush1.bf16.msra.mxu0 0
    %1621 = vmatprep.subr.bf16.mxu0 0
    %1622 = vmatpush1.bf16.msra.mxu0 0
    %1623 = vmatprep.subr.bf16.mxu0 0
    %1624 = vmatpush1.bf16.msra.mxu0 0
    %1625 = vmatprep.subr.bf16.mxu0 0
    %1626 = vmatpush1.bf16.msra.mxu0 0
    %1627 = vmatprep.subr.bf16.mxu0 0
    %1628 = vmatpush1.bf16.msra.mxu0 0
    %1629 = vmatprep.subr.bf16.mxu0 0
    %1630 = vmatpush1.bf16.msra.mxu0 0
    %1631 = vmatprep.subr.bf16.mxu0 0
    %1632 = vmatpush1.bf16.msra.mxu0 0
    %1633 = vmatprep.subr.bf16.mxu0 0
    %1634 = vmatpush1.bf16.msra.mxu0 0
    %1635 = vmatprep.subr.bf16.mxu0 0
    %1636 = vmatpush1.bf16.msra.mxu0 0
    %1637 = vmatprep.subr.bf16.mxu0 0
    %1638 = vmatpush1.bf16.msra.mxu0 0
    %1639 = vmatprep.subr.bf16.mxu0 0
    %1640 = vmatpush1.bf16.msra.mxu0 0
    %1641 = vmatprep.subr.bf16.mxu0 0
    %1642 = vmatpush1.bf16.msra.mxu0 0
    %1643 = vmatprep.subr.bf16.mxu0 0
    %1644 = vmatpush1.bf16.msra.mxu0 0
    %1645 = vmatprep.subr.bf16.mxu0 0
    %1646 = vmatpush1.bf16.msra.mxu0 0
    %1647 = vmatprep.mubr.bf16.mxu0 0
    %1648 = vmatmul.mubr.bf16.gmra.mrb[0].mxu0 %v1613
    %v1649 = vpop.f32.mrb[0].mxu0
    %v1650 = vadd.f32 0.0, %v1649
    %v1651 = vpop.f32.mrb[0].mxu0
    %v1652 = vpop.f32.mrb[0].mxu0
    %v1653 = vadd.f32 0.0, %v1652
    %v1654 = vpop.f32.mrb[0].mxu0
    %1655 = vdwg.mxu0
    %v1656 = vpack.c.bf16 %v1653, %v1650
    %v1657 = vld [vmem:[%s10 + $0x8] sm:$0xf]
    %v1659 = vsel %vm336, %v1656, 0
    %v1662 = vsel %vm465, %v1657, 0
    %1664 = vmatprep.subr.bf16.mxu0 0
    %1665 = vmatpush1.bf16.msra.mxu0 %v1662
    %1666 = vmatprep.subr.bf16.mxu0 0
    %1667 = vmatpush1.bf16.msra.mxu0 0
    %1668 = vmatprep.subr.bf16.mxu0 0
    %1669 = vmatpush1.bf16.msra.mxu0 0
    %1670 = vmatprep.subr.bf16.mxu0 0
    %1671 = vmatpush1.bf16.msra.mxu0 0
    %1672 = vmatprep.subr.bf16.mxu0 0
    %1673 = vmatpush1.bf16.msra.mxu0 0
    %1674 = vmatprep.subr.bf16.mxu0 0
    %1675 = vmatpush1.bf16.msra.mxu0 0
    %1676 = vmatprep.subr.bf16.mxu0 0
    %1677 = vmatpush1.bf16.msra.mxu0 0
    %1678 = vmatprep.subr.bf16.mxu0 0
    %1679 = vmatpush1.bf16.msra.mxu0 0
    %1680 = vmatprep.subr.bf16.mxu0 0
    %1681 = vmatpush1.bf16.msra.mxu0 0
    %1682 = vmatprep.subr.bf16.mxu0 0
    %1683 = vmatpush1.bf16.msra.mxu0 0
    %1684 = vmatprep.subr.bf16.mxu0 0
    %1685 = vmatpush1.bf16.msra.mxu0 0
    %1686 = vmatprep.subr.bf16.mxu0 0
    %1687 = vmatpush1.bf16.msra.mxu0 0
    %1688 = vmatprep.subr.bf16.mxu0 0
    %1689 = vmatpush1.bf16.msra.mxu0 0
    %1690 = vmatprep.subr.bf16.mxu0 0
    %1691 = vmatpush1.bf16.msra.mxu0 0
    %1692 = vmatprep.subr.bf16.mxu0 0
    %1693 = vmatpush1.bf16.msra.mxu0 0
    %1694 = vmatprep.subr.bf16.mxu0 0
    %1695 = vmatpush1.bf16.msra.mxu0 0
    %1696 = vmatprep.mubr.bf16.mxu0 0
    %1697 = vmatmul.mubr.bf16.gmra.mrb[0].mxu0 %v1659
    %v1698 = vpop.f32.mrb[0].mxu0
    %v1699 = vadd.f32 0.0, %v1698
    %v1700 = vpop.f32.mrb[0].mxu0
    %v1701 = vpop.f32.mrb[0].mxu0
    %v1702 = vadd.f32 0.0, %v1701
    %v1703 = vpop.f32.mrb[0].mxu0
    %1704 = vdwg.mxu0
    %v1705 = vadd.f32 %v1529, %v1699
    %v1706 = vadd.f32 %v1530, %v1702
    %1707 = vrot.lane.b32.xlu0 %v1173, 104
    %v1708 = vpop.permute.xlu0 %1707
    %1709 = vrot.lane.b32.xlu0 %v1174, 104
    %v1710 = vpop.permute.xlu0 %1709
    %v1712 = vsel %vm336, %v1708, 0
    %v1715 = vsel %vm336, %v1710, 0
    %1717 = vmatprep.subr.bf16.mxu0 0
    %1718 = vmatpush1.bf16.xpose.msra.mxu0 %v1715
    %1719 = vmatprep.subr.bf16.mxu0 0
    %1720 = vmatpush1.bf16.xpose.msra.mxu0 0
    %1721 = vmatprep.subr.bf16.mxu0 0
    %1722 = vmatpush1.bf16.xpose.msra.mxu0 0
    %1723 = vmatprep.subr.bf16.mxu0 0
    %1724 = vmatpush1.bf16.xpose.msra.mxu0 0
    %1725 = vmatprep.subr.bf16.mxu0 0
    %1726 = vmatpush1.bf16.xpose.msra.mxu0 0
    %1727 = vmatprep.subr.bf16.mxu0 0
    %1728 = vmatpush1.bf16.xpose.msra.mxu0 0
    %1729 = vmatprep.subr.bf16.mxu0 0
    %1730 = vmatpush1.bf16.xpose.msra.mxu0 0
    %1731 = vmatprep.subr.bf16.mxu0 0
    %1732 = vmatpush1.bf16.xpose.msra.mxu0 0
    %1733 = vmatprep.subr.bf16.mxu0 0
    %1734 = vmatpush1.bf16.xpose.msra.mxu0 0
    %1735 = vmatprep.subr.bf16.mxu0 0
    %1736 = vmatpush1.bf16.xpose.msra.mxu0 0
    %1737 = vmatprep.subr.bf16.mxu0 0
    %1738 = vmatpush1.bf16.xpose.msra.mxu0 0
    %1739 = vmatprep.subr.bf16.mxu0 0
    %1740 = vmatpush1.bf16.xpose.msra.mxu0 0
    %1741 = vmatprep.subr.bf16.mxu0 0
    %1742 = vmatpush1.bf16.xpose.msra.mxu0 0
    %1743 = vmatprep.subr.bf16.mxu0 0
    %1744 = vmatpush1.bf16.xpose.msra.mxu0 0
    %1745 = vmatprep.subr.bf16.mxu0 0
    %1746 = vmatpush1.bf16.xpose.msra.mxu0 0
    %1747 = vmatprep.subr.bf16.mxu0 0
    %1748 = vmatpush1.bf16.xpose.msra.mxu0 0
    %1749 = vmatprep.mubr.bf16.mxu0 0
    %1750 = vmatmul.mubr.bf16.gmra.mrb[0].mxu0 %v1712
    %v1751 = vpop.f32.mrb[0].mxu0
    %v1752 = vadd.f32 0.0, %v1751
    %v1753 = vpop.f32.mrb[0].mxu0
    %v1754 = vpop.f32.mrb[0].mxu0
    %v1755 = vadd.f32 0.0, %v1754
    %v1756 = vpop.f32.mrb[0].mxu0
    %1757 = vdwg.mxu0
    %v1758 = vmul.f32 %v1752, 0.35355338
    %v1759 = vmul.f32 %v1755, 0.35355338
    %v1760 = vadd.f32 %v1758, %v173
    %v1761 = vadd.f32 %v1759, %v174
    %v1762 = vsel %vm388, %v1760, -inf
    %1763 = vmax.xlane.f32.xlu0 %v1762
    %v1764 = vpop.xlane.xlu0 %1763
    %v1765 = vsel %vm388, %v1761, -inf
    %1766 = vmax.xlane.f32.xlu0 %v1765
    %v1767 = vpop.xlane.xlu0 %1766
    %v1768 = vsub.f32 %v1760, %v1764
    %v1769 = vsub.f32 %v1761, %v1767
    %v1770 = vmul.f32 %v1768, 1.442695
    %v1771 = vpow.pop %v1770
    %v1772 = vmul.f32 %v1769, 1.442695
    %v1773 = vpow.pop %v1772
    %v1774 = vsel %vm388, %v1771, 0.0
    %1775 = vadd.xlane.f32.xlu0 %v1774
    %v1776 = vpop.xlane.xlu0 %1775
    %v1777 = vsel %vm388, %v1773, 0.0
    %1778 = vadd.xlane.f32.xlu0 %v1777
    %v1779 = vpop.xlane.xlu0 %1778
    %v1780 = vrcp.pop %v1776
    %v1781 = vrcp.pop %v1779
    %v1782 = vmul.f32 %v1771, %v1780
    %v1783 = vmul.f32 %v1773, %v1781
    %v1784 = vpack.c.bf16 %v1783, %v1782
    %1785 = vrot.lane.b32.xlu0 %v1175, 72
    %v1786 = vpop.permute.xlu0 %1785
    %v1789 = vsel %vm388, %v1784, 0
    %1791 = vmatprep.subr.bf16.mxu0 0
    %1792 = vmatpush1.bf16.msra.mxu0 %v1786
    %1793 = vmatprep.subr.bf16.mxu0 0
    %1794 = vmatpush1.bf16.msra.mxu0 0
    %1795 = vmatprep.subr.bf16.mxu0 0
    %1796 = vmatpush1.bf16.msra.mxu0 0
    %1797 = vmatprep.subr.bf16.mxu0 0
    %1798 = vmatpush1.bf16.msra.mxu0 0
    %1799 = vmatprep.subr.bf16.mxu0 0
    %1800 = vmatpush1.bf16.msra.mxu0 0
    %1801 = vmatprep.subr.bf16.mxu0 0
    %1802 = vmatpush1.bf16.msra.mxu0 0
    %1803 = vmatprep.subr.bf16.mxu0 0
    %1804 = vmatpush1.bf16.msra.mxu0 0
    %1805 = vmatprep.subr.bf16.mxu0 0
    %1806 = vmatpush1.bf16.msra.mxu0 0
    %1807 = vmatprep.subr.bf16.mxu0 0
    %1808 = vmatpush1.bf16.msra.mxu0 0
    %1809 = vmatprep.subr.bf16.mxu0 0
    %1810 = vmatpush1.bf16.msra.mxu0 0
    %1811 = vmatprep.subr.bf16.mxu0 0
    %1812 = vmatpush1.bf16.msra.mxu0 0
    %1813 = vmatprep.subr.bf16.mxu0 0
    %1814 = vmatpush1.bf16.msra.mxu0 0
    %1815 = vmatprep.subr.bf16.mxu0 0
    %1816 = vmatpush1.bf16.msra.mxu0 0
    %1817 = vmatprep.subr.bf16.mxu0 0
    %1818 = vmatpush1.bf16.msra.mxu0 0
    %1819 = vmatprep.subr.bf16.mxu0 0
    %1820 = vmatpush1.bf16.msra.mxu0 0
    %1821 = vmatprep.subr.bf16.mxu0 0
    %1822 = vmatpush1.bf16.msra.mxu0 0
    %1823 = vmatprep.mubr.bf16.mxu0 0
    %1824 = vmatmul.mubr.bf16.gmra.mrb[0].mxu0 %v1789
    %v1825 = vpop.f32.mrb[0].mxu0
    %v1826 = vadd.f32 0.0, %v1825
    %v1827 = vpop.f32.mrb[0].mxu0
    %v1828 = vpop.f32.mrb[0].mxu0
    %v1829 = vadd.f32 0.0, %v1828
    %v1830 = vpop.f32.mrb[0].mxu0
    %1831 = vdwg.mxu0
    %v1832 = vpack.c.bf16 %v1829, %v1826
    %v1833 = vld [vmem:[%s10 + $0xc] sm:$0xf]
    %v1835 = vsel %vm336, %v1832, 0
    %v1838 = vsel %vm465, %v1833, 0
    %1840 = vmatprep.subr.bf16.mxu0 0
    %1841 = vmatpush1.bf16.msra.mxu0 %v1838
    %1842 = vmatprep.subr.bf16.mxu0 0
    %1843 = vmatpush1.bf16.msra.mxu0 0
    %1844 = vmatprep.subr.bf16.mxu0 0
    %1845 = vmatpush1.bf16.msra.mxu0 0
    %1846 = vmatprep.subr.bf16.mxu0 0
    %1847 = vmatpush1.bf16.msra.mxu0 0
    %1848 = vmatprep.subr.bf16.mxu0 0
    %1849 = vmatpush1.bf16.msra.mxu0 0
    %1850 = vmatprep.subr.bf16.mxu0 0
    %1851 = vmatpush1.bf16.msra.mxu0 0
    %1852 = vmatprep.subr.bf16.mxu0 0
    %1853 = vmatpush1.bf16.msra.mxu0 0
    %1854 = vmatprep.subr.bf16.mxu0 0
    %1855 = vmatpush1.bf16.msra.mxu0 0
    %1856 = vmatprep.subr.bf16.mxu0 0
    %1857 = vmatpush1.bf16.msra.mxu0 0
    %1858 = vmatprep.subr.bf16.mxu0 0
    %1859 = vmatpush1.bf16.msra.mxu0 0
    %1860 = vmatprep.subr.bf16.mxu0 0
    %1861 = vmatpush1.bf16.msra.mxu0 0
    %1862 = vmatprep.subr.bf16.mxu0 0
    %1863 = vmatpush1.bf16.msra.mxu0 0
    %1864 = vmatprep.subr.bf16.mxu0 0
    %1865 = vmatpush1.bf16.msra.mxu0 0
    %1866 = vmatprep.subr.bf16.mxu0 0
    %1867 = vmatpush1.bf16.msra.mxu0 0
    %1868 = vmatprep.subr.bf16.mxu0 0
    %1869 = vmatpush1.bf16.msra.mxu0 0
    %1870 = vmatprep.subr.bf16.mxu0 0
    %1871 = vmatpush1.bf16.msra.mxu0 0
    %1872 = vmatprep.mubr.bf16.mxu0 0
    %1873 = vmatmul.mubr.bf16.gmra.mrb[0].mxu0 %v1835
    %v1874 = vpop.f32.mrb[0].mxu0
    %v1875 = vadd.f32 0.0, %v1874
    %v1876 = vpop.f32.mrb[0].mxu0
    %v1877 = vpop.f32.mrb[0].mxu0
    %v1878 = vadd.f32 0.0, %v1877
    %v1879 = vpop.f32.mrb[0].mxu0
    %1880 = vdwg.mxu0
    %v1881 = vadd.f32 %v1705, %v1875
    %v1882 = vadd.f32 %v1706, %v1878
    %v1883 = vadd.f32 %v1086, %v1881
    %v1884 = vadd.f32 %v1087, %v1882
    %v1885 = vld [vmem:[%s14 + $0xa] sm:$0x1]
    %v1886 = vld [vmem:[%s14 + $0xb] sm:$0x1]
    %v1887 = vsel %vm194, %v1883, 0.0
    %1888 = vadd.xlane.f32.xlu0 %v1887
    %v1889 = vpop.xlane.xlu0 %1888
    %v1890 = vsel %vm194, %v1884, 0.0
    %1891 = vadd.xlane.f32.xlu0 %v1890
    %v1892 = vpop.xlane.xlu0 %1891
    %v1893 = vmul.f32 %v1889, %v1055
    %v1894 = vmul.f32 %v1892, %v1055
    %v1895 = vsub.f32 %v1883, %v1893
    %v1896 = vsub.f32 %v1884, %v1894
    %v1897 = vmul.f32 %v1895, %v1895
    %v1898 = vmul.f32 %v1896, %v1896
    %v1899 = vsel %vm194, %v1897, 0.0
    %1900 = vadd.xlane.f32.xlu0 %v1899
    %v1901 = vpop.xlane.xlu0 %1900
    %v1902 = vsel %vm194, %v1898, 0.0
    %1903 = vadd.xlane.f32.xlu0 %v1902
    %v1904 = vpop.xlane.xlu0 %1903
    %v1905 = vmul.f32 %v1901, %v1055
    %v1906 = vmul.f32 %v1904, %v1055
    %v1907 = vadd.f32 %v1905, 1e-05
    %v1908 = vadd.f32 %v1906, 1e-05
    %v1909 = vrsqrt.pop %v1907
    %v1910 = vrsqrt.pop %v1908
    %v1911 = vmul.f32 %v1895, %v1909
    %v1912 = vmul.f32 %v1896, %v1910
    %v1913 = vlaneseq
    %v1914 = vshrl.u32 %v1913, 7
    %v1915 = vsub.s32 0, %v1914
    %v1916 = vrot.slane %v1885, %v1915
    %v1917 = vmul.f32 %v1911, %v1916
    %v1918 = vmul.f32 %v1912, %v1916
    %v1919 = vlaneseq
    %v1920 = vshrl.u32 %v1919, 7
    %v1921 = vsub.s32 0, %v1920
    %v1922 = vrot.slane %v1886, %v1921
    %v1923 = vadd.f32 %v1917, %v1922
    %v1924 = vadd.f32 %v1918, %v1922
    %v1925 = vpack.c.bf16 %v1924, %v1923
    %v1926 = vld [vmem:[%s11] sm:$0xf]
    %v1927 = vld [vmem:[%s11 + $0x4] sm:$0xf]
    %v1928 = vld [vmem:[%s11 + $0x8] sm:$0xf]
    %v1929 = vld [vmem:[%s11 + $0xc] sm:$0xf]
    %v1930 = vld [vmem:[%s12] sm:$0x1]
    %v1932 = vlaneseq
    %v1933 = vshrl.u32 %v1932, 7
    %v1934 = vsub.s32 0, %v1933
    %v1935 = vrot.slane %v1930, %v1934
    %v1941 = vunpack.c.l.b16 %v1926
    %v1942 = vunpack.c.l.b16 %v1927
    %v1943 = vunpack.c.l.b16 %v1928
    %v1944 = vunpack.c.l.b16 %v1929
    %v1945 = vpack.c.b16 %v1942, %v1941
    %v1946 = vpack.c.b16 %v1944, %v1943
    %v1950 = vsel %vm194, %v1925, 0
    %1952 = vmatprep.subr.bf16.mxu0 0
    %1953 = vmatpush1.bf16.msra.mxu0 %v1945
    %1954 = vmatprep.subr.bf16.mxu0 0
    %1955 = vmatpush1.bf16.msra.mxu0 %v1946
    %1956 = vmatprep.subr.bf16.mxu0 0
    %1957 = vmatpush1.bf16.msra.mxu0 0
    %1958 = vmatprep.subr.bf16.mxu0 0
    %1959 = vmatpush1.bf16.msra.mxu0 0
    %1960 = vmatprep.subr.bf16.mxu0 0
    %1961 = vmatpush1.bf16.msra.mxu0 0
    %1962 = vmatprep.subr.bf16.mxu0 0
    %1963 = vmatpush1.bf16.msra.mxu0 0
    %1964 = vmatprep.subr.bf16.mxu0 0
    %1965 = vmatpush1.bf16.msra.mxu0 0
    %1966 = vmatprep.subr.bf16.mxu0 0
    %1967 = vmatpush1.bf16.msra.mxu0 0
    %1968 = vmatprep.subr.bf16.mxu0 0
    %1969 = vmatpush1.bf16.msra.mxu0 0
    %1970 = vmatprep.subr.bf16.mxu0 0
    %1971 = vmatpush1.bf16.msra.mxu0 0
    %1972 = vmatprep.subr.bf16.mxu0 0
    %1973 = vmatpush1.bf16.msra.mxu0 0
    %1974 = vmatprep.subr.bf16.mxu0 0
    %1975 = vmatpush1.bf16.msra.mxu0 0
    %1976 = vmatprep.subr.bf16.mxu0 0
    %1977 = vmatpush1.bf16.msra.mxu0 0
    %1978 = vmatprep.subr.bf16.mxu0 0
    %1979 = vmatpush1.bf16.msra.mxu0 0
    %1980 = vmatprep.subr.bf16.mxu0 0
    %1981 = vmatpush1.bf16.msra.mxu0 0
    %1982 = vmatprep.subr.bf16.mxu0 0
    %1983 = vmatpush1.bf16.msra.mxu0 0
    %1984 = vmatprep.mubr.bf16.mxu0 0
    %1985 = vmatmul.mubr.bf16.gmra.mrb[0].mxu0 %v1950
    %v1986 = vpop.f32.mrb[0].mxu0
    %v1987 = vadd.f32 %v1935, %v1986
    %v1988 = vpop.f32.mrb[0].mxu0
    %v1989 = vpop.f32.mrb[0].mxu0
    %v1990 = vadd.f32 %v1935, %v1989
    %v1991 = vpop.f32.mrb[0].mxu0
    %1992 = vdwg.mxu0
    %v1993 = vmul.f32 %v1987, %v1987
    %v1994 = vmul.f32 %v1990, %v1990
    %v1995 = vmul.f32 %v1987, %v1993
    %v1996 = vmul.f32 %v1990, %v1994
    %v1997 = vmul.f32 %v1995, 0.044715
    %v1998 = vmul.f32 %v1996, 0.044715
    %v1999 = vadd.f32 %v1987, %v1997
    %v2000 = vadd.f32 %v1990, %v1998
    %v2001 = vmul.f32 %v1999, 0.7978846
    %v2002 = vmul.f32 %v2000, 0.7978846
    %v2003 = vtanh.pop %v2001
    %v2004 = vtanh.pop %v2002
    %v2005 = vadd.f32 %v2003, 1.0
    %v2006 = vadd.f32 %v2004, 1.0
    %v2007 = vmul.f32 %v2005, 0.5
    %v2008 = vmul.f32 %v2006, 0.5
    %v2009 = vmul.f32 %v1987, %v2007
    %v2010 = vmul.f32 %v1990, %v2008
    %v2011 = vpack.c.bf16 %v2010, %v2009
    %v2012 = vld [vmem:[%s13] sm:$0xf]
    %v2013 = vld [vmem:[%s13 + $0x4] sm:$0xf]
    %v2014 = vld [vmem:[%s13 + $0x8] sm:$0xf]
    %v2015 = vld [vmem:[%s13 + $0xc] sm:$0xf]
    %v2016 = vld [vmem:[%s13 + $0x10] sm:$0xf]
    %v2017 = vld [vmem:[%s13 + $0x14] sm:$0xf]
    %v2018 = vld [vmem:[%s13 + $0x18] sm:$0xf]
    %v2019 = vld [vmem:[%s13 + $0x1c] sm:$0xf]
    %v2020 = vld [vmem:[%s13 + $0x20] sm:$0xf]
    %v2021 = vld [vmem:[%s13 + $0x24] sm:$0xf]
    %v2022 = vld [vmem:[%s13 + $0x28] sm:$0xf]
    %v2023 = vld [vmem:[%s13 + $0x2c] sm:$0xf]
    %v2024 = vld [vmem:[%s13 + $0x30] sm:$0xf]
    %v2025 = vld [vmem:[%s13 + $0x34] sm:$0xf]
    %v2026 = vld [vmem:[%s13 + $0x38] sm:$0xf]
    %v2027 = vld [vmem:[%s13 + $0x3c] sm:$0xf]
    %v2028 = vld [vmem:[%s14 + $0xe] sm:$0x1]
    %v2029 = vlaneseq
    %v2030 = vshrl.u32 %v2029, 7
    %v2031 = vsub.s32 0, %v2030
    %v2032 = vrot.slane %v2028, %v2031
    %v2049 = vunpack.c.l.b16 %v2012
    %v2050 = vunpack.c.l.b16 %v2013
    %v2051 = vunpack.c.l.b16 %v2014
    %v2052 = vunpack.c.l.b16 %v2015
    %v2053 = vunpack.c.l.b16 %v2016
    %v2054 = vunpack.c.l.b16 %v2017
    %v2055 = vunpack.c.l.b16 %v2018
    %v2056 = vunpack.c.l.b16 %v2019
    %v2057 = vunpack.c.l.b16 %v2020
    %v2058 = vunpack.c.l.b16 %v2021
    %v2059 = vunpack.c.l.b16 %v2022
    %v2060 = vunpack.c.l.b16 %v2023
    %v2061 = vunpack.c.l.b16 %v2024
    %v2062 = vunpack.c.l.b16 %v2025
    %v2063 = vunpack.c.l.b16 %v2026
    %v2064 = vunpack.c.l.b16 %v2027
    %v2065 = vpack.c.b16 %v2050, %v2049
    %v2066 = vpack.c.b16 %v2052, %v2051
    %v2067 = vpack.c.b16 %v2054, %v2053
    %v2068 = vpack.c.b16 %v2056, %v2055
    %v2069 = vpack.c.b16 %v2058, %v2057
    %v2070 = vpack.c.b16 %v2060, %v2059
    %v2071 = vpack.c.b16 %v2062, %v2061
    %v2072 = vpack.c.b16 %v2064, %v2063
    %2081 = vmatprep.subr.bf16.mxu0 0
    %2082 = vmatpush1.bf16.msra.mxu0 %v2065
    %2083 = vmatprep.subr.bf16.mxu0 0
    %2084 = vmatpush1.bf16.msra.mxu0 %v2066
    %2085 = vmatprep.subr.bf16.mxu0 0
    %2086 = vmatpush1.bf16.msra.mxu0 %v2067
    %2087 = vmatprep.subr.bf16.mxu0 0
    %2088 = vmatpush1.bf16.msra.mxu0 %v2068
    %2089 = vmatprep.subr.bf16.mxu0 0
    %2090 = vmatpush1.bf16.msra.mxu0 %v2069
    %2091 = vmatprep.subr.bf16.mxu0 0
    %2092 = vmatpush1.bf16.msra.mxu0 %v2070
    %2093 = vmatprep.subr.bf16.mxu0 0
    %2094 = vmatpush1.bf16.msra.mxu0 %v2071
    %2095 = vmatprep.subr.bf16.mxu0 0
    %2096 = vmatpush1.bf16.msra.mxu0 %v2072
    %2097 = vmatprep.subr.bf16.mxu0 0
    %2098 = vmatpush1.bf16.msra.mxu0 0
    %2099 = vmatprep.subr.bf16.mxu0 0
    %2100 = vmatpush1.bf16.msra.mxu0 0
    %2101 = vmatprep.subr.bf16.mxu0 0
    %2102 = vmatpush1.bf16.msra.mxu0 0
    %2103 = vmatprep.subr.bf16.mxu0 0
    %2104 = vmatpush1.bf16.msra.mxu0 0
    %2105 = vmatprep.subr.bf16.mxu0 0
    %2106 = vmatpush1.bf16.msra.mxu0 0
    %2107 = vmatprep.subr.bf16.mxu0 0
    %2108 = vmatpush1.bf16.msra.mxu0 0
    %2109 = vmatprep.subr.bf16.mxu0 0
    %2110 = vmatpush1.bf16.msra.mxu0 0
    %2111 = vmatprep.subr.bf16.mxu0 0
    %2112 = vmatpush1.bf16.msra.mxu0 0
    %2113 = vmatprep.mubr.bf16.mxu0 0
    %2114 = vmatmul.mubr.bf16.gmra.mrb[0].mxu0 %v2011
    %v2115 = vpop.f32.mrb[0].mxu0
    %v2116 = vadd.f32 %v2032, %v2115
    %v2117 = vpop.f32.mrb[0].mxu0
    %v2118 = vpop.f32.mrb[0].mxu0
    %v2119 = vadd.f32 %v2032, %v2118
    %v2120 = vpop.f32.mrb[0].mxu0
    %2121 = vdwg.mxu0
    %v2122 = vadd.f32 %v1923, %v2116
    %v2123 = vadd.f32 %v1924, %v2119
    %v2124 = vld [vmem:[%s14 + $0xc] sm:$0x1]
    %v2125 = vld [vmem:[%s14 + $0xd] sm:$0x1]
    %v2126 = vsel %vm194, %v2122, 0.0
    %2127 = vadd.xlane.f32.xlu0 %v2126
    %v2128 = vpop.xlane.xlu0 %2127
    %v2129 = vsel %vm194, %v2123, 0.0
    %2130 = vadd.xlane.f32.xlu0 %v2129
    %v2131 = vpop.xlane.xlu0 %2130
    %v2132 = vmul.f32 %v2128, %v1055
    %v2133 = vmul.f32 %v2131, %v1055
    %v2134 = vsub.f32 %v2122, %v2132
    %v2135 = vsub.f32 %v2123, %v2133
    %v2136 = vmul.f32 %v2134, %v2134
    %v2137 = vmul.f32 %v2135, %v2135
    %v2138 = vsel %vm194, %v2136, 0.0
    %2139 = vadd.xlane.f32.xlu0 %v2138
    %v2140 = vpop.xlane.xlu0 %2139
    %v2141 = vsel %vm194, %v2137, 0.0
    %2142 = vadd.xlane.f32.xlu0 %v2141
    %v2143 = vpop.xlane.xlu0 %2142
    %v2144 = vmul.f32 %v2140, %v1055
    %v2145 = vmul.f32 %v2143, %v1055
    %v2146 = vadd.f32 %v2144, 1e-05
    %v2147 = vadd.f32 %v2145, 1e-05
    %v2148 = vrsqrt.pop %v2146
    %v2149 = vrsqrt.pop %v2147
    %v2150 = vmul.f32 %v2134, %v2148
    %v2151 = vmul.f32 %v2135, %v2149
    %v2152 = vlaneseq
    %v2153 = vshrl.u32 %v2152, 7
    %v2154 = vsub.s32 0, %v2153
    %v2155 = vrot.slane %v2124, %v2154
    %v2156 = vmul.f32 %v2150, %v2155
    %v2157 = vmul.f32 %v2151, %v2155
    %v2158 = vlaneseq
    %v2159 = vshrl.u32 %v2158, 7
    %v2160 = vsub.s32 0, %v2159
    %v2161 = vrot.slane %v2125, %v2160
    %v2162 = vadd.f32 %v2156, %v2161
    %v2163 = vadd.f32 %v2157, %v2161
    %v2164 = vpack.c.bf16 %v2163, %v2162
    %s2165 = scalar_lea.vmem %s6, 16
    %v2166 = vld [vmem:[%s2165] sm:$0xf]
    %v2167 = vld [vmem:[%s2165 + $0x4] sm:$0xf]
    %v2168 = vld [vmem:[%s2165 + $0x8] sm:$0xf]
    %v2169 = vld [vmem:[%s2165 + $0xc] sm:$0xf]
    %v2174 = vunpack.c.l.b16 %v2166
    %v2175 = vunpack.c.l.b16 %v2167
    %v2176 = vunpack.c.l.b16 %v2168
    %v2177 = vunpack.c.l.b16 %v2169
    %v2178 = vpack.c.b16 %v2175, %v2174
    %v2179 = vpack.c.b16 %v2177, %v2176
    %v2183 = vsel %vm194, %v2164, 0
    %2185 = vmatprep.subr.bf16.mxu0 0
    %2186 = vmatpush1.bf16.msra.mxu0 %v2178
    %2187 = vmatprep.subr.bf16.mxu0 0
    %2188 = vmatpush1.bf16.msra.mxu0 %v2179
    %2189 = vmatprep.subr.bf16.mxu0 0
    %2190 = vmatpush1.bf16.msra.mxu0 0
    %2191 = vmatprep.subr.bf16.mxu0 0
    %2192 = vmatpush1.bf16.msra.mxu0 0
    %2193 = vmatprep.subr.bf16.mxu0 0
    %2194 = vmatpush1.bf16.msra.mxu0 0
    %2195 = vmatprep.subr.bf16.mxu0 0
    %2196 = vmatpush1.bf16.msra.mxu0 0
    %2197 = vmatprep.subr.bf16.mxu0 0
    %2198 = vmatpush1.bf16.msra.mxu0 0
    %2199 = vmatprep.subr.bf16.mxu0 0
    %2200 = vmatpush1.bf16.msra.mxu0 0
    %2201 = vmatprep.subr.bf16.mxu0 0
    %2202 = vmatpush1.bf16.msra.mxu0 0
    %2203 = vmatprep.subr.bf16.mxu0 0
    %2204 = vmatpush1.bf16.msra.mxu0 0
    %2205 = vmatprep.subr.bf16.mxu0 0
    %2206 = vmatpush1.bf16.msra.mxu0 0
    %2207 = vmatprep.subr.bf16.mxu0 0
    %2208 = vmatpush1.bf16.msra.mxu0 0
    %2209 = vmatprep.subr.bf16.mxu0 0
    %2210 = vmatpush1.bf16.msra.mxu0 0
    %2211 = vmatprep.subr.bf16.mxu0 0
    %2212 = vmatpush1.bf16.msra.mxu0 0
    %2213 = vmatprep.subr.bf16.mxu0 0
    %2214 = vmatpush1.bf16.msra.mxu0 0
    %2215 = vmatprep.subr.bf16.mxu0 0
    %2216 = vmatpush1.bf16.msra.mxu0 0
    %2217 = vmatprep.mubr.bf16.mxu0 0
    %2218 = vmatmul.mubr.bf16.gmra.mrb[0].mxu0 %v2183
    %v2219 = vpop.f32.mrb[0].mxu0
    %v2220 = vadd.f32 0.0, %v2219
    %v2221 = vpop.f32.mrb[0].mxu0
    %v2222 = vpop.f32.mrb[0].mxu0
    %v2223 = vadd.f32 0.0, %v2222
    %v2224 = vpop.f32.mrb[0].mxu0
    %2225 = vdwg.mxu0
    %s2226 = scalar_lea.vmem %s14, 16
    %v2227 = vld [vmem:[%s2226] sm:$0x1]
    %v2228 = vlaneseq
    %v2229 = vshrl.u32 %v2228, 7
    %v2230 = vsub.s32 0, %v2229
    %v2231 = vrot.slane %v2227, %v2230
    %v2232 = vadd.f32 %v2220, %v2231
    %v2233 = vadd.f32 %v2223, %v2231
    %v2234 = vld [vmem:[%s2226 + $0x1] sm:$0x1]
    %v2235 = vlaneseq
    %v2236 = vshrl.u32 %v2235, 7
    %v2237 = vsub.s32 0, %v2236
    %v2238 = vrot.slane %v2234, %v2237
    %2240 = vrot.lane.b32.xlu0 %v2238, 32
    %v2241 = vpop.permute.xlu0 %2240
    %v2243 = vadd.f32 %v2220, %v2241
    %v2244 = vadd.f32 %v2223, %v2241
    %v2245 = vld [vmem:[%s2226 + $0x2] sm:$0x1]
    %v2246 = vlaneseq
    %v2247 = vshrl.u32 %v2246, 7
    %v2248 = vsub.s32 0, %v2247
    %v2249 = vrot.slane %v2245, %v2248
    %2251 = vrot.lane.b32.xlu0 %v2249, 64
    %v2252 = vpop.permute.xlu0 %2251
    %v2254 = vadd.f32 %v2220, %v2252
    %v2255 = vadd.f32 %v2223, %v2252
    %v2256 = vld [vmem:[%s2226 + $0x3] sm:$0x1]
    %v2257 = vpack.c.bf16 %v2233, %v2232
    %v2258 = vpack.c.bf16 %v2244, %v2243
    %v2259 = vpack.c.bf16 %v2255, %v2254
    %2261 = vrot.lane.b32.xlu0 %v2258, 96
    %v2262 = vpop.permute.xlu0 %2261
    %v2264 = vsel %vm336, %v2257, 0
    %v2267 = vsel %vm336, %v2262, 0
    %2269 = vmatprep.subr.bf16.mxu0 0
    %2270 = vmatpush1.bf16.xpose.msra.mxu0 %v2267
    %2271 = vmatprep.subr.bf16.mxu0 0
    %2272 = vmatpush1.bf16.xpose.msra.mxu0 0
    %2273 = vmatprep.subr.bf16.mxu0 0
    %2274 = vmatpush1.bf16.xpose.msra.mxu0 0
    %2275 = vmatprep.subr.bf16.mxu0 0
    %2276 = vmatpush1.bf16.xpose.msra.mxu0 0
    %2277 = vmatprep.subr.bf16.mxu0 0
    %2278 = vmatpush1.bf16.xpose.msra.mxu0 0
    %2279 = vmatprep.subr.bf16.mxu0 0
    %2280 = vmatpush1.bf16.xpose.msra.mxu0 0
    %2281 = vmatprep.subr.bf16.mxu0 0
    %2282 = vmatpush1.bf16.xpose.msra.mxu0 0
    %2283 = vmatprep.subr.bf16.mxu0 0
    %2284 = vmatpush1.bf16.xpose.msra.mxu0 0
    %2285 = vmatprep.subr.bf16.mxu0 0
    %2286 = vmatpush1.bf16.xpose.msra.mxu0 0
    %2287 = vmatprep.subr.bf16.mxu0 0
    %2288 = vmatpush1.bf16.xpose.msra.mxu0 0
    %2289 = vmatprep.subr.bf16.mxu0 0
    %2290 = vmatpush1.bf16.xpose.msra.mxu0 0
    %2291 = vmatprep.subr.bf16.mxu0 0
    %2292 = vmatpush1.bf16.xpose.msra.mxu0 0
    %2293 = vmatprep.subr.bf16.mxu0 0
    %2294 = vmatpush1.bf16.xpose.msra.mxu0 0
    %2295 = vmatprep.subr.bf16.mxu0 0
    %2296 = vmatpush1.bf16.xpose.msra.mxu0 0
    %2297 = vmatprep.subr.bf16.mxu0 0
    %2298 = vmatpush1.bf16.xpose.msra.mxu0 0
    %2299 = vmatprep.subr.bf16.mxu0 0
    %2300 = vmatpush1.bf16.xpose.msra.mxu0 0
    %2301 = vmatprep.mubr.bf16.mxu0 0
    %2302 = vmatmul.mubr.bf16.gmra.mrb[0].mxu0 %v2264
    %v2303 = vpop.f32.mrb[0].mxu0
    %v2304 = vadd.f32 0.0, %v2303
    %v2305 = vpop.f32.mrb[0].mxu0
    %v2306 = vpop.f32.mrb[0].mxu0
    %v2307 = vadd.f32 0.0, %v2306
    %v2308 = vpop.f32.mrb[0].mxu0
    %2309 = vdwg.mxu0
    %v2310 = vmul.f32 %v2304, 0.35355338
    %v2311 = vmul.f32 %v2307, 0.35355338
    %v2312 = vadd.f32 %v2310, %v171
    %v2313 = vadd.f32 %v2311, %v172
    %v2314 = vsel %vm388, %v2312, -inf
    %2315 = vmax.xlane.f32.xlu0 %v2314
    %v2316 = vpop.xlane.xlu0 %2315
    %v2317 = vsel %vm388, %v2313, -inf
    %2318 = vmax.xlane.f32.xlu0 %v2317
    %v2319 = vpop.xlane.xlu0 %2318
    %v2320 = vsub.f32 %v2312, %v2316
    %v2321 = vsub.f32 %v2313, %v2319
    %v2322 = vmul.f32 %v2320, 1.442695
    %v2323 = vpow.pop %v2322
    %v2324 = vmul.f32 %v2321, 1.442695
    %v2325 = vpow.pop %v2324
    %v2326 = vsel %vm388, %v2323, 0.0
    %2327 = vadd.xlane.f32.xlu0 %v2326
    %v2328 = vpop.xlane.xlu0 %2327
    %v2329 = vsel %vm388, %v2325, 0.0
    %2330 = vadd.xlane.f32.xlu0 %v2329
    %v2331 = vpop.xlane.xlu0 %2330
    %v2332 = vrcp.pop %v2328
    %v2333 = vrcp.pop %v2331
    %v2334 = vmul.f32 %v2323, %v2332
    %v2335 = vmul.f32 %v2325, %v2333
    %v2336 = vpack.c.bf16 %v2335, %v2334
    %2338 = vrot.lane.b32.xlu0 %v2259, 64
    %v2339 = vpop.permute.xlu0 %2338
    %v2342 = vsel %vm388, %v2336, 0
    %2344 = vmatprep.subr.bf16.mxu0 0
    %2345 = vmatpush1.bf16.msra.mxu0 %v2339
    %2346 = vmatprep.subr.bf16.mxu0 0
    %2347 = vmatpush1.bf16.msra.mxu0 0
    %2348 = vmatprep.subr.bf16.mxu0 0
    %2349 = vmatpush1.bf16.msra.mxu0 0
    %2350 = vmatprep.subr.bf16.mxu0 0
    %2351 = vmatpush1.bf16.msra.mxu0 0
    %2352 = vmatprep.subr.bf16.mxu0 0
    %2353 = vmatpush1.bf16.msra.mxu0 0
    %2354 = vmatprep.subr.bf16.mxu0 0
    %2355 = vmatpush1.bf16.msra.mxu0 0
    %2356 = vmatprep.subr.bf16.mxu0 0
    %2357 = vmatpush1.bf16.msra.mxu0 0
    %2358 = vmatprep.subr.bf16.mxu0 0
    %2359 = vmatpush1.bf16.msra.mxu0 0
    %2360 = vmatprep.subr.bf16.mxu0 0
    %2361 = vmatpush1.bf16.msra.mxu0 0
    %2362 = vmatprep.subr.bf16.mxu0 0
    %2363 = vmatpush1.bf16.msra.mxu0 0
    %2364 = vmatprep.subr.bf16.mxu0 0
    %2365 = vmatpush1.bf16.msra.mxu0 0
    %2366 = vmatprep.subr.bf16.mxu0 0
    %2367 = vmatpush1.bf16.msra.mxu0 0
    %2368 = vmatprep.subr.bf16.mxu0 0
    %2369 = vmatpush1.bf16.msra.mxu0 0
    %2370 = vmatprep.subr.bf16.mxu0 0
    %2371 = vmatpush1.bf16.msra.mxu0 0
    %2372 = vmatprep.subr.bf16.mxu0 0
    %2373 = vmatpush1.bf16.msra.mxu0 0
    %2374 = vmatprep.subr.bf16.mxu0 0
    %2375 = vmatpush1.bf16.msra.mxu0 0
    %2376 = vmatprep.mubr.bf16.mxu0 0
    %2377 = vmatmul.mubr.bf16.gmra.mrb[0].mxu0 %v2342
    %v2378 = vpop.f32.mrb[0].mxu0
    %v2379 = vadd.f32 0.0, %v2378
    %v2380 = vpop.f32.mrb[0].mxu0
    %v2381 = vpop.f32.mrb[0].mxu0
    %v2382 = vadd.f32 0.0, %v2381
    %v2383 = vpop.f32.mrb[0].mxu0
    %2384 = vdwg.mxu0
    %v2385 = vpack.c.bf16 %v2382, %v2379
    %s2386 = scalar_lea.vmem %s7, 16
    %v2387 = vld [vmem:[%s2386] sm:$0xf]
    %v2389 = vsel %vm336, %v2385, 0
    %v2392 = vsel %vm465, %v2387, 0
    %2394 = vmatprep.subr.bf16.mxu0 0
    %2395 = vmatpush1.bf16.msra.mxu0 %v2392
    %2396 = vmatprep.subr.bf16.mxu0 0
    %2397 = vmatpush1.bf16.msra.mxu0 0
    %2398 = vmatprep.subr.bf16.mxu0 0
    %2399 = vmatpush1.bf16.msra.mxu0 0
    %2400 = vmatprep.subr.bf16.mxu0 0
    %2401 = vmatpush1.bf16.msra.mxu0 0
    %2402 = vmatprep.subr.bf16.mxu0 0
    %2403 = vmatpush1.bf16.msra.mxu0 0
    %2404 = vmatprep.subr.bf16.mxu0 0
    %2405 = vmatpush1.bf16.msra.mxu0 0
    %2406 = vmatprep.subr.bf16.mxu0 0
    %2407 = vmatpush1.bf16.msra.mxu0 0
    %2408 = vmatprep.subr.bf16.mxu0 0
    %2409 = vmatpush1.bf16.msra.mxu0 0
    %2410 = vmatprep.subr.bf16.mxu0 0
    %2411 = vmatpush1.bf16.msra.mxu0 0
    %2412 = vmatprep.subr.bf16.mxu0 0
    %2413 = vmatpush1.bf16.msra.mxu0 0
    %2414 = vmatprep.subr.bf16.mxu0 0
    %2415 = vmatpush1.bf16.msra.mxu0 0
    %2416 = vmatprep.subr.bf16.mxu0 0
    %2417 = vmatpush1.bf16.msra.mxu0 0
    %2418 = vmatprep.subr.bf16.mxu0 0
    %2419 = vmatpush1.bf16.msra.mxu0 0
    %2420 = vmatprep.subr.bf16.mxu0 0
    %2421 = vmatpush1.bf16.msra.mxu0 0
    %2422 = vmatprep.subr.bf16.mxu0 0
    %2423 = vmatpush1.bf16.msra.mxu0 0
    %2424 = vmatprep.subr.bf16.mxu0 0
    %2425 = vmatpush1.bf16.msra.mxu0 0
    %2426 = vmatprep.mubr.bf16.mxu0 0
    %2427 = vmatmul.mubr.bf16.gmra.mrb[0].mxu0 %v2389
    %v2428 = vpop.f32.mrb[0].mxu0
    %v2429 = vadd.f32 0.0, %v2428
    %v2430 = vpop.f32.mrb[0].mxu0
    %v2431 = vpop.f32.mrb[0].mxu0
    %v2432 = vadd.f32 0.0, %v2431
    %v2433 = vpop.f32.mrb[0].mxu0
    %2434 = vdwg.mxu0
    %v2435 = vlaneseq
    %v2436 = vshrl.u32 %v2435, 7
    %v2437 = vsub.s32 0, %v2436
    %v2438 = vrot.slane %v2256, %v2437
    %v2439 = vadd.f32 %v2438, %v2429
    %v2440 = vadd.f32 %v2438, %v2432
    %2442 = vrot.lane.b32.xlu0 %v2257, 120
    %v2443 = vpop.permute.xlu0 %2442
    %2444 = vrot.lane.b32.xlu0 %v2258, 88
    %v2445 = vpop.permute.xlu0 %2444
    %v2447 = vsel %vm336, %v2443, 0
    %v2450 = vsel %vm336, %v2445, 0
    %2452 = vmatprep.subr.bf16.mxu0 0
    %2453 = vmatpush1.bf16.xpose.msra.mxu0 %v2450
    %2454 = vmatprep.subr.bf16.mxu0 0
    %2455 = vmatpush1.bf16.xpose.msra.mxu0 0
    %2456 = vmatprep.subr.bf16.mxu0 0
    %2457 = vmatpush1.bf16.xpose.msra.mxu0 0
    %2458 = vmatprep.subr.bf16.mxu0 0
    %2459 = vmatpush1.bf16.xpose.msra.mxu0 0
    %2460 = vmatprep.subr.bf16.mxu0 0
    %2461 = vmatpush1.bf16.xpose.msra.mxu0 0
    %2462 = vmatprep.subr.bf16.mxu0 0
    %2463 = vmatpush1.bf16.xpose.msra.mxu0 0
    %2464 = vmatprep.subr.bf16.mxu0 0
    %2465 = vmatpush1.bf16.xpose.msra.mxu0 0
    %2466 = vmatprep.subr.bf16.mxu0 0
    %2467 = vmatpush1.bf16.xpose.msra.mxu0 0
    %2468 = vmatprep.subr.bf16.mxu0 0
    %2469 = vmatpush1.bf16.xpose.msra.mxu0 0
    %2470 = vmatprep.subr.bf16.mxu0 0
    %2471 = vmatpush1.bf16.xpose.msra.mxu0 0
    %2472 = vmatprep.subr.bf16.mxu0 0
    %2473 = vmatpush1.bf16.xpose.msra.mxu0 0
    %2474 = vmatprep.subr.bf16.mxu0 0
    %2475 = vmatpush1.bf16.xpose.msra.mxu0 0
    %2476 = vmatprep.subr.bf16.mxu0 0
    %2477 = vmatpush1.bf16.xpose.msra.mxu0 0
    %2478 = vmatprep.subr.bf16.mxu0 0
    %2479 = vmatpush1.bf16.xpose.msra.mxu0 0
    %2480 = vmatprep.subr.bf16.mxu0 0
    %2481 = vmatpush1.bf16.xpose.msra.mxu0 0
    %2482 = vmatprep.subr.bf16.mxu0 0
    %2483 = vmatpush1.bf16.xpose.msra.mxu0 0
    %2484 = vmatprep.mubr.bf16.mxu0 0
    %2485 = vmatmul.mubr.bf16.gmra.mrb[0].mxu0 %v2447
    %v2486 = vpop.f32.mrb[0].mxu0
    %v2487 = vadd.f32 0.0, %v2486
    %v2488 = vpop.f32.mrb[0].mxu0
    %v2489 = vpop.f32.mrb[0].mxu0
    %v2490 = vadd.f32 0.0, %v2489
    %v2491 = vpop.f32.mrb[0].mxu0
    %2492 = vdwg.mxu0
    %v2493 = vmul.f32 %v2487, 0.35355338
    %v2494 = vmul.f32 %v2490, 0.35355338
    %v2495 = vadd.f32 %v2493, %v171
    %v2496 = vadd.f32 %v2494, %v172
    %v2497 = vsel %vm388, %v2495, -inf
    %2498 = vmax.xlane.f32.xlu0 %v2497
    %v2499 = vpop.xlane.xlu0 %2498
    %v2500 = vsel %vm388, %v2496, -inf
    %2501 = vmax.xlane.f32.xlu0 %v2500
    %v2502 = vpop.xlane.xlu0 %2501
    %v2503 = vsub.f32 %v2495, %v2499
    %v2504 = vsub.f32 %v2496, %v2502
    %v2505 = vmul.f32 %v2503, 1.442695
    %v2506 = vpow.pop %v2505
    %v2507 = vmul.f32 %v2504, 1.442695
    %v2508 = vpow.pop %v2507
    %v2509 = vsel %vm388, %v2506, 0.0
    %2510 = vadd.xlane.f32.xlu0 %v2509
    %v2511 = vpop.xlane.xlu0 %2510
    %v2512 = vsel %vm388, %v2508, 0.0
    %2513 = vadd.xlane.f32.xlu0 %v2512
    %v2514 = vpop.xlane.xlu0 %2513
    %v2515 = vrcp.pop %v2511
    %v2516 = vrcp.pop %v2514
    %v2517 = vmul.f32 %v2506, %v2515
    %v2518 = vmul.f32 %v2508, %v2516
    %v2519 = vpack.c.bf16 %v2518, %v2517
    %2520 = vrot.lane.b32.xlu0 %v2259, 56
    %v2521 = vpop.permute.xlu0 %2520
    %v2524 = vsel %vm388, %v2519, 0
    %2526 = vmatprep.subr.bf16.mxu0 0
    %2527 = vmatpush1.bf16.msra.mxu0 %v2521
    %2528 = vmatprep.subr.bf16.mxu0 0
    %2529 = vmatpush1.bf16.msra.mxu0 0
    %2530 = vmatprep.subr.bf16.mxu0 0
    %2531 = vmatpush1.bf16.msra.mxu0 0
    %2532 = vmatprep.subr.bf16.mxu0 0
    %2533 = vmatpush1.bf16.msra.mxu0 0
    %2534 = vmatprep.subr.bf16.mxu0 0
    %2535 = vmatpush1.bf16.msra.mxu0 0
    %2536 = vmatprep.subr.bf16.mxu0 0
    %2537 = vmatpush1.bf16.msra.mxu0 0
    %2538 = vmatprep.subr.bf16.mxu0 0
    %2539 = vmatpush1.bf16.msra.mxu0 0
    %2540 = vmatprep.subr.bf16.mxu0 0
    %2541 = vmatpush1.bf16.msra.mxu0 0
    %2542 = vmatprep.subr.bf16.mxu0 0
    %2543 = vmatpush1.bf16.msra.mxu0 0
    %2544 = vmatprep.subr.bf16.mxu0 0
    %2545 = vmatpush1.bf16.msra.mxu0 0
    %2546 = vmatprep.subr.bf16.mxu0 0
    %2547 = vmatpush1.bf16.msra.mxu0 0
    %2548 = vmatprep.subr.bf16.mxu0 0
    %2549 = vmatpush1.bf16.msra.mxu0 0
    %2550 = vmatprep.subr.bf16.mxu0 0
    %2551 = vmatpush1.bf16.msra.mxu0 0
    %2552 = vmatprep.subr.bf16.mxu0 0
    %2553 = vmatpush1.bf16.msra.mxu0 0
    %2554 = vmatprep.subr.bf16.mxu0 0
    %2555 = vmatpush1.bf16.msra.mxu0 0
    %2556 = vmatprep.subr.bf16.mxu0 0
    %2557 = vmatpush1.bf16.msra.mxu0 0
    %2558 = vmatprep.mubr.bf16.mxu0 0
    %2559 = vmatmul.mubr.bf16.gmra.mrb[0].mxu0 %v2524
    %v2560 = vpop.f32.mrb[0].mxu0
    %v2561 = vadd.f32 0.0, %v2560
    %v2562 = vpop.f32.mrb[0].mxu0
    %v2563 = vpop.f32.mrb[0].mxu0
    %v2564 = vadd.f32 0.0, %v2563
    %v2565 = vpop.f32.mrb[0].mxu0
    %2566 = vdwg.mxu0
    %v2567 = vpack.c.bf16 %v2564, %v2561
    %v2568 = vld [vmem:[%s2386 + $0x4] sm:$0xf]
    %v2570 = vsel %vm336, %v2567, 0
    %v2573 = vsel %vm465, %v2568, 0
    %2575 = vmatprep.subr.bf16.mxu0 0
    %2576 = vmatpush1.bf16.msra.mxu0 %v2573
    %2577 = vmatprep.subr.bf16.mxu0 0
    %2578 = vmatpush1.bf16.msra.mxu0 0
    %2579 = vmatprep.subr.bf16.mxu0 0
    %2580 = vmatpush1.bf16.msra.mxu0 0
    %2581 = vmatprep.subr.bf16.mxu0 0
    %2582 = vmatpush1.bf16.msra.mxu0 0
    %2583 = vmatprep.subr.bf16.mxu0 0
    %2584 = vmatpush1.bf16.msra.mxu0 0
    %2585 = vmatprep.subr.bf16.mxu0 0
    %2586 = vmatpush1.bf16.msra.mxu0 0
    %2587 = vmatprep.subr.bf16.mxu0 0
    %2588 = vmatpush1.bf16.msra.mxu0 0
    %2589 = vmatprep.subr.bf16.mxu0 0
    %2590 = vmatpush1.bf16.msra.mxu0 0
    %2591 = vmatprep.subr.bf16.mxu0 0
    %2592 = vmatpush1.bf16.msra.mxu0 0
    %2593 = vmatprep.subr.bf16.mxu0 0
    %2594 = vmatpush1.bf16.msra.mxu0 0
    %2595 = vmatprep.subr.bf16.mxu0 0
    %2596 = vmatpush1.bf16.msra.mxu0 0
    %2597 = vmatprep.subr.bf16.mxu0 0
    %2598 = vmatpush1.bf16.msra.mxu0 0
    %2599 = vmatprep.subr.bf16.mxu0 0
    %2600 = vmatpush1.bf16.msra.mxu0 0
    %2601 = vmatprep.subr.bf16.mxu0 0
    %2602 = vmatpush1.bf16.msra.mxu0 0
    %2603 = vmatprep.subr.bf16.mxu0 0
    %2604 = vmatpush1.bf16.msra.mxu0 0
    %2605 = vmatprep.subr.bf16.mxu0 0
    %2606 = vmatpush1.bf16.msra.mxu0 0
    %2607 = vmatprep.mubr.bf16.mxu0 0
    %2608 = vmatmul.mubr.bf16.gmra.mrb[0].mxu0 %v2570
    %v2609 = vpop.f32.mrb[0].mxu0
    %v2610 = vadd.f32 0.0, %v2609
    %v2611 = vpop.f32.mrb[0].mxu0
    %v2612 = vpop.f32.mrb[0].mxu0
    %v2613 = vadd.f32 0.0, %v2612
    %v2614 = vpop.f32.mrb[0].mxu0
    %2615 = vdwg.mxu0
    %v2616 = vadd.f32 %v2439, %v2610
    %v2617 = vadd.f32 %v2440, %v2613
    %2618 = vrot.lane.b32.xlu0 %v2257, 112
    %v2619 = vpop.permute.xlu0 %2618
    %2620 = vrot.lane.b32.xlu0 %v2258, 80
    %v2621 = vpop.permute.xlu0 %2620
    %v2623 = vsel %vm336, %v2619, 0
    %v2626 = vsel %vm336, %v2621, 0
    %2628 = vmatprep.subr.bf16.mxu0 0
    %2629 = vmatpush1.bf16.xpose.msra.mxu0 %v2626
    %2630 = vmatprep.subr.bf16.mxu0 0
    %2631 = vmatpush1.bf16.xpose.msra.mxu0 0
    %2632 = vmatprep.subr.bf16.mxu0 0
    %2633 = vmatpush1.bf16.xpose.msra.mxu0 0
    %2634 = vmatprep.subr.bf16.mxu0 0
    %2635 = vmatpush1.bf16.xpose.msra.mxu0 0
    %2636 = vmatprep.subr.bf16.mxu0 0
    %2637 = vmatpush1.bf16.xpose.msra.mxu0 0
    %2638 = vmatprep.subr.bf16.mxu0 0
    %2639 = vmatpush1.bf16.xpose.msra.mxu0 0
    %2640 = vmatprep.subr.bf16.mxu0 0
    %2641 = vmatpush1.bf16.xpose.msra.mxu0 0
    %2642 = vmatprep.subr.bf16.mxu0 0
    %2643 = vmatpush1.bf16.xpose.msra.mxu0 0
    %2644 = vmatprep.subr.bf16.mxu0 0
    %2645 = vmatpush1.bf16.xpose.msra.mxu0 0
    %2646 = vmatprep.subr.bf16.mxu0 0
    %2647 = vmatpush1.bf16.xpose.msra.mxu0 0
    %2648 = vmatprep.subr.bf16.mxu0 0
    %2649 = vmatpush1.bf16.xpose.msra.mxu0 0
    %2650 = vmatprep.subr.bf16.mxu0 0
    %2651 = vmatpush1.bf16.xpose.msra.mxu0 0
    %2652 = vmatprep.subr.bf16.mxu0 0
    %2653 = vmatpush1.bf16.xpose.msra.mxu0 0
    %2654 = vmatprep.subr.bf16.mxu0 0
    %2655 = vmatpush1.bf16.xpose.msra.mxu0 0
    %2656 = vmatprep.subr.bf16.mxu0 0
    %2657 = vmatpush1.bf16.xpose.msra.mxu0 0
    %2658 = vmatprep.subr.bf16.mxu0 0
    %2659 = vmatpush1.bf16.xpose.msra.mxu0 0
    %2660 = vmatprep.mubr.bf16.mxu0 0
    %2661 = vmatmul.mubr.bf16.gmra.mrb[0].mxu0 %v2623
    %v2662 = vpop.f32.mrb[0].mxu0
    %v2663 = vadd.f32 0.0, %v2662
    %v2664 = vpop.f32.mrb[0].mxu0
    %v2665 = vpop.f32.mrb[0].mxu0
    %v2666 = vadd.f32 0.0, %v2665
    %v2667 = vpop.f32.mrb[0].mxu0
    %2668 = vdwg.mxu0
    %v2669 = vmul.f32 %v2663, 0.35355338
    %v2670 = vmul.f32 %v2666, 0.35355338
    %v2671 = vadd.f32 %v2669, %v171
    %v2672 = vadd.f32 %v2670, %v172
    %v2673 = vsel %vm388, %v2671, -inf
    %2674 = vmax.xlane.f32.xlu0 %v2673
    %v2675 = vpop.xlane.xlu0 %2674
    %v2676 = vsel %vm388, %v2672, -inf
    %2677 = vmax.xlane.f32.xlu0 %v2676
    %v2678 = vpop.xlane.xlu0 %2677
    %v2679 = vsub.f32 %v2671, %v2675
    %v2680 = vsub.f32 %v2672, %v2678
    %v2681 = vmul.f32 %v2679, 1.442695
    %v2682 = vpow.pop %v2681
    %v2683 = vmul.f32 %v2680, 1.442695
    %v2684 = vpow.pop %v2683
    %v2685 = vsel %vm388, %v2682, 0.0
    %2686 = vadd.xlane.f32.xlu0 %v2685
    %v2687 = vpop.xlane.xlu0 %2686
    %v2688 = vsel %vm388, %v2684, 0.0
    %2689 = vadd.xlane.f32.xlu0 %v2688
    %v2690 = vpop.xlane.xlu0 %2689
    %v2691 = vrcp.pop %v2687
    %v2692 = vrcp.pop %v2690
    %v2693 = vmul.f32 %v2682, %v2691
    %v2694 = vmul.f32 %v2684, %v2692
    %v2695 = vpack.c.bf16 %v2694, %v2693
    %2696 = vrot.lane.b32.xlu0 %v2259, 48
    %v2697 = vpop.permute.xlu0 %2696
    %v2700 = vsel %vm388, %v2695, 0
    %2702 = vmatprep.subr.bf16.mxu0 0
    %2703 = vmatpush1.bf16.msra.mxu0 %v2697
    %2704 = vmatprep.subr.bf16.mxu0 0
    %2705 = vmatpush1.bf16.msra.mxu0 0
    %2706 = vmatprep.subr.bf16.mxu0 0
    %2707 = vmatpush1.bf16.msra.mxu0 0
    %2708 = vmatprep.subr.bf16.mxu0 0
    %2709 = vmatpush1.bf16.msra.mxu0 0
    %2710 = vmatprep.subr.bf16.mxu0 0
    %2711 = vmatpush1.bf16.msra.mxu0 0
    %2712 = vmatprep.subr.bf16.mxu0 0
    %2713 = vmatpush1.bf16.msra.mxu0 0
    %2714 = vmatprep.subr.bf16.mxu0 0
    %2715 = vmatpush1.bf16.msra.mxu0 0
    %2716 = vmatprep.subr.bf16.mxu0 0
    %2717 = vmatpush1.bf16.msra.mxu0 0
    %2718 = vmatprep.subr.bf16.mxu0 0
    %2719 = vmatpush1.bf16.msra.mxu0 0
    %2720 = vmatprep.subr.bf16.mxu0 0
    %2721 = vmatpush1.bf16.msra.mxu0 0
    %2722 = vmatprep.subr.bf16.mxu0 0
    %2723 = vmatpush1.bf16.msra.mxu0 0
    %2724 = vmatprep.subr.bf16.mxu0 0
    %2725 = vmatpush1.bf16.msra.mxu0 0
    %2726 = vmatprep.subr.bf16.mxu0 0
    %2727 = vmatpush1.bf16.msra.mxu0 0
    %2728 = vmatprep.subr.bf16.mxu0 0
    %2729 = vmatpush1.bf16.msra.mxu0 0
    %2730 = vmatprep.subr.bf16.mxu0 0
    %2731 = vmatpush1.bf16.msra.mxu0 0
    %2732 = vmatprep.subr.bf16.mxu0 0
    %2733 = vmatpush1.bf16.msra.mxu0 0
    %2734 = vmatprep.mubr.bf16.mxu0 0
    %2735 = vmatmul.mubr.bf16.gmra.mrb[0].mxu0 %v2700
    %v2736 = vpop.f32.mrb[0].mxu0
    %v2737 = vadd.f32 0.0, %v2736
    %v2738 = vpop.f32.mrb[0].mxu0
    %v2739 = vpop.f32.mrb[0].mxu0
    %v2740 = vadd.f32 0.0, %v2739
    %v2741 = vpop.f32.mrb[0].mxu0
    %2742 = vdwg.mxu0
    %v2743 = vpack.c.bf16 %v2740, %v2737
    %v2744 = vld [vmem:[%s2386 + $0x8] sm:$0xf]
    %v2746 = vsel %vm336, %v2743, 0
    %v2749 = vsel %vm465, %v2744, 0
    %2751 = vmatprep.subr.bf16.mxu0 0
    %2752 = vmatpush1.bf16.msra.mxu0 %v2749
    %2753 = vmatprep.subr.bf16.mxu0 0
    %2754 = vmatpush1.bf16.msra.mxu0 0
    %2755 = vmatprep.subr.bf16.mxu0 0
    %2756 = vmatpush1.bf16.msra.mxu0 0
    %2757 = vmatprep.subr.bf16.mxu0 0
    %2758 = vmatpush1.bf16.msra.mxu0 0
    %2759 = vmatprep.subr.bf16.mxu0 0
    %2760 = vmatpush1.bf16.msra.mxu0 0
    %2761 = vmatprep.subr.bf16.mxu0 0
    %2762 = vmatpush1.bf16.msra.mxu0 0
    %2763 = vmatprep.subr.bf16.mxu0 0
    %2764 = vmatpush1.bf16.msra.mxu0 0
    %2765 = vmatprep.subr.bf16.mxu0 0
    %2766 = vmatpush1.bf16.msra.mxu0 0
    %2767 = vmatprep.subr.bf16.mxu0 0
    %2768 = vmatpush1.bf16.msra.mxu0 0
    %2769 = vmatprep.subr.bf16.mxu0 0
    %2770 = vmatpush1.bf16.msra.mxu0 0
    %2771 = vmatprep.subr.bf16.mxu0 0
    %2772 = vmatpush1.bf16.msra.mxu0 0
    %2773 = vmatprep.subr.bf16.mxu0 0
    %2774 = vmatpush1.bf16.msra.mxu0 0
    %2775 = vmatprep.subr.bf16.mxu0 0
    %2776 = vmatpush1.bf16.msra.mxu0 0
    %2777 = vmatprep.subr.bf16.mxu0 0
    %2778 = vmatpush1.bf16.msra.mxu0 0
    %2779 = vmatprep.subr.bf16.mxu0 0
    %2780 = vmatpush1.bf16.msra.mxu0 0
    %2781 = vmatprep.subr.bf16.mxu0 0
    %2782 = vmatpush1.bf16.msra.mxu0 0
    %2783 = vmatprep.mubr.bf16.mxu0 0
    %2784 = vmatmul.mubr.bf16.gmra.mrb[0].mxu0 %v2746
    %v2785 = vpop.f32.mrb[0].mxu0
    %v2786 = vadd.f32 0.0, %v2785
    %v2787 = vpop.f32.mrb[0].mxu0
    %v2788 = vpop.f32.mrb[0].mxu0
    %v2789 = vadd.f32 0.0, %v2788
    %v2790 = vpop.f32.mrb[0].mxu0
    %2791 = vdwg.mxu0
    %v2792 = vadd.f32 %v2616, %v2786
    %v2793 = vadd.f32 %v2617, %v2789
    %2794 = vrot.lane.b32.xlu0 %v2257, 104
    %v2795 = vpop.permute.xlu0 %2794
    %2796 = vrot.lane.b32.xlu0 %v2258, 72
    %v2797 = vpop.permute.xlu0 %2796
    %v2799 = vsel %vm336, %v2795, 0
    %v2802 = vsel %vm336, %v2797, 0
    %2804 = vmatprep.subr.bf16.mxu0 0
    %2805 = vmatpush1.bf16.xpose.msra.mxu0 %v2802
    %2806 = vmatprep.subr.bf16.mxu0 0
    %2807 = vmatpush1.bf16.xpose.msra.mxu0 0
    %2808 = vmatprep.subr.bf16.mxu0 0
    %2809 = vmatpush1.bf16.xpose.msra.mxu0 0
    %2810 = vmatprep.subr.bf16.mxu0 0
    %2811 = vmatpush1.bf16.xpose.msra.mxu0 0
    %2812 = vmatprep.subr.bf16.mxu0 0
    %2813 = vmatpush1.bf16.xpose.msra.mxu0 0
    %2814 = vmatprep.subr.bf16.mxu0 0
    %2815 = vmatpush1.bf16.xpose.msra.mxu0 0
    %2816 = vmatprep.subr.bf16.mxu0 0
    %2817 = vmatpush1.bf16.xpose.msra.mxu0 0
    %2818 = vmatprep.subr.bf16.mxu0 0
    %2819 = vmatpush1.bf16.xpose.msra.mxu0 0
    %2820 = vmatprep.subr.bf16.mxu0 0
    %2821 = vmatpush1.bf16.xpose.msra.mxu0 0
    %2822 = vmatprep.subr.bf16.mxu0 0
    %2823 = vmatpush1.bf16.xpose.msra.mxu0 0
    %2824 = vmatprep.subr.bf16.mxu0 0
    %2825 = vmatpush1.bf16.xpose.msra.mxu0 0
    %2826 = vmatprep.subr.bf16.mxu0 0
    %2827 = vmatpush1.bf16.xpose.msra.mxu0 0
    %2828 = vmatprep.subr.bf16.mxu0 0
    %2829 = vmatpush1.bf16.xpose.msra.mxu0 0
    %2830 = vmatprep.subr.bf16.mxu0 0
    %2831 = vmatpush1.bf16.xpose.msra.mxu0 0
    %2832 = vmatprep.subr.bf16.mxu0 0
    %2833 = vmatpush1.bf16.xpose.msra.mxu0 0
    %2834 = vmatprep.subr.bf16.mxu0 0
    %2835 = vmatpush1.bf16.xpose.msra.mxu0 0
    %2836 = vmatprep.mubr.bf16.mxu0 0
    %2837 = vmatmul.mubr.bf16.gmra.mrb[0].mxu0 %v2799
    %v2838 = vpop.f32.mrb[0].mxu0
    %v2839 = vadd.f32 0.0, %v2838
    %v2840 = vpop.f32.mrb[0].mxu0
    %v2841 = vpop.f32.mrb[0].mxu0
    %v2842 = vadd.f32 0.0, %v2841
    %v2843 = vpop.f32.mrb[0].mxu0
    %2844 = vdwg.mxu0
    %v2845 = vmul.f32 %v2839, 0.35355338
    %v2846 = vmul.f32 %v2842, 0.35355338
    %v2847 = vadd.f32 %v2845, %v171
    %v2848 = vadd.f32 %v2846, %v172
    %v2849 = vsel %vm388, %v2847, -inf
    %2850 = vmax.xlane.f32.xlu0 %v2849
    %v2851 = vpop.xlane.xlu0 %2850
    %v2852 = vsel %vm388, %v2848, -inf
    %2853 = vmax.xlane.f32.xlu0 %v2852
    %v2854 = vpop.xlane.xlu0 %2853
    %v2855 = vsub.f32 %v2847, %v2851
    %v2856 = vsub.f32 %v2848, %v2854
    %v2857 = vmul.f32 %v2855, 1.442695
    %v2858 = vpow.pop %v2857
    %v2859 = vmul.f32 %v2856, 1.442695
    %v2860 = vpow.pop %v2859
    %v2861 = vsel %vm388, %v2858, 0.0
    %2862 = vadd.xlane.f32.xlu0 %v2861
    %v2863 = vpop.xlane.xlu0 %2862
    %v2864 = vsel %vm388, %v2860, 0.0
    %2865 = vadd.xlane.f32.xlu0 %v2864
    %v2866 = vpop.xlane.xlu0 %2865
    %v2867 = vrcp.pop %v2863
    %v2868 = vrcp.pop %v2866
    %v2869 = vmul.f32 %v2858, %v2867
    %v2870 = vmul.f32 %v2860, %v2868
    %v2871 = vpack.c.bf16 %v2870, %v2869
    %2872 = vrot.lane.b32.xlu0 %v2259, 40
    %v2873 = vpop.permute.xlu0 %2872
    %v2876 = vsel %vm388, %v2871, 0
    %2878 = vmatprep.subr.bf16.mxu0 0
    %2879 = vmatpush1.bf16.msra.mxu0 %v2873
    %2880 = vmatprep.subr.bf16.mxu0 0
    %2881 = vmatpush1.bf16.msra.mxu0 0
    %2882 = vmatprep.subr.bf16.mxu0 0
    %2883 = vmatpush1.bf16.msra.mxu0 0
    %2884 = vmatprep.subr.bf16.mxu0 0
    %2885 = vmatpush1.bf16.msra.mxu0 0
    %2886 = vmatprep.subr.bf16.mxu0 0
    %2887 = vmatpush1.bf16.msra.mxu0 0
    %2888 = vmatprep.subr.bf16.mxu0 0
    %2889 = vmatpush1.bf16.msra.mxu0 0
    %2890 = vmatprep.subr.bf16.mxu0 0
    %2891 = vmatpush1.bf16.msra.mxu0 0
    %2892 = vmatprep.subr.bf16.mxu0 0
    %2893 = vmatpush1.bf16.msra.mxu0 0
    %2894 = vmatprep.subr.bf16.mxu0 0
    %2895 = vmatpush1.bf16.msra.mxu0 0
    %2896 = vmatprep.subr.bf16.mxu0 0
    %2897 = vmatpush1.bf16.msra.mxu0 0
    %2898 = vmatprep.subr.bf16.mxu0 0
    %2899 = vmatpush1.bf16.msra.mxu0 0
    %2900 = vmatprep.subr.bf16.mxu0 0
    %2901 = vmatpush1.bf16.msra.mxu0 0
    %2902 = vmatprep.subr.bf16.mxu0 0
    %2903 = vmatpush1.bf16.msra.mxu0 0
    %2904 = vmatprep.subr.bf16.mxu0 0
    %2905 = vmatpush1.bf16.msra.mxu0 0
    %2906 = vmatprep.subr.bf16.mxu0 0
    %2907 = vmatpush1.bf16.msra.mxu0 0
    %2908 = vmatprep.subr.bf16.mxu0 0
    %2909 = vmatpush1.bf16.msra.mxu0 0
    %2910 = vmatprep.mubr.bf16.mxu0 0
    %2911 = vmatmul.mubr.bf16.gmra.mrb[0].mxu0 %v2876
    %v2912 = vpop.f32.mrb[0].mxu0
    %v2913 = vadd.f32 0.0, %v2912
    %v2914 = vpop.f32.mrb[0].mxu0
    %v2915 = vpop.f32.mrb[0].mxu0
    %v2916 = vadd.f32 0.0, %v2915
    %v2917 = vpop.f32.mrb[0].mxu0
    %2918 = vdwg.mxu0
    %v2919 = vpack.c.bf16 %v2916, %v2913
    %v2920 = vld [vmem:[%s2386 + $0xc] sm:$0xf]
    %v2922 = vsel %vm336, %v2919, 0
    %v2925 = vsel %vm465, %v2920, 0
    %2927 = vmatprep.subr.bf16.mxu0 0
    %2928 = vmatpush1.bf16.msra.mxu0 %v2925
    %2929 = vmatprep.subr.bf16.mxu0 0
    %2930 = vmatpush1.bf16.msra.mxu0 0
    %2931 = vmatprep.subr.bf16.mxu0 0
    %2932 = vmatpush1.bf16.msra.mxu0 0
    %2933 = vmatprep.subr.bf16.mxu0 0
    %2934 = vmatpush1.bf16.msra.mxu0 0
    %2935 = vmatprep.subr.bf16.mxu0 0
    %2936 = vmatpush1.bf16.msra.mxu0 0
    %2937 = vmatprep.subr.bf16.mxu0 0
    %2938 = vmatpush1.bf16.msra.mxu0 0
    %2939 = vmatprep.subr.bf16.mxu0 0
    %2940 = vmatpush1.bf16.msra.mxu0 0
    %2941 = vmatprep.subr.bf16.mxu0 0
    %2942 = vmatpush1.bf16.msra.mxu0 0
    %2943 = vmatprep.subr.bf16.mxu0 0
    %2944 = vmatpush1.bf16.msra.mxu0 0
    %2945 = vmatprep.subr.bf16.mxu0 0
    %2946 = vmatpush1.bf16.msra.mxu0 0
    %2947 = vmatprep.subr.bf16.mxu0 0
    %2948 = vmatpush1.bf16.msra.mxu0 0
    %2949 = vmatprep.subr.bf16.mxu0 0
    %2950 = vmatpush1.bf16.msra.mxu0 0
    %2951 = vmatprep.subr.bf16.mxu0 0
    %2952 = vmatpush1.bf16.msra.mxu0 0
    %2953 = vmatprep.subr.bf16.mxu0 0
    %2954 = vmatpush1.bf16.msra.mxu0 0
    %2955 = vmatprep.subr.bf16.mxu0 0
    %2956 = vmatpush1.bf16.msra.mxu0 0
    %2957 = vmatprep.subr.bf16.mxu0 0
    %2958 = vmatpush1.bf16.msra.mxu0 0
    %2959 = vmatprep.mubr.bf16.mxu0 0
    %2960 = vmatmul.mubr.bf16.gmra.mrb[0].mxu0 %v2922
    %v2961 = vpop.f32.mrb[0].mxu0
    %v2962 = vadd.f32 0.0, %v2961
    %v2963 = vpop.f32.mrb[0].mxu0
    %v2964 = vpop.f32.mrb[0].mxu0
    %v2965 = vadd.f32 0.0, %v2964
    %v2966 = vpop.f32.mrb[0].mxu0
    %2967 = vdwg.mxu0
    %v2968 = vadd.f32 %v2792, %v2962
    %v2969 = vadd.f32 %v2793, %v2965
    %v2970 = vadd.f32 %v2162, %v2968
    %v2971 = vadd.f32 %v2163, %v2969
    %v2972 = vld [vmem:[%s2226 + $0x8] sm:$0x1]
    %v2973 = vld [vmem:[%s2226 + $0x9] sm:$0x1]
    %v2974 = vsel %vm194, %v2970, 0.0
    %2975 = vadd.xlane.f32.xlu0 %v2974
    %v2976 = vpop.xlane.xlu0 %2975
    %v2977 = vsel %vm194, %v2971, 0.0
    %2978 = vadd.xlane.f32.xlu0 %v2977
    %v2979 = vpop.xlane.xlu0 %2978
    %v2980 = vmul.f32 %v2976, %v1055
    %v2981 = vmul.f32 %v2979, %v1055
    %v2982 = vsub.f32 %v2970, %v2980
    %v2983 = vsub.f32 %v2971, %v2981
    %v2984 = vmul.f32 %v2982, %v2982
    %v2985 = vmul.f32 %v2983, %v2983
    %v2986 = vsel %vm194, %v2984, 0.0
    %2987 = vadd.xlane.f32.xlu0 %v2986
    %v2988 = vpop.xlane.xlu0 %2987
    %v2989 = vsel %vm194, %v2985, 0.0
    %2990 = vadd.xlane.f32.xlu0 %v2989
    %v2991 = vpop.xlane.xlu0 %2990
    %v2992 = vmul.f32 %v2988, %v1055
    %v2993 = vmul.f32 %v2991, %v1055
    %v2994 = vadd.f32 %v2992, 1e-05
    %v2995 = vadd.f32 %v2993, 1e-05
    %v2996 = vrsqrt.pop %v2994
    %v2997 = vrsqrt.pop %v2995
    %v2998 = vmul.f32 %v2982, %v2996
    %v2999 = vmul.f32 %v2983, %v2997
    %v3000 = vlaneseq
    %v3001 = vshrl.u32 %v3000, 7
    %v3002 = vsub.s32 0, %v3001
    %v3003 = vrot.slane %v2972, %v3002
    %v3004 = vmul.f32 %v2998, %v3003
    %v3005 = vmul.f32 %v2999, %v3003
    %v3006 = vlaneseq
    %v3007 = vshrl.u32 %v3006, 7
    %v3008 = vsub.s32 0, %v3007
    %v3009 = vrot.slane %v2973, %v3008
    %v3010 = vadd.f32 %v3004, %v3009
    %v3011 = vadd.f32 %v3005, %v3009
    %v3012 = vpack.c.bf16 %v3011, %v3010
    %s3013 = scalar_lea.vmem %s8, 16
    %v3014 = vld [vmem:[%s3013] sm:$0xf]
    %v3015 = vld [vmem:[%s3013 + $0x4] sm:$0xf]
    %v3016 = vld [vmem:[%s3013 + $0x8] sm:$0xf]
    %v3017 = vld [vmem:[%s3013 + $0xc] sm:$0xf]
    %v3018 = vld [vmem:[%s2226 + $0x4] sm:$0x1]
    %v3019 = vlaneseq
    %v3020 = vshrl.u32 %v3019, 7
    %v3021 = vsub.s32 0, %v3020
    %v3022 = vrot.slane %v3018, %v3021
    %v3027 = vunpack.c.l.b16 %v3014
    %v3028 = vunpack.c.l.b16 %v3015
    %v3029 = vunpack.c.l.b16 %v3016
    %v3030 = vunpack.c.l.b16 %v3017
    %v3031 = vpack.c.b16 %v3028, %v3027
    %v3032 = vpack.c.b16 %v3030, %v3029
    %v3036 = vsel %vm194, %v3012, 0
    %3038 = vmatprep.subr.bf16.mxu0 0
    %3039 = vmatpush1.bf16.msra.mxu0 %v3031
    %3040 = vmatprep.subr.bf16.mxu0 0
    %3041 = vmatpush1.bf16.msra.mxu0 %v3032
    %3042 = vmatprep.subr.bf16.mxu0 0
    %3043 = vmatpush1.bf16.msra.mxu0 0
    %3044 = vmatprep.subr.bf16.mxu0 0
    %3045 = vmatpush1.bf16.msra.mxu0 0
    %3046 = vmatprep.subr.bf16.mxu0 0
    %3047 = vmatpush1.bf16.msra.mxu0 0
    %3048 = vmatprep.subr.bf16.mxu0 0
    %3049 = vmatpush1.bf16.msra.mxu0 0
    %3050 = vmatprep.subr.bf16.mxu0 0
    %3051 = vmatpush1.bf16.msra.mxu0 0
    %3052 = vmatprep.subr.bf16.mxu0 0
    %3053 = vmatpush1.bf16.msra.mxu0 0
    %3054 = vmatprep.subr.bf16.mxu0 0
    %3055 = vmatpush1.bf16.msra.mxu0 0
    %3056 = vmatprep.subr.bf16.mxu0 0
    %3057 = vmatpush1.bf16.msra.mxu0 0
    %3058 = vmatprep.subr.bf16.mxu0 0
    %3059 = vmatpush1.bf16.msra.mxu0 0
    %3060 = vmatprep.subr.bf16.mxu0 0
    %3061 = vmatpush1.bf16.msra.mxu0 0
    %3062 = vmatprep.subr.bf16.mxu0 0
    %3063 = vmatpush1.bf16.msra.mxu0 0
    %3064 = vmatprep.subr.bf16.mxu0 0
    %3065 = vmatpush1.bf16.msra.mxu0 0
    %3066 = vmatprep.subr.bf16.mxu0 0
    %3067 = vmatpush1.bf16.msra.mxu0 0
    %3068 = vmatprep.subr.bf16.mxu0 0
    %3069 = vmatpush1.bf16.msra.mxu0 0
    %3070 = vmatprep.mubr.bf16.mxu0 0
    %3071 = vmatmul.mubr.bf16.gmra.mrb[0].mxu0 %v3036
    %v3072 = vpop.f32.mrb[0].mxu0
    %v3073 = vadd.f32 %v3022, %v3072
    %v3074 = vpop.f32.mrb[0].mxu0
    %v3075 = vpop.f32.mrb[0].mxu0
    %v3076 = vadd.f32 %v3022, %v3075
    %v3077 = vpop.f32.mrb[0].mxu0
    %3078 = vdwg.mxu0
    %v3079 = vld [vmem:[%s2226 + $0x5] sm:$0x1]
    %v3080 = vlaneseq
    %v3081 = vshrl.u32 %v3080, 7
    %v3082 = vsub.s32 0, %v3081
    %v3083 = vrot.slane %v3079, %v3082
    %3085 = vrot.lane.b32.xlu0 %v3083, 64
    %v3086 = vpop.permute.xlu0 %3085
    %v3088 = vadd.f32 %v233, %v3086
    %v3089 = vadd.f32 %v236, %v3086
    %v3090 = vld [vmem:[%s2226 + $0x6] sm:$0x1]
    %v3091 = vlaneseq
    %v3092 = vshrl.u32 %v3091, 7
    %v3093 = vsub.s32 0, %v3092
    %v3094 = vrot.slane %v3090, %v3093
    %3096 = vrot.lane.b32.xlu0 %v3094, 96
    %v3097 = vpop.permute.xlu0 %3096
    %v3099 = vadd.f32 %v233, %v3097
    %v3100 = vadd.f32 %v236, %v3097
    %v3101 = vld [vmem:[%s2226 + $0x7] sm:$0x1]
    %v3102 = vpack.c.bf16 %v3076, %v3073
    %v3103 = vpack.c.bf16 %v3089, %v3088
    %v3104 = vpack.c.bf16 %v3100, %v3099
    %3106 = vrot.lane.b32.xlu0 %v3103, 64
    %v3107 = vpop.permute.xlu0 %3106
    %v3109 = vsel %vm336, %v3102, 0
    %v3112 = vsel %vm336, %v3107, 0
    %3114 = vmatprep.subr.bf16.mxu0 0
    %3115 = vmatpush1.bf16.xpose.msra.mxu0 %v3112
    %3116 = vmatprep.subr.bf16.mxu0 0
    %3117 = vmatpush1.bf16.xpose.msra.mxu0 0
    %3118 = vmatprep.subr.bf16.mxu0 0
    %3119 = vmatpush1.bf16.xpose.msra.mxu0 0
    %3120 = vmatprep.subr.bf16.mxu0 0
    %3121 = vmatpush1.bf16.xpose.msra.mxu0 0
    %3122 = vmatprep.subr.bf16.mxu0 0
    %3123 = vmatpush1.bf16.xpose.msra.mxu0 0
    %3124 = vmatprep.subr.bf16.mxu0 0
    %3125 = vmatpush1.bf16.xpose.msra.mxu0 0
    %3126 = vmatprep.subr.bf16.mxu0 0
    %3127 = vmatpush1.bf16.xpose.msra.mxu0 0
    %3128 = vmatprep.subr.bf16.mxu0 0
    %3129 = vmatpush1.bf16.xpose.msra.mxu0 0
    %3130 = vmatprep.subr.bf16.mxu0 0
    %3131 = vmatpush1.bf16.xpose.msra.mxu0 0
    %3132 = vmatprep.subr.bf16.mxu0 0
    %3133 = vmatpush1.bf16.xpose.msra.mxu0 0
    %3134 = vmatprep.subr.bf16.mxu0 0
    %3135 = vmatpush1.bf16.xpose.msra.mxu0 0
    %3136 = vmatprep.subr.bf16.mxu0 0
    %3137 = vmatpush1.bf16.xpose.msra.mxu0 0
    %3138 = vmatprep.subr.bf16.mxu0 0
    %3139 = vmatpush1.bf16.xpose.msra.mxu0 0
    %3140 = vmatprep.subr.bf16.mxu0 0
    %3141 = vmatpush1.bf16.xpose.msra.mxu0 0
    %3142 = vmatprep.subr.bf16.mxu0 0
    %3143 = vmatpush1.bf16.xpose.msra.mxu0 0
    %3144 = vmatprep.subr.bf16.mxu0 0
    %3145 = vmatpush1.bf16.xpose.msra.mxu0 0
    %3146 = vmatprep.mubr.bf16.mxu0 0
    %3147 = vmatmul.mubr.bf16.gmra.mrb[0].mxu0 %v3109
    %v3148 = vpop.f32.mrb[0].mxu0
    %v3149 = vadd.f32 0.0, %v3148
    %v3150 = vpop.f32.mrb[0].mxu0
    %v3151 = vpop.f32.mrb[0].mxu0
    %v3152 = vadd.f32 0.0, %v3151
    %v3153 = vpop.f32.mrb[0].mxu0
    %3154 = vdwg.mxu0
    %v3155 = vmul.f32 %v3149, 0.35355338
    %v3156 = vmul.f32 %v3152, 0.35355338
    %v3157 = vadd.f32 %v3155, %v173
    %v3158 = vadd.f32 %v3156, %v174
    %v3159 = vsel %vm388, %v3157, -inf
    %3160 = vmax.xlane.f32.xlu0 %v3159
    %v3161 = vpop.xlane.xlu0 %3160
    %v3162 = vsel %vm388, %v3158, -inf
    %3163 = vmax.xlane.f32.xlu0 %v3162
    %v3164 = vpop.xlane.xlu0 %3163
    %v3165 = vsub.f32 %v3157, %v3161
    %v3166 = vsub.f32 %v3158, %v3164
    %v3167 = vmul.f32 %v3165, 1.442695
    %v3168 = vpow.pop %v3167
    %v3169 = vmul.f32 %v3166, 1.442695
    %v3170 = vpow.pop %v3169
    %v3171 = vsel %vm388, %v3168, 0.0
    %3172 = vadd.xlane.f32.xlu0 %v3171
    %v3173 = vpop.xlane.xlu0 %3172
    %v3174 = vsel %vm388, %v3170, 0.0
    %3175 = vadd.xlane.f32.xlu0 %v3174
    %v3176 = vpop.xlane.xlu0 %3175
    %v3177 = vrcp.pop %v3173
    %v3178 = vrcp.pop %v3176
    %v3179 = vmul.f32 %v3168, %v3177
    %v3180 = vmul.f32 %v3170, %v3178
    %v3181 = vpack.c.bf16 %v3180, %v3179
    %3183 = vrot.lane.b32.xlu0 %v3104, 32
    %v3184 = vpop.permute.xlu0 %3183
    %v3187 = vsel %vm388, %v3181, 0
    %3189 = vmatprep.subr.bf16.mxu0 0
    %3190 = vmatpush1.bf16.msra.mxu0 %v3184
    %3191 = vmatprep.subr.bf16.mxu0 0
    %3192 = vmatpush1.bf16.msra.mxu0 0
    %3193 = vmatprep.subr.bf16.mxu0 0
    %3194 = vmatpush1.bf16.msra.mxu0 0
    %3195 = vmatprep.subr.bf16.mxu0 0
    %3196 = vmatpush1.bf16.msra.mxu0 0
    %3197 = vmatprep.subr.bf16.mxu0 0
    %3198 = vmatpush1.bf16.msra.mxu0 0
    %3199 = vmatprep.subr.bf16.mxu0 0
    %3200 = vmatpush1.bf16.msra.mxu0 0
    %3201 = vmatprep.subr.bf16.mxu0 0
    %3202 = vmatpush1.bf16.msra.mxu0 0
    %3203 = vmatprep.subr.bf16.mxu0 0
    %3204 = vmatpush1.bf16.msra.mxu0 0
    %3205 = vmatprep.subr.bf16.mxu0 0
    %3206 = vmatpush1.bf16.msra.mxu0 0
    %3207 = vmatprep.subr.bf16.mxu0 0
    %3208 = vmatpush1.bf16.msra.mxu0 0
    %3209 = vmatprep.subr.bf16.mxu0 0
    %3210 = vmatpush1.bf16.msra.mxu0 0
    %3211 = vmatprep.subr.bf16.mxu0 0
    %3212 = vmatpush1.bf16.msra.mxu0 0
    %3213 = vmatprep.subr.bf16.mxu0 0
    %3214 = vmatpush1.bf16.msra.mxu0 0
    %3215 = vmatprep.subr.bf16.mxu0 0
    %3216 = vmatpush1.bf16.msra.mxu0 0
    %3217 = vmatprep.subr.bf16.mxu0 0
    %3218 = vmatpush1.bf16.msra.mxu0 0
    %3219 = vmatprep.subr.bf16.mxu0 0
    %3220 = vmatpush1.bf16.msra.mxu0 0
    %3221 = vmatprep.mubr.bf16.mxu0 0
    %3222 = vmatmul.mubr.bf16.gmra.mrb[0].mxu0 %v3187
    %v3223 = vpop.f32.mrb[0].mxu0
    %v3224 = vadd.f32 0.0, %v3223
    %v3225 = vpop.f32.mrb[0].mxu0
    %v3226 = vpop.f32.mrb[0].mxu0
    %v3227 = vadd.f32 0.0, %v3226
    %v3228 = vpop.f32.mrb[0].mxu0
    %3229 = vdwg.mxu0
    %v3230 = vpack.c.bf16 %v3227, %v3224
    %s3231 = scalar_lea.vmem %s10, 16
    %v3232 = vld [vmem:[%s3231] sm:$0xf]
    %v3234 = vsel %vm336, %v3230, 0
    %v3237 = vsel %vm465, %v3232, 0
    %3239 = vmatprep.subr.bf16.mxu0 0
    %3240 = vmatpush1.bf16.msra.mxu0 %v3237
    %3241 = vmatprep.subr.bf16.mxu0 0
    %3242 = vmatpush1.bf16.msra.mxu0 0
    %3243 = vmatprep.subr.bf16.mxu0 0
    %3244 = vmatpush1.bf16.msra.mxu0 0
    %3245 = vmatprep.subr.bf16.mxu0 0
    %3246 = vmatpush1.bf16.msra.mxu0 0
    %3247 = vmatprep.subr.bf16.mxu0 0
    %3248 = vmatpush1.bf16.msra.mxu0 0
    %3249 = vmatprep.subr.bf16.mxu0 0
    %3250 = vmatpush1.bf16.msra.mxu0 0
    %3251 = vmatprep.subr.bf16.mxu0 0
    %3252 = vmatpush1.bf16.msra.mxu0 0
    %3253 = vmatprep.subr.bf16.mxu0 0
    %3254 = vmatpush1.bf16.msra.mxu0 0
    %3255 = vmatprep.subr.bf16.mxu0 0
    %3256 = vmatpush1.bf16.msra.mxu0 0
    %3257 = vmatprep.subr.bf16.mxu0 0
    %3258 = vmatpush1.bf16.msra.mxu0 0
    %3259 = vmatprep.subr.bf16.mxu0 0
    %3260 = vmatpush1.bf16.msra.mxu0 0
    %3261 = vmatprep.subr.bf16.mxu0 0
    %3262 = vmatpush1.bf16.msra.mxu0 0
    %3263 = vmatprep.subr.bf16.mxu0 0
    %3264 = vmatpush1.bf16.msra.mxu0 0
    %3265 = vmatprep.subr.bf16.mxu0 0
    %3266 = vmatpush1.bf16.msra.mxu0 0
    %3267 = vmatprep.subr.bf16.mxu0 0
    %3268 = vmatpush1.bf16.msra.mxu0 0
    %3269 = vmatprep.subr.bf16.mxu0 0
    %3270 = vmatpush1.bf16.msra.mxu0 0
    %3271 = vmatprep.mubr.bf16.mxu0 0
    %3272 = vmatmul.mubr.bf16.gmra.mrb[0].mxu0 %v3234
    %v3273 = vpop.f32.mrb[0].mxu0
    %v3274 = vadd.f32 0.0, %v3273
    %v3275 = vpop.f32.mrb[0].mxu0
    %v3276 = vpop.f32.mrb[0].mxu0
    %v3277 = vadd.f32 0.0, %v3276
    %v3278 = vpop.f32.mrb[0].mxu0
    %3279 = vdwg.mxu0
    %v3280 = vlaneseq
    %v3281 = vshrl.u32 %v3280, 7
    %v3282 = vsub.s32 0, %v3281
    %v3283 = vrot.slane %v3101, %v3282
    %v3284 = vadd.f32 %v3283, %v3274
    %v3285 = vadd.f32 %v3283, %v3277
    %3287 = vrot.lane.b32.xlu0 %v3102, 120
    %v3288 = vpop.permute.xlu0 %3287
    %3289 = vrot.lane.b32.xlu0 %v3103, 56
    %v3290 = vpop.permute.xlu0 %3289
    %v3292 = vsel %vm336, %v3288, 0
    %v3295 = vsel %vm336, %v3290, 0
    %3297 = vmatprep.subr.bf16.mxu0 0
    %3298 = vmatpush1.bf16.xpose.msra.mxu0 %v3295
    %3299 = vmatprep.subr.bf16.mxu0 0
    %3300 = vmatpush1.bf16.xpose.msra.mxu0 0
    %3301 = vmatprep.subr.bf16.mxu0 0
    %3302 = vmatpush1.bf16.xpose.msra.mxu0 0
    %3303 = vmatprep.subr.bf16.mxu0 0
    %3304 = vmatpush1.bf16.xpose.msra.mxu0 0
    %3305 = vmatprep.subr.bf16.mxu0 0
    %3306 = vmatpush1.bf16.xpose.msra.mxu0 0
    %3307 = vmatprep.subr.bf16.mxu0 0
    %3308 = vmatpush1.bf16.xpose.msra.mxu0 0
    %3309 = vmatprep.subr.bf16.mxu0 0
    %3310 = vmatpush1.bf16.xpose.msra.mxu0 0
    %3311 = vmatprep.subr.bf16.mxu0 0
    %3312 = vmatpush1.bf16.xpose.msra.mxu0 0
    %3313 = vmatprep.subr.bf16.mxu0 0
    %3314 = vmatpush1.bf16.xpose.msra.mxu0 0
    %3315 = vmatprep.subr.bf16.mxu0 0
    %3316 = vmatpush1.bf16.xpose.msra.mxu0 0
    %3317 = vmatprep.subr.bf16.mxu0 0
    %3318 = vmatpush1.bf16.xpose.msra.mxu0 0
    %3319 = vmatprep.subr.bf16.mxu0 0
    %3320 = vmatpush1.bf16.xpose.msra.mxu0 0
    %3321 = vmatprep.subr.bf16.mxu0 0
    %3322 = vmatpush1.bf16.xpose.msra.mxu0 0
    %3323 = vmatprep.subr.bf16.mxu0 0
    %3324 = vmatpush1.bf16.xpose.msra.mxu0 0
    %3325 = vmatprep.subr.bf16.mxu0 0
    %3326 = vmatpush1.bf16.xpose.msra.mxu0 0
    %3327 = vmatprep.subr.bf16.mxu0 0
    %3328 = vmatpush1.bf16.xpose.msra.mxu0 0
    %3329 = vmatprep.mubr.bf16.mxu0 0
    %3330 = vmatmul.mubr.bf16.gmra.mrb[0].mxu0 %v3292
    %v3331 = vpop.f32.mrb[0].mxu0
    %v3332 = vadd.f32 0.0, %v3331
    %v3333 = vpop.f32.mrb[0].mxu0
    %v3334 = vpop.f32.mrb[0].mxu0
    %v3335 = vadd.f32 0.0, %v3334
    %v3336 = vpop.f32.mrb[0].mxu0
    %3337 = vdwg.mxu0
    %v3338 = vmul.f32 %v3332, 0.35355338
    %v3339 = vmul.f32 %v3335, 0.35355338
    %v3340 = vadd.f32 %v3338, %v173
    %v3341 = vadd.f32 %v3339, %v174
    %v3342 = vsel %vm388, %v3340, -inf
    %3343 = vmax.xlane.f32.xlu0 %v3342
    %v3344 = vpop.xlane.xlu0 %3343
    %v3345 = vsel %vm388, %v3341, -inf
    %3346 = vmax.xlane.f32.xlu0 %v3345
    %v3347 = vpop.xlane.xlu0 %3346
    %v3348 = vsub.f32 %v3340, %v3344
    %v3349 = vsub.f32 %v3341, %v3347
    %v3350 = vmul.f32 %v3348, 1.442695
    %v3351 = vpow.pop %v3350
    %v3352 = vmul.f32 %v3349, 1.442695
    %v3353 = vpow.pop %v3352
    %v3354 = vsel %vm388, %v3351, 0.0
    %3355 = vadd.xlane.f32.xlu0 %v3354
    %v3356 = vpop.xlane.xlu0 %3355
    %v3357 = vsel %vm388, %v3353, 0.0
    %3358 = vadd.xlane.f32.xlu0 %v3357
    %v3359 = vpop.xlane.xlu0 %3358
    %v3360 = vrcp.pop %v3356
    %v3361 = vrcp.pop %v3359
    %v3362 = vmul.f32 %v3351, %v3360
    %v3363 = vmul.f32 %v3353, %v3361
    %v3364 = vpack.c.bf16 %v3363, %v3362
    %3365 = vrot.lane.b32.xlu0 %v3104, 24
    %v3366 = vpop.permute.xlu0 %3365
    %v3369 = vsel %vm388, %v3364, 0
    %3371 = vmatprep.subr.bf16.mxu0 0
    %3372 = vmatpush1.bf16.msra.mxu0 %v3366
    %3373 = vmatprep.subr.bf16.mxu0 0
    %3374 = vmatpush1.bf16.msra.mxu0 0
    %3375 = vmatprep.subr.bf16.mxu0 0
    %3376 = vmatpush1.bf16.msra.mxu0 0
    %3377 = vmatprep.subr.bf16.mxu0 0
    %3378 = vmatpush1.bf16.msra.mxu0 0
    %3379 = vmatprep.subr.bf16.mxu0 0
    %3380 = vmatpush1.bf16.msra.mxu0 0
    %3381 = vmatprep.subr.bf16.mxu0 0
    %3382 = vmatpush1.bf16.msra.mxu0 0
    %3383 = vmatprep.subr.bf16.mxu0 0
    %3384 = vmatpush1.bf16.msra.mxu0 0
    %3385 = vmatprep.subr.bf16.mxu0 0
    %3386 = vmatpush1.bf16.msra.mxu0 0
    %3387 = vmatprep.subr.bf16.mxu0 0
    %3388 = vmatpush1.bf16.msra.mxu0 0
    %3389 = vmatprep.subr.bf16.mxu0 0
    %3390 = vmatpush1.bf16.msra.mxu0 0
    %3391 = vmatprep.subr.bf16.mxu0 0
    %3392 = vmatpush1.bf16.msra.mxu0 0
    %3393 = vmatprep.subr.bf16.mxu0 0
    %3394 = vmatpush1.bf16.msra.mxu0 0
    %3395 = vmatprep.subr.bf16.mxu0 0
    %3396 = vmatpush1.bf16.msra.mxu0 0
    %3397 = vmatprep.subr.bf16.mxu0 0
    %3398 = vmatpush1.bf16.msra.mxu0 0
    %3399 = vmatprep.subr.bf16.mxu0 0
    %3400 = vmatpush1.bf16.msra.mxu0 0
    %3401 = vmatprep.subr.bf16.mxu0 0
    %3402 = vmatpush1.bf16.msra.mxu0 0
    %3403 = vmatprep.mubr.bf16.mxu0 0
    %3404 = vmatmul.mubr.bf16.gmra.mrb[0].mxu0 %v3369
    %v3405 = vpop.f32.mrb[0].mxu0
    %v3406 = vadd.f32 0.0, %v3405
    %v3407 = vpop.f32.mrb[0].mxu0
    %v3408 = vpop.f32.mrb[0].mxu0
    %v3409 = vadd.f32 0.0, %v3408
    %v3410 = vpop.f32.mrb[0].mxu0
    %3411 = vdwg.mxu0
    %v3412 = vpack.c.bf16 %v3409, %v3406
    %v3413 = vld [vmem:[%s3231 + $0x4] sm:$0xf]
    %v3415 = vsel %vm336, %v3412, 0
    %v3418 = vsel %vm465, %v3413, 0
    %3420 = vmatprep.subr.bf16.mxu0 0
    %3421 = vmatpush1.bf16.msra.mxu0 %v3418
    %3422 = vmatprep.subr.bf16.mxu0 0
    %3423 = vmatpush1.bf16.msra.mxu0 0
    %3424 = vmatprep.subr.bf16.mxu0 0
    %3425 = vmatpush1.bf16.msra.mxu0 0
    %3426 = vmatprep.subr.bf16.mxu0 0
    %3427 = vmatpush1.bf16.msra.mxu0 0
    %3428 = vmatprep.subr.bf16.mxu0 0
    %3429 = vmatpush1.bf16.msra.mxu0 0
    %3430 = vmatprep.subr.bf16.mxu0 0
    %3431 = vmatpush1.bf16.msra.mxu0 0
    %3432 = vmatprep.subr.bf16.mxu0 0
    %3433 = vmatpush1.bf16.msra.mxu0 0
    %3434 = vmatprep.subr.bf16.mxu0 0
    %3435 = vmatpush1.bf16.msra.mxu0 0
    %3436 = vmatprep.subr.bf16.mxu0 0
    %3437 = vmatpush1.bf16.msra.mxu0 0
    %3438 = vmatprep.subr.bf16.mxu0 0
    %3439 = vmatpush1.bf16.msra.mxu0 0
    %3440 = vmatprep.subr.bf16.mxu0 0
    %3441 = vmatpush1.bf16.msra.mxu0 0
    %3442 = vmatprep.subr.bf16.mxu0 0
    %3443 = vmatpush1.bf16.msra.mxu0 0
    %3444 = vmatprep.subr.bf16.mxu0 0
    %3445 = vmatpush1.bf16.msra.mxu0 0
    %3446 = vmatprep.subr.bf16.mxu0 0
    %3447 = vmatpush1.bf16.msra.mxu0 0
    %3448 = vmatprep.subr.bf16.mxu0 0
    %3449 = vmatpush1.bf16.msra.mxu0 0
    %3450 = vmatprep.subr.bf16.mxu0 0
    %3451 = vmatpush1.bf16.msra.mxu0 0
    %3452 = vmatprep.mubr.bf16.mxu0 0
    %3453 = vmatmul.mubr.bf16.gmra.mrb[0].mxu0 %v3415
    %v3454 = vpop.f32.mrb[0].mxu0
    %v3455 = vadd.f32 0.0, %v3454
    %v3456 = vpop.f32.mrb[0].mxu0
    %v3457 = vpop.f32.mrb[0].mxu0
    %v3458 = vadd.f32 0.0, %v3457
    %v3459 = vpop.f32.mrb[0].mxu0
    %3460 = vdwg.mxu0
    %v3461 = vadd.f32 %v3284, %v3455
    %v3462 = vadd.f32 %v3285, %v3458
    %3463 = vrot.lane.b32.xlu0 %v3102, 112
    %v3464 = vpop.permute.xlu0 %3463
    %3465 = vrot.lane.b32.xlu0 %v3103, 48
    %v3466 = vpop.permute.xlu0 %3465
    %v3468 = vsel %vm336, %v3464, 0
    %v3471 = vsel %vm336, %v3466, 0
    %3473 = vmatprep.subr.bf16.mxu0 0
    %3474 = vmatpush1.bf16.xpose.msra.mxu0 %v3471
    %3475 = vmatprep.subr.bf16.mxu0 0
    %3476 = vmatpush1.bf16.xpose.msra.mxu0 0
    %3477 = vmatprep.subr.bf16.mxu0 0
    %3478 = vmatpush1.bf16.xpose.msra.mxu0 0
    %3479 = vmatprep.subr.bf16.mxu0 0
    %3480 = vmatpush1.bf16.xpose.msra.mxu0 0
    %3481 = vmatprep.subr.bf16.mxu0 0
    %3482 = vmatpush1.bf16.xpose.msra.mxu0 0
    %3483 = vmatprep.subr.bf16.mxu0 0
    %3484 = vmatpush1.bf16.xpose.msra.mxu0 0
    %3485 = vmatprep.subr.bf16.mxu0 0
    %3486 = vmatpush1.bf16.xpose.msra.mxu0 0
    %3487 = vmatprep.subr.bf16.mxu0 0
    %3488 = vmatpush1.bf16.xpose.msra.mxu0 0
    %3489 = vmatprep.subr.bf16.mxu0 0
    %3490 = vmatpush1.bf16.xpose.msra.mxu0 0
    %3491 = vmatprep.subr.bf16.mxu0 0
    %3492 = vmatpush1.bf16.xpose.msra.mxu0 0
    %3493 = vmatprep.subr.bf16.mxu0 0
    %3494 = vmatpush1.bf16.xpose.msra.mxu0 0
    %3495 = vmatprep.subr.bf16.mxu0 0
    %3496 = vmatpush1.bf16.xpose.msra.mxu0 0
    %3497 = vmatprep.subr.bf16.mxu0 0
    %3498 = vmatpush1.bf16.xpose.msra.mxu0 0
    %3499 = vmatprep.subr.bf16.mxu0 0
    %3500 = vmatpush1.bf16.xpose.msra.mxu0 0
    %3501 = vmatprep.subr.bf16.mxu0 0
    %3502 = vmatpush1.bf16.xpose.msra.mxu0 0
    %3503 = vmatprep.subr.bf16.mxu0 0
    %3504 = vmatpush1.bf16.xpose.msra.mxu0 0
    %3505 = vmatprep.mubr.bf16.mxu0 0
    %3506 = vmatmul.mubr.bf16.gmra.mrb[0].mxu0 %v3468
    %v3507 = vpop.f32.mrb[0].mxu0
    %v3508 = vadd.f32 0.0, %v3507
    %v3509 = vpop.f32.mrb[0].mxu0
    %v3510 = vpop.f32.mrb[0].mxu0
    %v3511 = vadd.f32 0.0, %v3510
    %v3512 = vpop.f32.mrb[0].mxu0
    %3513 = vdwg.mxu0
    %v3514 = vmul.f32 %v3508, 0.35355338
    %v3515 = vmul.f32 %v3511, 0.35355338
    %v3516 = vadd.f32 %v3514, %v173
    %v3517 = vadd.f32 %v3515, %v174
    %v3518 = vsel %vm388, %v3516, -inf
    %3519 = vmax.xlane.f32.xlu0 %v3518
    %v3520 = vpop.xlane.xlu0 %3519
    %v3521 = vsel %vm388, %v3517, -inf
    %3522 = vmax.xlane.f32.xlu0 %v3521
    %v3523 = vpop.xlane.xlu0 %3522
    %v3524 = vsub.f32 %v3516, %v3520
    %v3525 = vsub.f32 %v3517, %v3523
    %v3526 = vmul.f32 %v3524, 1.442695
    %v3527 = vpow.pop %v3526
    %v3528 = vmul.f32 %v3525, 1.442695
    %v3529 = vpow.pop %v3528
    %v3530 = vsel %vm388, %v3527, 0.0
    %3531 = vadd.xlane.f32.xlu0 %v3530
    %v3532 = vpop.xlane.xlu0 %3531
    %v3533 = vsel %vm388, %v3529, 0.0
    %3534 = vadd.xlane.f32.xlu0 %v3533
    %v3535 = vpop.xlane.xlu0 %3534
    %v3536 = vrcp.pop %v3532
    %v3537 = vrcp.pop %v3535
    %v3538 = vmul.f32 %v3527, %v3536
    %v3539 = vmul.f32 %v3529, %v3537
    %v3540 = vpack.c.bf16 %v3539, %v3538
    %3541 = vrot.lane.b32.xlu0 %v3104, 16
    %v3542 = vpop.permute.xlu0 %3541
    %v3545 = vsel %vm388, %v3540, 0
    %3547 = vmatprep.subr.bf16.mxu0 0
    %3548 = vmatpush1.bf16.msra.mxu0 %v3542
    %3549 = vmatprep.subr.bf16.mxu0 0
    %3550 = vmatpush1.bf16.msra.mxu0 0
    %3551 = vmatprep.subr.bf16.mxu0 0
    %3552 = vmatpush1.bf16.msra.mxu0 0
    %3553 = vmatprep.subr.bf16.mxu0 0
    %3554 = vmatpush1.bf16.msra.mxu0 0
    %3555 = vmatprep.subr.bf16.mxu0 0
    %3556 = vmatpush1.bf16.msra.mxu0 0
    %3557 = vmatprep.subr.bf16.mxu0 0
    %3558 = vmatpush1.bf16.msra.mxu0 0
    %3559 = vmatprep.subr.bf16.mxu0 0
    %3560 = vmatpush1.bf16.msra.mxu0 0
    %3561 = vmatprep.subr.bf16.mxu0 0
    %3562 = vmatpush1.bf16.msra.mxu0 0
    %3563 = vmatprep.subr.bf16.mxu0 0
    %3564 = vmatpush1.bf16.msra.mxu0 0
    %3565 = vmatprep.subr.bf16.mxu0 0
    %3566 = vmatpush1.bf16.msra.mxu0 0
    %3567 = vmatprep.subr.bf16.mxu0 0
    %3568 = vmatpush1.bf16.msra.mxu0 0
    %3569 = vmatprep.subr.bf16.mxu0 0
    %3570 = vmatpush1.bf16.msra.mxu0 0
    %3571 = vmatprep.subr.bf16.mxu0 0
    %3572 = vmatpush1.bf16.msra.mxu0 0
    %3573 = vmatprep.subr.bf16.mxu0 0
    %3574 = vmatpush1.bf16.msra.mxu0 0
    %3575 = vmatprep.subr.bf16.mxu0 0
    %3576 = vmatpush1.bf16.msra.mxu0 0
    %3577 = vmatprep.subr.bf16.mxu0 0
    %3578 = vmatpush1.bf16.msra.mxu0 0
    %3579 = vmatprep.mubr.bf16.mxu0 0
    %3580 = vmatmul.mubr.bf16.gmra.mrb[0].mxu0 %v3545
    %v3581 = vpop.f32.mrb[0].mxu0
    %v3582 = vadd.f32 0.0, %v3581
    %v3583 = vpop.f32.mrb[0].mxu0
    %v3584 = vpop.f32.mrb[0].mxu0
    %v3585 = vadd.f32 0.0, %v3584
    %v3586 = vpop.f32.mrb[0].mxu0
    %3587 = vdwg.mxu0
    %v3588 = vpack.c.bf16 %v3585, %v3582
    %v3589 = vld [vmem:[%s3231 + $0x8] sm:$0xf]
    %v3591 = vsel %vm336, %v3588, 0
    %v3594 = vsel %vm465, %v3589, 0
    %3596 = vmatprep.subr.bf16.mxu0 0
    %3597 = vmatpush1.bf16.msra.mxu0 %v3594
    %3598 = vmatprep.subr.bf16.mxu0 0
    %3599 = vmatpush1.bf16.msra.mxu0 0
    %3600 = vmatprep.subr.bf16.mxu0 0
    %3601 = vmatpush1.bf16.msra.mxu0 0
    %3602 = vmatprep.subr.bf16.mxu0 0
    %3603 = vmatpush1.bf16.msra.mxu0 0
    %3604 = vmatprep.subr.bf16.mxu0 0
    %3605 = vmatpush1.bf16.msra.mxu0 0
    %3606 = vmatprep.subr.bf16.mxu0 0
    %3607 = vmatpush1.bf16.msra.mxu0 0
    %3608 = vmatprep.subr.bf16.mxu0 0
    %3609 = vmatpush1.bf16.msra.mxu0 0
    %3610 = vmatprep.subr.bf16.mxu0 0
    %3611 = vmatpush1.bf16.msra.mxu0 0
    %3612 = vmatprep.subr.bf16.mxu0 0
    %3613 = vmatpush1.bf16.msra.mxu0 0
    %3614 = vmatprep.subr.bf16.mxu0 0
    %3615 = vmatpush1.bf16.msra.mxu0 0
    %3616 = vmatprep.subr.bf16.mxu0 0
    %3617 = vmatpush1.bf16.msra.mxu0 0
    %3618 = vmatprep.subr.bf16.mxu0 0
    %3619 = vmatpush1.bf16.msra.mxu0 0
    %3620 = vmatprep.subr.bf16.mxu0 0
    %3621 = vmatpush1.bf16.msra.mxu0 0
    %3622 = vmatprep.subr.bf16.mxu0 0
    %3623 = vmatpush1.bf16.msra.mxu0 0
    %3624 = vmatprep.subr.bf16.mxu0 0
    %3625 = vmatpush1.bf16.msra.mxu0 0
    %3626 = vmatprep.subr.bf16.mxu0 0
    %3627 = vmatpush1.bf16.msra.mxu0 0
    %3628 = vmatprep.mubr.bf16.mxu0 0
    %3629 = vmatmul.mubr.bf16.gmra.mrb[0].mxu0 %v3591
    %v3630 = vpop.f32.mrb[0].mxu0
    %v3631 = vadd.f32 0.0, %v3630
    %v3632 = vpop.f32.mrb[0].mxu0
    %v3633 = vpop.f32.mrb[0].mxu0
    %v3634 = vadd.f32 0.0, %v3633
    %v3635 = vpop.f32.mrb[0].mxu0
    %3636 = vdwg.mxu0
    %v3637 = vadd.f32 %v3461, %v3631
    %v3638 = vadd.f32 %v3462, %v3634
    %3639 = vrot.lane.b32.xlu0 %v3102, 104
    %v3640 = vpop.permute.xlu0 %3639
    %3641 = vrot.lane.b32.xlu0 %v3103, 40
    %v3642 = vpop.permute.xlu0 %3641
    %v3644 = vsel %vm336, %v3640, 0
    %v3647 = vsel %vm336, %v3642, 0
    %3649 = vmatprep.subr.bf16.mxu0 0
    %3650 = vmatpush1.bf16.xpose.msra.mxu0 %v3647
    %3651 = vmatprep.subr.bf16.mxu0 0
    %3652 = vmatpush1.bf16.xpose.msra.mxu0 0
    %3653 = vmatprep.subr.bf16.mxu0 0
    %3654 = vmatpush1.bf16.xpose.msra.mxu0 0
    %3655 = vmatprep.subr.bf16.mxu0 0
    %3656 = vmatpush1.bf16.xpose.msra.mxu0 0
    %3657 = vmatprep.subr.bf16.mxu0 0
    %3658 = vmatpush1.bf16.xpose.msra.mxu0 0
    %3659 = vmatprep.subr.bf16.mxu0 0
    %3660 = vmatpush1.bf16.xpose.msra.mxu0 0
    %3661 = vmatprep.subr.bf16.mxu0 0
    %3662 = vmatpush1.bf16.xpose.msra.mxu0 0
    %3663 = vmatprep.subr.bf16.mxu0 0
    %3664 = vmatpush1.bf16.xpose.msra.mxu0 0
    %3665 = vmatprep.subr.bf16.mxu0 0
    %3666 = vmatpush1.bf16.xpose.msra.mxu0 0
    %3667 = vmatprep.subr.bf16.mxu0 0
    %3668 = vmatpush1.bf16.xpose.msra.mxu0 0
    %3669 = vmatprep.subr.bf16.mxu0 0
    %3670 = vmatpush1.bf16.xpose.msra.mxu0 0
    %3671 = vmatprep.subr.bf16.mxu0 0
    %3672 = vmatpush1.bf16.xpose.msra.mxu0 0
    %3673 = vmatprep.subr.bf16.mxu0 0
    %3674 = vmatpush1.bf16.xpose.msra.mxu0 0
    %3675 = vmatprep.subr.bf16.mxu0 0
    %3676 = vmatpush1.bf16.xpose.msra.mxu0 0
    %3677 = vmatprep.subr.bf16.mxu0 0
    %3678 = vmatpush1.bf16.xpose.msra.mxu0 0
    %3679 = vmatprep.subr.bf16.mxu0 0
    %3680 = vmatpush1.bf16.xpose.msra.mxu0 0
    %3681 = vmatprep.mubr.bf16.mxu0 0
    %3682 = vmatmul.mubr.bf16.gmra.mrb[0].mxu0 %v3644
    %v3683 = vpop.f32.mrb[0].mxu0
    %v3684 = vadd.f32 0.0, %v3683
    %v3685 = vpop.f32.mrb[0].mxu0
    %v3686 = vpop.f32.mrb[0].mxu0
    %v3687 = vadd.f32 0.0, %v3686
    %v3688 = vpop.f32.mrb[0].mxu0
    %3689 = vdwg.mxu0
    %v3690 = vmul.f32 %v3684, 0.35355338
    %v3691 = vmul.f32 %v3687, 0.35355338
    %v3692 = vadd.f32 %v3690, %v173
    %v3693 = vadd.f32 %v3691, %v174
    %v3694 = vsel %vm388, %v3692, -inf
    %3695 = vmax.xlane.f32.xlu0 %v3694
    %v3696 = vpop.xlane.xlu0 %3695
    %v3697 = vsel %vm388, %v3693, -inf
    %3698 = vmax.xlane.f32.xlu0 %v3697
    %v3699 = vpop.xlane.xlu0 %3698
    %v3700 = vsub.f32 %v3692, %v3696
    %v3701 = vsub.f32 %v3693, %v3699
    %v3702 = vmul.f32 %v3700, 1.442695
    %v3703 = vpow.pop %v3702
    %v3704 = vmul.f32 %v3701, 1.442695
    %v3705 = vpow.pop %v3704
    %v3706 = vsel %vm388, %v3703, 0.0
    %3707 = vadd.xlane.f32.xlu0 %v3706
    %v3708 = vpop.xlane.xlu0 %3707
    %v3709 = vsel %vm388, %v3705, 0.0
    %3710 = vadd.xlane.f32.xlu0 %v3709
    %v3711 = vpop.xlane.xlu0 %3710
    %v3712 = vrcp.pop %v3708
    %v3713 = vrcp.pop %v3711
    %v3714 = vmul.f32 %v3703, %v3712
    %v3715 = vmul.f32 %v3705, %v3713
    %v3716 = vpack.c.bf16 %v3715, %v3714
    %3717 = vrot.lane.b32.xlu0 %v3104, 8
    %v3718 = vpop.permute.xlu0 %3717
    %v3721 = vsel %vm388, %v3716, 0
    %3723 = vmatprep.subr.bf16.mxu0 0
    %3724 = vmatpush1.bf16.msra.mxu0 %v3718
    %3725 = vmatprep.subr.bf16.mxu0 0
    %3726 = vmatpush1.bf16.msra.mxu0 0
    %3727 = vmatprep.subr.bf16.mxu0 0
    %3728 = vmatpush1.bf16.msra.mxu0 0
    %3729 = vmatprep.subr.bf16.mxu0 0
    %3730 = vmatpush1.bf16.msra.mxu0 0
    %3731 = vmatprep.subr.bf16.mxu0 0
    %3732 = vmatpush1.bf16.msra.mxu0 0
    %3733 = vmatprep.subr.bf16.mxu0 0
    %3734 = vmatpush1.bf16.msra.mxu0 0
    %3735 = vmatprep.subr.bf16.mxu0 0
    %3736 = vmatpush1.bf16.msra.mxu0 0
    %3737 = vmatprep.subr.bf16.mxu0 0
    %3738 = vmatpush1.bf16.msra.mxu0 0
    %3739 = vmatprep.subr.bf16.mxu0 0
    %3740 = vmatpush1.bf16.msra.mxu0 0
    %3741 = vmatprep.subr.bf16.mxu0 0
    %3742 = vmatpush1.bf16.msra.mxu0 0
    %3743 = vmatprep.subr.bf16.mxu0 0
    %3744 = vmatpush1.bf16.msra.mxu0 0
    %3745 = vmatprep.subr.bf16.mxu0 0
    %3746 = vmatpush1.bf16.msra.mxu0 0
    %3747 = vmatprep.subr.bf16.mxu0 0
    %3748 = vmatpush1.bf16.msra.mxu0 0
    %3749 = vmatprep.subr.bf16.mxu0 0
    %3750 = vmatpush1.bf16.msra.mxu0 0
    %3751 = vmatprep.subr.bf16.mxu0 0
    %3752 = vmatpush1.bf16.msra.mxu0 0
    %3753 = vmatprep.subr.bf16.mxu0 0
    %3754 = vmatpush1.bf16.msra.mxu0 0
    %3755 = vmatprep.mubr.bf16.mxu0 0
    %3756 = vmatmul.mubr.bf16.gmra.mrb[0].mxu0 %v3721
    %v3757 = vpop.f32.mrb[0].mxu0
    %v3758 = vadd.f32 0.0, %v3757
    %v3759 = vpop.f32.mrb[0].mxu0
    %v3760 = vpop.f32.mrb[0].mxu0
    %v3761 = vadd.f32 0.0, %v3760
    %v3762 = vpop.f32.mrb[0].mxu0
    %3763 = vdwg.mxu0
    %v3764 = vpack.c.bf16 %v3761, %v3758
    %v3765 = vld [vmem:[%s3231 + $0xc] sm:$0xf]
    %v3767 = vsel %vm336, %v3764, 0
    %v3770 = vsel %vm465, %v3765, 0
    %3772 = vmatprep.subr.bf16.mxu0 0
    %3773 = vmatpush1.bf16.msra.mxu0 %v3770
    %3774 = vmatprep.subr.bf16.mxu0 0
    %3775 = vmatpush1.bf16.msra.mxu0 0
    %3776 = vmatprep.subr.bf16.mxu0 0
    %3777 = vmatpush1.bf16.msra.mxu0 0
    %3778 = vmatprep.subr.bf16.mxu0 0
    %3779 = vmatpush1.bf16.msra.mxu0 0
    %3780 = vmatprep.subr.bf16.mxu0 0
    %3781 = vmatpush1.bf16.msra.mxu0 0
    %3782 = vmatprep.subr.bf16.mxu0 0
    %3783 = vmatpush1.bf16.msra.mxu0 0
    %3784 = vmatprep.subr.bf16.mxu0 0
    %3785 = vmatpush1.bf16.msra.mxu0 0
    %3786 = vmatprep.subr.bf16.mxu0 0
    %3787 = vmatpush1.bf16.msra.mxu0 0
    %3788 = vmatprep.subr.bf16.mxu0 0
    %3789 = vmatpush1.bf16.msra.mxu0 0
    %3790 = vmatprep.subr.bf16.mxu0 0
    %3791 = vmatpush1.bf16.msra.mxu0 0
    %3792 = vmatprep.subr.bf16.mxu0 0
    %3793 = vmatpush1.bf16.msra.mxu0 0
    %3794 = vmatprep.subr.bf16.mxu0 0
    %3795 = vmatpush1.bf16.msra.mxu0 0
    %3796 = vmatprep.subr.bf16.mxu0 0
    %3797 = vmatpush1.bf16.msra.mxu0 0
    %3798 = vmatprep.subr.bf16.mxu0 0
    %3799 = vmatpush1.bf16.msra.mxu0 0
    %3800 = vmatprep.subr.bf16.mxu0 0
    %3801 = vmatpush1.bf16.msra.mxu0 0
    %3802 = vmatprep.subr.bf16.mxu0 0
    %3803 = vmatpush1.bf16.msra.mxu0 0
    %3804 = vmatprep.mubr.bf16.mxu0 0
    %3805 = vmatmul.mubr.bf16.gmra.mrb[0].mxu0 %v3767
    %v3806 = vpop.f32.mrb[0].mxu0
    %v3807 = vadd.f32 0.0, %v3806
    %v3808 = vpop.f32.mrb[0].mxu0
    %v3809 = vpop.f32.mrb[0].mxu0
    %v3810 = vadd.f32 0.0, %v3809
    %v3811 = vpop.f32.mrb[0].mxu0
    %3812 = vdwg.mxu0
    %v3813 = vadd.f32 %v3637, %v3807
    %v3814 = vadd.f32 %v3638, %v3810
    %v3815 = vadd.f32 %v3010, %v3813
    %v3816 = vadd.f32 %v3011, %v3814
    %v3817 = vld [vmem:[%s2226 + $0xa] sm:$0x1]
    %v3818 = vld [vmem:[%s2226 + $0xb] sm:$0x1]
    %v3819 = vsel %vm194, %v3815, 0.0
    %3820 = vadd.xlane.f32.xlu0 %v3819
    %v3821 = vpop.xlane.xlu0 %3820
    %v3822 = vsel %vm194, %v3816, 0.0
    %3823 = vadd.xlane.f32.xlu0 %v3822
    %v3824 = vpop.xlane.xlu0 %3823
    %v3825 = vmul.f32 %v3821, %v1055
    %v3826 = vmul.f32 %v3824, %v1055
    %v3827 = vsub.f32 %v3815, %v3825
    %v3828 = vsub.f32 %v3816, %v3826
    %v3829 = vmul.f32 %v3827, %v3827
    %v3830 = vmul.f32 %v3828, %v3828
    %v3831 = vsel %vm194, %v3829, 0.0
    %3832 = vadd.xlane.f32.xlu0 %v3831
    %v3833 = vpop.xlane.xlu0 %3832
    %v3834 = vsel %vm194, %v3830, 0.0
    %3835 = vadd.xlane.f32.xlu0 %v3834
    %v3836 = vpop.xlane.xlu0 %3835
    %v3837 = vmul.f32 %v3833, %v1055
    %v3838 = vmul.f32 %v3836, %v1055
    %v3839 = vadd.f32 %v3837, 1e-05
    %v3840 = vadd.f32 %v3838, 1e-05
    %v3841 = vrsqrt.pop %v3839
    %v3842 = vrsqrt.pop %v3840
    %v3843 = vmul.f32 %v3827, %v3841
    %v3844 = vmul.f32 %v3828, %v3842
    %v3845 = vlaneseq
    %v3846 = vshrl.u32 %v3845, 7
    %v3847 = vsub.s32 0, %v3846
    %v3848 = vrot.slane %v3817, %v3847
    %v3849 = vmul.f32 %v3843, %v3848
    %v3850 = vmul.f32 %v3844, %v3848
    %v3851 = vlaneseq
    %v3852 = vshrl.u32 %v3851, 7
    %v3853 = vsub.s32 0, %v3852
    %v3854 = vrot.slane %v3818, %v3853
    %v3855 = vadd.f32 %v3849, %v3854
    %v3856 = vadd.f32 %v3850, %v3854
    %v3857 = vpack.c.bf16 %v3856, %v3855
    %s3858 = scalar_lea.vmem %s11, 16
    %v3859 = vld [vmem:[%s3858] sm:$0xf]
    %v3860 = vld [vmem:[%s3858 + $0x4] sm:$0xf]
    %v3861 = vld [vmem:[%s3858 + $0x8] sm:$0xf]
    %v3862 = vld [vmem:[%s3858 + $0xc] sm:$0xf]
    %s3863 = scalar_lea.vmem %s12, 1
    %v3864 = vld [vmem:[%s3863] sm:$0x1]
    %v3866 = vlaneseq
    %v3867 = vshrl.u32 %v3866, 7
    %v3868 = vsub.s32 0, %v3867
    %v3869 = vrot.slane %v3864, %v3868
    %v3875 = vunpack.c.l.b16 %v3859
    %v3876 = vunpack.c.l.b16 %v3860
    %v3877 = vunpack.c.l.b16 %v3861
    %v3878 = vunpack.c.l.b16 %v3862
    %v3879 = vpack.c.b16 %v3876, %v3875
    %v3880 = vpack.c.b16 %v3878, %v3877
    %v3884 = vsel %vm194, %v3857, 0
    %3886 = vmatprep.subr.bf16.mxu0 0
    %3887 = vmatpush1.bf16.msra.mxu0 %v3879
    %3888 = vmatprep.subr.bf16.mxu0 0
    %3889 = vmatpush1.bf16.msra.mxu0 %v3880
    %3890 = vmatprep.subr.bf16.mxu0 0
    %3891 = vmatpush1.bf16.msra.mxu0 0
    %3892 = vmatprep.subr.bf16.mxu0 0
    %3893 = vmatpush1.bf16.msra.mxu0 0
    %3894 = vmatprep.subr.bf16.mxu0 0
    %3895 = vmatpush1.bf16.msra.mxu0 0
    %3896 = vmatprep.subr.bf16.mxu0 0
    %3897 = vmatpush1.bf16.msra.mxu0 0
    %3898 = vmatprep.subr.bf16.mxu0 0
    %3899 = vmatpush1.bf16.msra.mxu0 0
    %3900 = vmatprep.subr.bf16.mxu0 0
    %3901 = vmatpush1.bf16.msra.mxu0 0
    %3902 = vmatprep.subr.bf16.mxu0 0
    %3903 = vmatpush1.bf16.msra.mxu0 0
    %3904 = vmatprep.subr.bf16.mxu0 0
    %3905 = vmatpush1.bf16.msra.mxu0 0
    %3906 = vmatprep.subr.bf16.mxu0 0
    %3907 = vmatpush1.bf16.msra.mxu0 0
    %3908 = vmatprep.subr.bf16.mxu0 0
    %3909 = vmatpush1.bf16.msra.mxu0 0
    %3910 = vmatprep.subr.bf16.mxu0 0
    %3911 = vmatpush1.bf16.msra.mxu0 0
    %3912 = vmatprep.subr.bf16.mxu0 0
    %3913 = vmatpush1.bf16.msra.mxu0 0
    %3914 = vmatprep.subr.bf16.mxu0 0
    %3915 = vmatpush1.bf16.msra.mxu0 0
    %3916 = vmatprep.subr.bf16.mxu0 0
    %3917 = vmatpush1.bf16.msra.mxu0 0
    %3918 = vmatprep.mubr.bf16.mxu0 0
    %3919 = vmatmul.mubr.bf16.gmra.mrb[0].mxu0 %v3884
    %v3920 = vpop.f32.mrb[0].mxu0
    %v3921 = vadd.f32 %v3869, %v3920
    %v3922 = vpop.f32.mrb[0].mxu0
    %v3923 = vpop.f32.mrb[0].mxu0
    %v3924 = vadd.f32 %v3869, %v3923
    %v3925 = vpop.f32.mrb[0].mxu0
    %3926 = vdwg.mxu0
    %v3927 = vmul.f32 %v3921, %v3921
    %v3928 = vmul.f32 %v3924, %v3924
    %v3929 = vmul.f32 %v3921, %v3927
    %v3930 = vmul.f32 %v3924, %v3928
    %v3931 = vmul.f32 %v3929, 0.044715
    %v3932 = vmul.f32 %v3930, 0.044715
    %v3933 = vadd.f32 %v3921, %v3931
    %v3934 = vadd.f32 %v3924, %v3932
    %v3935 = vmul.f32 %v3933, 0.7978846
    %v3936 = vmul.f32 %v3934, 0.7978846
    %v3937 = vtanh.pop %v3935
    %v3938 = vtanh.pop %v3936
    %v3939 = vadd.f32 %v3937, 1.0
    %v3940 = vadd.f32 %v3938, 1.0
    %v3941 = vmul.f32 %v3939, 0.5
    %v3942 = vmul.f32 %v3940, 0.5
    %v3943 = vmul.f32 %v3921, %v3941
    %v3944 = vmul.f32 %v3924, %v3942
    %v3945 = vpack.c.bf16 %v3944, %v3943
    %s3946 = scalar_lea.vmem %s13, 64
    %v3947 = vld [vmem:[%s3946] sm:$0xf]
    %v3948 = vld [vmem:[%s3946 + $0x4] sm:$0xf]
    %v3949 = vld [vmem:[%s3946 + $0x8] sm:$0xf]
    %v3950 = vld [vmem:[%s3946 + $0xc] sm:$0xf]
    %v3951 = vld [vmem:[%s3946 + $0x10] sm:$0xf]
    %v3952 = vld [vmem:[%s3946 + $0x14] sm:$0xf]
    %v3953 = vld [vmem:[%s3946 + $0x18] sm:$0xf]
    %v3954 = vld [vmem:[%s3946 + $0x1c] sm:$0xf]
    %v3955 = vld [vmem:[%s3946 + $0x20] sm:$0xf]
    %v3956 = vld [vmem:[%s3946 + $0x24] sm:$0xf]
    %v3957 = vld [vmem:[%s3946 + $0x28] sm:$0xf]
    %v3958 = vld [vmem:[%s3946 + $0x2c] sm:$0xf]
    %v3959 = vld [vmem:[%s3946 + $0x30] sm:$0xf]
    %v3960 = vld [vmem:[%s3946 + $0x34] sm:$0xf]
    %v3961 = vld [vmem:[%s3946 + $0x38] sm:$0xf]
    %v3962 = vld [vmem:[%s3946 + $0x3c] sm:$0xf]
    %v3963 = vld [vmem:[%s2226 + $0xe] sm:$0x1]
    %v3964 = vlaneseq
    %v3965 = vshrl.u32 %v3964, 7
    %v3966 = vsub.s32 0, %v3965
    %v3967 = vrot.slane %v3963, %v3966
    %v3984 = vunpack.c.l.b16 %v3947
    %v3985 = vunpack.c.l.b16 %v3948
    %v3986 = vunpack.c.l.b16 %v3949
    %v3987 = vunpack.c.l.b16 %v3950
    %v3988 = vunpack.c.l.b16 %v3951
    %v3989 = vunpack.c.l.b16 %v3952
    %v3990 = vunpack.c.l.b16 %v3953
    %v3991 = vunpack.c.l.b16 %v3954
    %v3992 = vunpack.c.l.b16 %v3955
    %v3993 = vunpack.c.l.b16 %v3956
    %v3994 = vunpack.c.l.b16 %v3957
    %v3995 = vunpack.c.l.b16 %v3958
    %v3996 = vunpack.c.l.b16 %v3959
    %v3997 = vunpack.c.l.b16 %v3960
    %v3998 = vunpack.c.l.b16 %v3961
    %v3999 = vunpack.c.l.b16 %v3962
    %v4000 = vpack.c.b16 %v3985, %v3984
    %v4001 = vpack.c.b16 %v3987, %v3986
    %v4002 = vpack.c.b16 %v3989, %v3988
    %v4003 = vpack.c.b16 %v3991, %v3990
    %v4004 = vpack.c.b16 %v3993, %v3992
    %v4005 = vpack.c.b16 %v3995, %v3994
    %v4006 = vpack.c.b16 %v3997, %v3996
    %v4007 = vpack.c.b16 %v3999, %v3998
    %4016 = vmatprep.subr.bf16.mxu0 0
    %4017 = vmatpush1.bf16.msra.mxu0 %v4000
    %4018 = vmatprep.subr.bf16.mxu0 0
    %4019 = vmatpush1.bf16.msra.mxu0 %v4001
    %4020 = vmatprep.subr.bf16.mxu0 0
    %4021 = vmatpush1.bf16.msra.mxu0 %v4002
    %4022 = vmatprep.subr.bf16.mxu0 0
    %4023 = vmatpush1.bf16.msra.mxu0 %v4003
    %4024 = vmatprep.subr.bf16.mxu0 0
    %4025 = vmatpush1.bf16.msra.mxu0 %v4004
    %4026 = vmatprep.subr.bf16.mxu0 0
    %4027 = vmatpush1.bf16.msra.mxu0 %v4005
    %4028 = vmatprep.subr.bf16.mxu0 0
    %4029 = vmatpush1.bf16.msra.mxu0 %v4006
    %4030 = vmatprep.subr.bf16.mxu0 0
    %4031 = vmatpush1.bf16.msra.mxu0 %v4007
    %4032 = vmatprep.subr.bf16.mxu0 0
    %4033 = vmatpush1.bf16.msra.mxu0 0
    %4034 = vmatprep.subr.bf16.mxu0 0
    %4035 = vmatpush1.bf16.msra.mxu0 0
    %4036 = vmatprep.subr.bf16.mxu0 0
    %4037 = vmatpush1.bf16.msra.mxu0 0
    %4038 = vmatprep.subr.bf16.mxu0 0
    %4039 = vmatpush1.bf16.msra.mxu0 0
    %4040 = vmatprep.subr.bf16.mxu0 0
    %4041 = vmatpush1.bf16.msra.mxu0 0
    %4042 = vmatprep.subr.bf16.mxu0 0
    %4043 = vmatpush1.bf16.msra.mxu0 0
    %4044 = vmatprep.subr.bf16.mxu0 0
    %4045 = vmatpush1.bf16.msra.mxu0 0
    %4046 = vmatprep.subr.bf16.mxu0 0
    %4047 = vmatpush1.bf16.msra.mxu0 0
    %4048 = vmatprep.mubr.bf16.mxu0 0
    %4049 = vmatmul.mubr.bf16.gmra.mrb[0].mxu0 %v3945
    %v4050 = vpop.f32.mrb[0].mxu0
    %v4051 = vadd.f32 %v3967, %v4050
    %v4052 = vpop.f32.mrb[0].mxu0
    %v4053 = vpop.f32.mrb[0].mxu0
    %v4054 = vadd.f32 %v3967, %v4053
    %v4055 = vpop.f32.mrb[0].mxu0
    %4056 = vdwg.mxu0
    %v4057 = vadd.f32 %v3855, %v4051
    %v4058 = vadd.f32 %v3856, %v4054
    %v4059 = vld [vmem:[%s2226 + $0xc] sm:$0x1]
    %v4060 = vld [vmem:[%s2226 + $0xd] sm:$0x1]
    %v4061 = vsel %vm194, %v4057, 0.0
    %4062 = vadd.xlane.f32.xlu0 %v4061
    %v4063 = vpop.xlane.xlu0 %4062
    %v4064 = vsel %vm194, %v4058, 0.0
    %4065 = vadd.xlane.f32.xlu0 %v4064
    %v4066 = vpop.xlane.xlu0 %4065
    %v4067 = vmul.f32 %v4063, %v1055
    %v4068 = vmul.f32 %v4066, %v1055
    %v4069 = vsub.f32 %v4057, %v4067
    %v4070 = vsub.f32 %v4058, %v4068
    %v4071 = vmul.f32 %v4069, %v4069
    %v4072 = vmul.f32 %v4070, %v4070
    %v4073 = vsel %vm194, %v4071, 0.0
    %4074 = vadd.xlane.f32.xlu0 %v4073
    %v4075 = vpop.xlane.xlu0 %4074
    %v4076 = vsel %vm194, %v4072, 0.0
    %4077 = vadd.xlane.f32.xlu0 %v4076
    %v4078 = vpop.xlane.xlu0 %4077
    %v4079 = vmul.f32 %v4075, %v1055
    %v4080 = vmul.f32 %v4078, %v1055
    %v4081 = vadd.f32 %v4079, 1e-05
    %v4082 = vadd.f32 %v4080, 1e-05
    %v4083 = vrsqrt.pop %v4081
    %v4084 = vrsqrt.pop %v4082
    %v4085 = vmul.f32 %v4069, %v4083
    %v4086 = vmul.f32 %v4070, %v4084
    %v4087 = vlaneseq
    %v4088 = vshrl.u32 %v4087, 7
    %v4089 = vsub.s32 0, %v4088
    %v4090 = vrot.slane %v4059, %v4089
    %v4091 = vmul.f32 %v4085, %v4090
    %v4092 = vmul.f32 %v4086, %v4090
    %v4093 = vlaneseq
    %v4094 = vshrl.u32 %v4093, 7
    %v4095 = vsub.s32 0, %v4094
    %v4096 = vrot.slane %v4060, %v4095
    %v4097 = vadd.f32 %v4091, %v4096
    %v4098 = vadd.f32 %v4092, %v4096
    %4099 = vst.msk [vmem:[#allocation5] sm:$0xff] %vm194, %v4097
    %4100 = vst.msk [vmem:[#allocation5 + $0x8] sm:$0xff] %vm194, %v4098
    // Predicated region
    $region58: #{bart_decoder.1} parent=1 // pred_check
      _
    $region59: #{bart_decoder.1} parent=1 // pred_check_branch
      %4102 = sbr.rel (0) target = $region61
    $region60: #{bart_decoder.1} parent=1 // pred_region
      %s4104 = ssub.s32 256, 256
      %4105 = vsyncadd [#allocation6], %s4104
      %s4106 = sshll.u32 [#allocation5], 4
      %s4107 = int_to_ptr.vmem [resolvable:$true] %s4106
      %4112 = dma.vmem_to_hbm [thread:$0]  %s4107, 256, %s15, [#allocation6], 128, 128, 8
    $region61: #{bart_decoder.1} parent=1 // pred_fallthru
      _
    // Predicated region
    $region62: #{bart_decoder.1} parent=1 // pred_check
      _
    $region63: #{bart_decoder.1} parent=1 // pred_check_branch
      %4114 = sbr.rel (0) target = $region65
    $region64: #{bart_decoder.1} parent=1 // pred_region
      %4115 = dma.done [#allocation6], 256
    $region65: #{bart_decoder.1} parent=1 // pred_fallthru
      _
    %4116 = vsyncpa [#allocation6], 1

</llo_original>
